<compile_context>
chip_gen: v7x
topology: tpu7x:2x2x1
jax: 0.10.0
libtpu: 0.0.40
codegen_flags: <defaults>
</compile_context>

<pallas_src>
import jax
import jax.numpy as jnp
from jax import lax
from jax.experimental import pallas as pl
from jax.experimental.pallas import tpu as pltpu


# ----------------------------------------------------------------------------
# Generation-aware VMEM sizing.
# ----------------------------------------------------------------------------
def _vmem_budget():
    """Returns (vmem_limit_bytes, per-tile live-set budget)."""
    cap = 64 * 1024 * 1024                      # conservative default (v7x/TC)
    try:
        cap = int(pltpu.get_tpu_info().vmem_capacity_bytes)
    except Exception:
        pass
    limit = int(cap * 0.7)                      # scoped limit for the compiler
    return limit, limit // 2                    # 2x headroom over the estimate


def _lane_pad(c):
    return ((c + 127) // 128) * 128


def _sub_pad(r):
    return ((r + 7) // 8) * 8


def _pick_row_tile(H, W, Cin, Cexp, Cout, stride, batch, tile_budget):
    """Largest divisor of H (multiple of stride) whose lane-padded live set
    fits the per-tile VMEM budget.  With batch==1, keep >=2 grid steps so
    both v7x TensorCores get work."""
    def est(d):
        do, wo = d // stride, (W - 1) // stride + 1
        n = 0
        n += 2 * (d + 2) * _sub_pad(W + 2) * _lane_pad(Cexp)   # scratch + h_all
        n += 3 * do * _sub_pad(wo) * _lane_pad(Cexp)           # acc0, acc1, h2
        n += 4 * d * _sub_pad(W) * _lane_pad(Cin)              # x blocks (2x buf)
        n += 2 * do * _sub_pad(wo) * _lane_pad(Cout)           # out block (2x buf)
        return 4 * n                                           # f32 bytes

    divisors = [d for d in range(1, H + 1) if H % d == 0 and d % stride == 0]
    fitting = [d for d in divisors if est(d) <= tile_budget]
    if not fitting:
        raise ValueError(
            f"no row tile of H={H} fits the VMEM tile budget "
            f"({tile_budget} bytes); reduce W/channels or raise the budget")
    best = max(fitting)
    if batch == 1 and best == H:
        halves = [d for d in fitting if d <= H // 2]
        if halves:
            best = max(halves)
    return best


def _mxu_bf16_worthwhile(k, n):
    # Only pay for bf16 casts + the MXU when both matmul dims are at least a
    # lane multiple; below that the 128/256-wide MXU is mostly idle and the
    # casts are pure VPU overhead.
    return k >= 128 and n >= 128


# ----------------------------------------------------------------------------
# Kernel: one (batch, row-tile) grid step of the whole bottleneck block.
# ----------------------------------------------------------------------------
def _make_kernel(*, row_tile, out_rows, out_cols, stride, residual, flat_out):
    TH, THo, Wo = row_tile, out_rows, out_cols
    fetch_bot = (stride == 1)            # stride>1 never reads the bottom halo
    rows = TH + 2 if fetch_bot else TH + 1

    def kernel(*refs):
        if fetch_bot:
            (xt_ref, xm_ref, xb_ref, w1_ref, b1_ref, wd_ref, b2_ref,
             w3_ref, b3_ref, o_ref, hp_ref) = refs
        else:
            (xt_ref, xm_ref, w1_ref, b1_ref, wd_ref, b2_ref,
             w3_ref, b3_ref, o_ref, hp_ref) = refs
            xb_ref = None

        t = pl.program_id(1)
        last_t = pl.num_programs(1) - 1
        W, Cin = xm_ref.shape[2], xm_ref.shape[3]
        Cexp = w1_ref.shape[1]
        Cout = w3_ref.shape[1]

        def conv1x1(x2d, w_ref, b_ref):
            """1x1 conv + folded-BN bias.  bf16 MXU only when the weights were
            prepared in bf16 (lane-multiple channels); otherwise a VPU
            broadcast-FMA loop (tiny K) or an f32 dot (mid-size K)."""
            w = w_ref[...]
            b = b_ref[...]                                    # (1, N) f32
            if w.dtype == jnp.bfloat16:
                return jnp.dot(x2d.astype(jnp.bfloat16), w,
                               preferred_element_type=jnp.float32) + b
            k, n = w.shape
            if k > 32:
                return jnp.dot(x2d, w, preferred_element_type=jnp.float32) + b
            acc = jnp.zeros((x2d.shape[0], n), jnp.float32) + b
            for c in range(k):
                acc = acc + x2d[:, c:c + 1] * w[c:c + 1, :]
            return acc

        # ---- conv1 (1x1 expand) + BN + ReLU: row tile AND halo rows in ONE
        #      fused op (single matmul / FMA chain instead of three).
        x_mid2 = xm_ref[0].reshape(TH * W, Cin)
        bands = [xt_ref[0, 0], x_mid2]
        if fetch_bot:
            bands.append(xb_ref[0, 0])
        x_all = jnp.concatenate(bands, axis=0)                # (rows*W, Cin)
        h_all = jnp.maximum(conv1x1(x_all, w1_ref, b1_ref), 0.0)
        h_all = h_all.reshape(rows, W, Cexp)

        # ---- write into the zero-bordered depthwise scratch.  Halo rows are
        #      zeroed at the image border so the depthwise sees exactly the
        #      reference conv's zero padding.
        hp_ref[1:TH + 1, 1:W + 1, :] = h_all[1:TH + 1]
        hp_ref[0, 1:W + 1, :] = jnp.where(t > 0, h_all[0], 0.0)
        if fetch_bot:
            hp_ref[TH + 1, 1:W + 1, :] = jnp.where(t < last_t,
                                                   h_all[TH + 1], 0.0)
        # Left/right zero padding columns.  Scratch memory is uninitialized
        # and "first step on this core" is not expressible under megacore grid
        # splitting, so these two 1-column stores stay per-step (tiny).
        zc = jnp.zeros((rows, 1, Cexp), jnp.float32)
        hp_ref[0:rows, 0:1, :] = zc
        hp_ref[0:rows, W + 1:W + 2, :] = zc

        # ---- 3x3 depthwise conv (BN scale folded) + bias + ReLU; f32 on the
        #      VPU with two accumulators for ILP.
        wd = wd_ref[...]                                      # (3, 3, Cexp)
        acc0 = jnp.zeros((THo, Wo, Cexp), jnp.float32)
        acc1 = jnp.zeros((THo, Wo, Cexp), jnp.float32)
        ki = 0
        if stride == 1:
            # 3 shifted column-band loads; the 3 row offsets per band are free
            # leading-dim slices of the loaded value (9 -> 3 unaligned reads).
            for kw in range(3):
                band = hp_ref[0:rows, kw:kw + Wo, :]          # (rows, Wo, Cexp)
                for kh in range(3):
                    term = band[kh:kh + THo] * wd[kh, kw]
                    if ki % 2 == 0:
                        acc0 = acc0 + term
                    else:
                        acc1 = acc1 + term
                    ki += 1
        else:
            # stride > 1: strided reads straight from the scratch so no
            # discarded rows/cols are ever computed.
            for kh in range(3):
                for kw in range(3):
                    tap = hp_ref[pl.ds(kh, THo, stride),
                                 pl.ds(kw, Wo, stride), :]
                    term = tap * wd[kh, kw]
                    if ki % 2 == 0:
                        acc0 = acc0 + term
                    else:
                        acc1 = acc1 + term
                    ki += 1
        h2 = jnp.maximum(acc0 + acc1 + b2_ref[0], 0.0)        # (THo, Wo, Cexp)

        # ---- conv3 (1x1 project) + BN bias, residual, final ReLU.
        out = conv1x1(h2.reshape(THo * Wo, Cexp), w3_ref, b3_ref)
        if residual:
            out = out + x_mid2
        out = jnp.maximum(out, 0.0)
        if flat_out:
            # Lane-dense store: the whole tile goes out as one 1-D slab so the
            # final store is an unmasked, full-width vst.
            o_ref[0, 0, :] = out.reshape(THo * Wo * Cout)
        else:
            o_ref[0] = out.reshape(THo, Wo, Cout)

    return kernel


# ----------------------------------------------------------------------------
# Wrapper: NHWC in / NHWC out.
# ----------------------------------------------------------------------------
_flat_out_ok = None   # lazily probed: can this Mosaic build lower the
                      # lane-folding reshape used by the lane-dense store?


def bottleneck_block(x_nhwc, prepared_params, *, stride=1, row_tile=None):
    global _flat_out_ok
    w1f, b1, wdf, b2, w3f, b3 = prepared_params
    B, H, W, Cin = x_nhwc.shape
    Cexp = w1f.shape[1]
    Cout = w3f.shape[1]
    assert w1f.shape == (Cin, Cexp) and wdf.shape == (3, 3, Cexp)
    assert w3f.shape[0] == Cexp
    if stride > 1:
        # TODO(synk): stride>1 with H % stride != 0 needs a ragged last tile.
        assert H % stride == 0, "stride>1 requires H divisible by stride"

    vmem_limit, tile_budget = _vmem_budget()
    TH = (_pick_row_tile(H, W, Cin, Cexp, Cout, stride, B, tile_budget)
          if row_tile is None else row_tile)
    assert H % TH == 0 and TH % stride == 0, (H, TH, stride)
    n_tiles = H // TH
    THo = TH // stride
    Wo = (W - 1) // stride + 1
    Ho = n_tiles * THo
    residual = (stride == 1 and Cout == Cin)   # output shape == input shape
    fetch_bot = (stride == 1)
    rows = TH + 2 if fetch_bot else TH + 1

    def rep(shape):                            # whole-array resident params
        return pl.BlockSpec(shape, lambda b, t, _n=len(shape): (0,) * _n)

    # x is passed as a TH-row tile plus (up to) two single-row halo blocks
    # whose row indices are clamped at the image border (zeroed in-kernel).
    x_top_spec = pl.BlockSpec(
        (1, 1, W, Cin), lambda b, t: (b, jnp.maximum(t * TH - 1, 0), 0, 0))
    x_mid_spec = pl.BlockSpec((1, TH, W, Cin), lambda b, t: (b, t, 0, 0))
    x_bot_spec = pl.BlockSpec(
        (1, 1, W, Cin), lambda b, t: (b, jnp.minimum((t + 1) * TH, H - 1), 0, 0))

    in_specs = [x_top_spec, x_mid_spec]
    operands = [x_nhwc, x_nhwc]
    if fetch_bot:                              # stride>1 never reads the
        in_specs.append(x_bot_spec)            # bottom halo -> skip its DMA
        operands.append(x_nhwc)
    weights = [w1f, b1, wdf, b2, w3f, b3]
    in_specs += [rep(w.shape) for w in weights]
    operands += weights

    def build(flat_out):
        kernel = _make_kernel(row_tile=TH, out_rows=THo, out_cols=Wo,
                              stride=stride, residual=residual,
                              flat_out=flat_out)
        if flat_out:
            out_shape = jax.ShapeDtypeStruct((B, n_tiles, THo * Wo * Cout),
                                             jnp.float32)
            out_spec = pl.BlockSpec((1, 1, THo * Wo * Cout),
                                    lambda b, t: (b, t, 0))
        else:
            out_shape = jax.ShapeDtypeStruct((B, Ho, Wo, Cout), jnp.float32)
            out_spec = pl.BlockSpec((1, THo, Wo, Cout),
                                    lambda b, t: (b, t, 0, 0))
        return pl.pallas_call(
            kernel,
            out_shape=out_shape,
            grid=(B, n_tiles),
            in_specs=in_specs,
            out_specs=out_spec,
            scratch_shapes=[pltpu.VMEM((rows, W + 2, Cexp), jnp.float32)],
            compiler_params=pltpu.CompilerParams(
                dimension_semantics=("parallel", "parallel"),
                vmem_limit_bytes=vmem_limit))

    # Prefer the lane-dense (flattened) output store; fall back to the plain
    # NHWC block store if this Mosaic build cannot lower the lane-folding
    # reshape.  Both variants are numerically identical.  (The probe is
    # resolved eagerly, so call this wrapper un-jitted at least once.)
    if _flat_out_ok is not False:
        try:
            out = build(True)(*operands)
            _flat_out_ok = True
            return out.reshape(B, Ho, Wo, Cout)
        except Exception:
            _flat_out_ok = False
    return build(False)(*operands)


# ----------------------------------------------------------------------------
# Parameters: module-style (conv weights + inference BN scale/bias) plus a
# one-time preparation step that folds BN into the weights.
# ----------------------------------------------------------------------------
def init_params(key, in_channels, out_channels, expansion=6):
    cexp = in_channels * expansion
    ks = jax.random.split(key, 12)

    def bn_fold(kg, kb, km, kv, c, eps=1e-5):
        gamma = 1.0 + 0.1 * jax.random.normal(kg, (c,), jnp.float32)
        beta = 0.1 * jax.random.normal(kb, (c,), jnp.float32)
        mean = 0.1 * jax.random.normal(km, (c,), jnp.float32)
        var = 1.0 + 0.5 * jax.random.uniform(kv, (c,), jnp.float32)
        scale = gamma / jnp.sqrt(var + eps)
        bias = beta - mean * scale
        return scale.reshape(1, c), bias.reshape(1, c)

    w1 = 0.2 * jax.random.normal(ks[0], (in_channels, cexp), jnp.float32)
    s1, b1 = bn_fold(ks[1], ks[2], ks[3], ks[4], cexp)
    wd = 0.2 * jax.random.normal(ks[5], (3, 3, cexp), jnp.float32)
    s2, b2 = bn_fold(ks[6], ks[7], ks[8], ks[9], cexp)
    w3 = 0.2 * jax.random.normal(ks[10], (cexp, out_channels), jnp.float32)
    s3, b3 = bn_fold(ks[11], ks[0], ks[1], ks[2], out_channels)
    return (w1, s1, b1, wd, s2, b2, w3, s3, b3)


def prepare_params(params):
    """Fold BN scales into the conv weights once (off the hot path).  The two
    1x1-conv weights are cast to bf16 only when both matmul dims are lane
    multiples (MXU-worthwhile); otherwise they stay f32 (better accuracy and
    no cast traffic at small channel counts)."""
    w1, s1, b1, wd, s2, b2, w3, s3, b3 = params

    def fold(w, s):
        wf = w * s
        return (wf.astype(jnp.bfloat16)
                if _mxu_bf16_worthwhile(*wf.shape) else wf.astype(jnp.float32))

    w1f = fold(w1, s1)
    w3f = fold(w3, s3)
    wdf = (wd * s2.reshape(1, 1, -1)).astype(jnp.float32)
    return (w1f, b1.astype(jnp.float32), wdf, b2.astype(jnp.float32),
            w3f, b3.astype(jnp.float32))


# ----------------------------------------------------------------------------
# Pure-JAX reference (NHWC) for correctness checking.
# ----------------------------------------------------------------------------
def reference_forward(x_nhwc, params, stride=1):
    w1, s1, b1, wd, s2, b2, w3, s3, b3 = params
    Cin, Cexp = w1.shape
    Cout = w3.shape[1]
    dn = ("NHWC", "HWIO", "NHWC")

    def bn(y, s, b):
        return y * s.reshape(1, 1, 1, -1) + b.reshape(1, 1, 1, -1)

    y = lax.conv_general_dilated(x_nhwc, w1.reshape(1, 1, Cin, Cexp),
                                 (1, 1), "VALID", dimension_numbers=dn)
    y = jax.nn.relu(bn(y, s1, b1))
    y = lax.conv_general_dilated(y, wd.reshape(3, 3, 1, Cexp),
                                 (stride, stride), ((1, 1), (1, 1)),
                                 feature_group_count=Cexp,
                                 dimension_numbers=dn)
    y = jax.nn.relu(bn(y, s2, b2))
    y = lax.conv_general_dilated(y, w3.reshape(1, 1, Cexp, Cout),
                                 (1, 1), "VALID", dimension_numbers=dn)
    y = bn(y, s3, b3)
    if y.shape == x_nhwc.shape:
        y = y + x_nhwc
    return jax.nn.relu(y)


if __name__ == "__main__":
    # Small shapes consistent with the module: batch=2, channels=4, spatial=16.
    B, Cin, H, W = 2, 4, 16, 16
    expansion, stride = 6, 1

    key = jax.random.PRNGKey(0)
    kx, kp1, kp2 = jax.random.split(key, 3)
    # NHWC activations end to end (NCHW conversion belongs at the model
    # boundary once, not per block).
    x = jax.random.normal(kx, (B, H, W, Cin), jnp.float32)

    # Case 1: Cout == Cin -> residual path; row_tile=8 forces two row tiles
    # per image and exercises the halo handling and border masking.
    params1 = init_params(kp1, Cin, Cin, expansion)
    out1 = jax.block_until_ready(
        bottleneck_block(x, prepare_params(params1), stride=stride, row_tile=8))
    ref1 = jax.block_until_ready(reference_forward(x, params1, stride=stride))
    assert out1.shape == ref1.shape, (out1.shape, ref1.shape)
    assert jnp.allclose(out1, ref1, atol=2e-3, rtol=2e-3), float(
        jnp.max(jnp.abs(out1 - ref1)))

    # Case 2: Cout != Cin -> no residual; auto row tile (whole-image tile).
    params2 = init_params(kp2, Cin, 8, expansion)
    out2 = jax.block_until_ready(
        bottleneck_block(x, prepare_params(params2), stride=stride))
    ref2 = jax.block_until_ready(reference_forward(x, params2, stride=stride))
    assert out2.shape == ref2.shape, (out2.shape, ref2.shape)
    assert jnp.allclose(out2, ref2, atol=2e-3, rtol=2e-3), float(
        jnp.max(jnp.abs(out2 - ref2)))

    print("KERNEL_OK")
</pallas_src>

<mosaic_0001>
module attributes {stable_mosaic.version = 11 : i64} {
  func.func @kernel(%arg0: i32, %arg1: i32, %arg2: memref<1x1x16x4xf32, #tpu.memory_space<vmem>>, %arg3: memref<1x8x16x4xf32, #tpu.memory_space<vmem>>, %arg4: memref<1x1x16x4xf32, #tpu.memory_space<vmem>>, %arg5: memref<4x24xf32, #tpu.memory_space<vmem>>, %arg6: memref<1x24xf32, #tpu.memory_space<vmem>>, %arg7: memref<3x3x24xf32, #tpu.memory_space<vmem>>, %arg8: memref<1x24xf32, #tpu.memory_space<vmem>>, %arg9: memref<24x4xf32, #tpu.memory_space<vmem>>, %arg10: memref<1x4xf32, #tpu.memory_space<vmem>>, %arg11: memref<1x8x16x4xf32, #tpu.memory_space<vmem>>, %arg12: memref<10x18x24xf32, #tpu.memory_space<vmem>>) attributes {dimension_semantics = [#tpu.dimension_semantics<parallel>, #tpu.dimension_semantics<parallel>], iteration_bounds = array<i64: 2, 2>, scalar_prefetch = 0 : i64, scratch_operands = 1 : i64, tpu.core_type = #tpu.core_type<tc>, window_params = [{transform_indices = @transform_0, window_bounds = array<i64: 1, 1, 16, 4>}, {transform_indices = @transform_1, window_bounds = array<i64: 1, 8, 16, 4>}, {transform_indices = @transform_2, window_bounds = array<i64: 1, 1, 16, 4>}, {pipeline_mode = #tpu.pipeline_mode<synchronous>, transform_indices = @transform_3, window_bounds = array<i64: 4, 24>}, {pipeline_mode = #tpu.pipeline_mode<synchronous>, transform_indices = @transform_4, window_bounds = array<i64: 1, 24>}, {pipeline_mode = #tpu.pipeline_mode<synchronous>, transform_indices = @transform_5, window_bounds = array<i64: 3, 3, 24>}, {pipeline_mode = #tpu.pipeline_mode<synchronous>, transform_indices = @transform_6, window_bounds = array<i64: 1, 24>}, {pipeline_mode = #tpu.pipeline_mode<synchronous>, transform_indices = @transform_7, window_bounds = array<i64: 24, 4>}, {pipeline_mode = #tpu.pipeline_mode<synchronous>, transform_indices = @transform_8, window_bounds = array<i64: 1, 4>}, {transform_indices = @transform_9, window_bounds = array<i64: 1, 8, 16, 4>}]} {
    %c0 = arith.constant 0 : index
    %c0_0 = arith.constant 0 : index
    %c0_1 = arith.constant 0 : index
    %c0_2 = arith.constant 0 : index
    %0 = vector.load %arg3[%c0, %c0_0, %c0_1, %c0_2] : memref<1x8x16x4xf32, #tpu.memory_space<vmem>>, vector<1x8x16x4xf32>
    %1 = vector.shape_cast %0 : vector<1x8x16x4xf32> to vector<8x16x4xf32>
    %2 = vector.shape_cast %1 : vector<8x16x4xf32> to vector<128x4xf32>
    %c0_3 = arith.constant 0 : index
    %c0_4 = arith.constant 0 : index
    %c0_5 = arith.constant 0 : index
    %c0_6 = arith.constant 0 : index
    %3 = vector.load %arg2[%c0_3, %c0_4, %c0_5, %c0_6] : memref<1x1x16x4xf32, #tpu.memory_space<vmem>>, vector<1x1x16x4xf32>
    %4 = vector.shape_cast %3 : vector<1x1x16x4xf32> to vector<16x4xf32>
    %c0_7 = arith.constant 0 : index
    %c0_8 = arith.constant 0 : index
    %c0_9 = arith.constant 0 : index
    %c0_10 = arith.constant 0 : index
    %5 = vector.load %arg4[%c0_7, %c0_8, %c0_9, %c0_10] : memref<1x1x16x4xf32, #tpu.memory_space<vmem>>, vector<1x1x16x4xf32>
    %6 = vector.shape_cast %5 : vector<1x1x16x4xf32> to vector<16x4xf32>
    %7 = tpu.concatenate %4, %2, %6 in 0 : vector<16x4xf32>, vector<128x4xf32>, vector<16x4xf32> -> vector<160x4xf32>
    %c0_11 = arith.constant 0 : index
    %c0_12 = arith.constant 0 : index
    %8 = vector.load %arg5[%c0_11, %c0_12] : memref<4x24xf32, #tpu.memory_space<vmem>>, vector<4x24xf32>
    %c0_13 = arith.constant 0 : index
    %c0_14 = arith.constant 0 : index
    %9 = vector.load %arg6[%c0_13, %c0_14] : memref<1x24xf32, #tpu.memory_space<vmem>>, vector<1x24xf32>
    %cst = arith.constant 0.000000e+00 : f32
    %10 = vector.broadcast %cst : f32 to vector<160x24xf32>
    %11 = vector.broadcast %9 : vector<1x24xf32> to vector<160x24xf32>
    %12 = arith.addf %10, %11 : vector<160x24xf32>
    %13 = vector.extract_strided_slice %7 {offsets = [0, 0], sizes = [160, 1], strides = [1, 1]} : vector<160x4xf32> to vector<160x1xf32>
    %14 = vector.extract_strided_slice %8 {offsets = [0, 0], sizes = [1, 24], strides = [1, 1]} : vector<4x24xf32> to vector<1x24xf32>
    %15 = vector.broadcast %13 : vector<160x1xf32> to vector<160x24xf32>
    %16 = vector.broadcast %14 : vector<1x24xf32> to vector<160x24xf32>
    %17 = arith.mulf %15, %16 : vector<160x24xf32>
    %18 = arith.addf %12, %17 : vector<160x24xf32>
    %19 = vector.extract_strided_slice %7 {offsets = [0, 1], sizes = [160, 1], strides = [1, 1]} : vector<160x4xf32> to vector<160x1xf32>
    %20 = vector.extract_strided_slice %8 {offsets = [1, 0], sizes = [1, 24], strides = [1, 1]} : vector<4x24xf32> to vector<1x24xf32>
    %21 = vector.broadcast %19 : vector<160x1xf32> to vector<160x24xf32>
    %22 = vector.broadcast %20 : vector<1x24xf32> to vector<160x24xf32>
    %23 = arith.mulf %21, %22 : vector<160x24xf32>
    %24 = arith.addf %18, %23 : vector<160x24xf32>
    %25 = vector.extract_strided_slice %7 {offsets = [0, 2], sizes = [160, 1], strides = [1, 1]} : vector<160x4xf32> to vector<160x1xf32>
    %26 = vector.extract_strided_slice %8 {offsets = [2, 0], sizes = [1, 24], strides = [1, 1]} : vector<4x24xf32> to vector<1x24xf32>
    %27 = vector.broadcast %25 : vector<160x1xf32> to vector<160x24xf32>
    %28 = vector.broadcast %26 : vector<1x24xf32> to vector<160x24xf32>
    %29 = arith.mulf %27, %28 : vector<160x24xf32>
    %30 = arith.addf %24, %29 : vector<160x24xf32>
    %31 = vector.extract_strided_slice %7 {offsets = [0, 3], sizes = [160, 1], strides = [1, 1]} : vector<160x4xf32> to vector<160x1xf32>
    %32 = vector.extract_strided_slice %8 {offsets = [3, 0], sizes = [1, 24], strides = [1, 1]} : vector<4x24xf32> to vector<1x24xf32>
    %33 = vector.broadcast %31 : vector<160x1xf32> to vector<160x24xf32>
    %34 = vector.broadcast %32 : vector<1x24xf32> to vector<160x24xf32>
    %35 = arith.mulf %33, %34 : vector<160x24xf32>
    %36 = arith.addf %30, %35 : vector<160x24xf32>
    %cst_15 = arith.constant 0.000000e+00 : f32
    %37 = vector.broadcast %cst_15 : f32 to vector<160x24xf32>
    %38 = arith.maximumf %36, %37 : vector<160x24xf32>
    %39 = vector.shape_cast %38 : vector<160x24xf32> to vector<10x16x24xf32>
    %40 = vector.extract_strided_slice %39 {offsets = [1, 0, 0], sizes = [8, 16, 24], strides = [1, 1, 1]} : vector<10x16x24xf32> to vector<8x16x24xf32>
    %c1 = arith.constant 1 : index
    %c1_16 = arith.constant 1 : index
    %c0_17 = arith.constant 0 : index
    %41 = vector.load %arg12[%c1, %c1_16, %c0_17] : memref<10x18x24xf32, #tpu.memory_space<vmem>>, vector<8x16x24xf32>
    tpu.vector_store %arg12[%c1, %c1_16, %c0_17], %40 {strides = array<i32>} : memref<10x18x24xf32, #tpu.memory_space<vmem>>, vector<8x16x24xf32>,
    %c0_i32 = arith.constant 0 : i32
    %42 = arith.cmpi sgt, %arg1, %c0_i32 : i32
    %43 = vector.extract_strided_slice %39 {offsets = [0, 0, 0], sizes = [1, 16, 24], strides = [1, 1, 1]} : vector<10x16x24xf32> to vector<1x16x24xf32>
    %44 = vector.shape_cast %43 : vector<1x16x24xf32> to vector<16x24xf32>
    %cst_18 = arith.constant 0.000000e+00 : f32
    %45 = vector.broadcast %cst_18 : f32 to vector<16x24xf32>
    %46 = arith.select %42, %44, %45 : vector<16x24xf32>
    %c0_19 = arith.constant 0 : index
    %c1_20 = arith.constant 1 : index
    %c0_21 = arith.constant 0 : index
    %47 = vector.load %arg12[%c0_19, %c1_20, %c0_21] : memref<10x18x24xf32, #tpu.memory_space<vmem>>, vector<1x16x24xf32>
    %48 = vector.shape_cast %47 : vector<1x16x24xf32> to vector<16x24xf32>
    %49 = vector.shape_cast %46 : vector<16x24xf32> to vector<1x16x24xf32>
    tpu.vector_store %arg12[%c0_19, %c1_20, %c0_21], %49 {strides = array<i32>} : memref<10x18x24xf32, #tpu.memory_space<vmem>>, vector<1x16x24xf32>,
    %c1_i32 = arith.constant 1 : i32
    %50 = arith.cmpi slt, %arg1, %c1_i32 : i32
    %51 = vector.extract_strided_slice %39 {offsets = [9, 0, 0], sizes = [1, 16, 24], strides = [1, 1, 1]} : vector<10x16x24xf32> to vector<1x16x24xf32>
    %52 = vector.shape_cast %51 : vector<1x16x24xf32> to vector<16x24xf32>
    %cst_22 = arith.constant 0.000000e+00 : f32
    %53 = vector.broadcast %cst_22 : f32 to vector<16x24xf32>
    %54 = arith.select %50, %52, %53 : vector<16x24xf32>
    %c9 = arith.constant 9 : index
    %c1_23 = arith.constant 1 : index
    %c0_24 = arith.constant 0 : index
    %55 = vector.load %arg12[%c9, %c1_23, %c0_24] : memref<10x18x24xf32, #tpu.memory_space<vmem>>, vector<1x16x24xf32>
    %56 = vector.shape_cast %55 : vector<1x16x24xf32> to vector<16x24xf32>
    %57 = vector.shape_cast %54 : vector<16x24xf32> to vector<1x16x24xf32>
    tpu.vector_store %arg12[%c9, %c1_23, %c0_24], %57 {strides = array<i32>} : memref<10x18x24xf32, #tpu.memory_space<vmem>>, vector<1x16x24xf32>,
    %cst_25 = arith.constant 0.000000e+00 : f32
    %58 = vector.broadcast %cst_25 : f32 to vector<10x1x24xf32>
    %c0_26 = arith.constant 0 : index
    %c0_27 = arith.constant 0 : index
    %c0_28 = arith.constant 0 : index
    %59 = vector.load %arg12[%c0_26, %c0_27, %c0_28] : memref<10x18x24xf32, #tpu.memory_space<vmem>>, vector<10x1x24xf32>
    tpu.vector_store %arg12[%c0_26, %c0_27, %c0_28], %58 {strides = array<i32>} : memref<10x18x24xf32, #tpu.memory_space<vmem>>, vector<10x1x24xf32>,
    %c0_29 = arith.constant 0 : index
    %c17 = arith.constant 17 : index
    %c0_30 = arith.constant 0 : index
    %60 = vector.load %arg12[%c0_29, %c17, %c0_30] : memref<10x18x24xf32, #tpu.memory_space<vmem>>, vector<10x1x24xf32>
    tpu.vector_store %arg12[%c0_29, %c17, %c0_30], %58 {strides = array<i32>} : memref<10x18x24xf32, #tpu.memory_space<vmem>>, vector<10x1x24xf32>,
    %c0_31 = arith.constant 0 : index
    %c0_32 = arith.constant 0 : index
    %c0_33 = arith.constant 0 : index
    %61 = vector.load %arg7[%c0_31, %c0_32, %c0_33] : memref<3x3x24xf32, #tpu.memory_space<vmem>>, vector<3x3x24xf32>
    %cst_34 = arith.constant 0.000000e+00 : f32
    %62 = vector.broadcast %cst_34 : f32 to vector<8x16x24xf32>
    %cst_35 = arith.constant 0.000000e+00 : f32
    %63 = vector.broadcast %cst_35 : f32 to vector<8x16x24xf32>
    %c0_36 = arith.constant 0 : index
    %c0_37 = arith.constant 0 : index
    %c0_38 = arith.constant 0 : index
    %64 = vector.load %arg12[%c0_36, %c0_37, %c0_38] : memref<10x18x24xf32, #tpu.memory_space<vmem>>, vector<10x16x24xf32>
    %65 = vector.extract_strided_slice %64 {offsets = [0, 0, 0], sizes = [8, 16, 24], strides = [1, 1, 1]} : vector<10x16x24xf32> to vector<8x16x24xf32>
    %66 = vector.extract_strided_slice %61 {offsets = [0, 0, 0], sizes = [1, 1, 24], strides = [1, 1, 1]} : vector<3x3x24xf32> to vector<1x1x24xf32>
    %67 = vector.shape_cast %66 : vector<1x1x24xf32> to vector<24xf32>
    %68 = vector.shape_cast %67 : vector<24xf32> to vector<1x1x24xf32>
    %69 = vector.broadcast %68 : vector<1x1x24xf32> to vector<8x16x24xf32>
    %70 = arith.mulf %65, %69 : vector<8x16x24xf32>
    %71 = arith.addf %62, %70 : vector<8x16x24xf32>
    %72 = vector.extract_strided_slice %64 {offsets = [1, 0, 0], sizes = [8, 16, 24], strides = [1, 1, 1]} : vector<10x16x24xf32> to vector<8x16x24xf32>
    %73 = vector.extract_strided_slice %61 {offsets = [1, 0, 0], sizes = [1, 1, 24], strides = [1, 1, 1]} : vector<3x3x24xf32> to vector<1x1x24xf32>
    %74 = vector.shape_cast %73 : vector<1x1x24xf32> to vector<24xf32>
    %75 = vector.shape_cast %74 : vector<24xf32> to vector<1x1x24xf32>
    %76 = vector.broadcast %75 : vector<1x1x24xf32> to vector<8x16x24xf32>
    %77 = arith.mulf %72, %76 : vector<8x16x24xf32>
    %78 = arith.addf %63, %77 : vector<8x16x24xf32>
    %79 = vector.extract_strided_slice %64 {offsets = [2, 0, 0], sizes = [8, 16, 24], strides = [1, 1, 1]} : vector<10x16x24xf32> to vector<8x16x24xf32>
    %80 = vector.extract_strided_slice %61 {offsets = [2, 0, 0], sizes = [1, 1, 24], strides = [1, 1, 1]} : vector<3x3x24xf32> to vector<1x1x24xf32>
    %81 = vector.shape_cast %80 : vector<1x1x24xf32> to vector<24xf32>
    %82 = vector.shape_cast %81 : vector<24xf32> to vector<1x1x24xf32>
    %83 = vector.broadcast %82 : vector<1x1x24xf32> to vector<8x16x24xf32>
    %84 = arith.mulf %79, %83 : vector<8x16x24xf32>
    %85 = arith.addf %71, %84 : vector<8x16x24xf32>
    %c0_39 = arith.constant 0 : index
    %c1_40 = arith.constant 1 : index
    %c0_41 = arith.constant 0 : index
    %86 = vector.load %arg12[%c0_39, %c1_40, %c0_41] : memref<10x18x24xf32, #tpu.memory_space<vmem>>, vector<10x16x24xf32>
    %87 = vector.extract_strided_slice %86 {offsets = [0, 0, 0], sizes = [8, 16, 24], strides = [1, 1, 1]} : vector<10x16x24xf32> to vector<8x16x24xf32>
    %88 = vector.extract_strided_slice %61 {offsets = [0, 1, 0], sizes = [1, 1, 24], strides = [1, 1, 1]} : vector<3x3x24xf32> to vector<1x1x24xf32>
    %89 = vector.shape_cast %88 : vector<1x1x24xf32> to vector<24xf32>
    %90 = vector.shape_cast %89 : vector<24xf32> to vector<1x1x24xf32>
    %91 = vector.broadcast %90 : vector<1x1x24xf32> to vector<8x16x24xf32>
    %92 = arith.mulf %87, %91 : vector<8x16x24xf32>
    %93 = arith.addf %78, %92 : vector<8x16x24xf32>
    %94 = vector.extract_strided_slice %86 {offsets = [1, 0, 0], sizes = [8, 16, 24], strides = [1, 1, 1]} : vector<10x16x24xf32> to vector<8x16x24xf32>
    %95 = vector.extract_strided_slice %61 {offsets = [1, 1, 0], sizes = [1, 1, 24], strides = [1, 1, 1]} : vector<3x3x24xf32> to vector<1x1x24xf32>
    %96 = vector.shape_cast %95 : vector<1x1x24xf32> to vector<24xf32>
    %97 = vector.shape_cast %96 : vector<24xf32> to vector<1x1x24xf32>
    %98 = vector.broadcast %97 : vector<1x1x24xf32> to vector<8x16x24xf32>
    %99 = arith.mulf %94, %98 : vector<8x16x24xf32>
    %100 = arith.addf %85, %99 : vector<8x16x24xf32>
    %101 = vector.extract_strided_slice %86 {offsets = [2, 0, 0], sizes = [8, 16, 24], strides = [1, 1, 1]} : vector<10x16x24xf32> to vector<8x16x24xf32>
    %102 = vector.extract_strided_slice %61 {offsets = [2, 1, 0], sizes = [1, 1, 24], strides = [1, 1, 1]} : vector<3x3x24xf32> to vector<1x1x24xf32>
    %103 = vector.shape_cast %102 : vector<1x1x24xf32> to vector<24xf32>
    %104 = vector.shape_cast %103 : vector<24xf32> to vector<1x1x24xf32>
    %105 = vector.broadcast %104 : vector<1x1x24xf32> to vector<8x16x24xf32>
    %106 = arith.mulf %101, %105 : vector<8x16x24xf32>
    %107 = arith.addf %93, %106 : vector<8x16x24xf32>
    %c0_42 = arith.constant 0 : index
    %c2 = arith.constant 2 : index
    %c0_43 = arith.constant 0 : index
    %108 = vector.load %arg12[%c0_42, %c2, %c0_43] : memref<10x18x24xf32, #tpu.memory_space<vmem>>, vector<10x16x24xf32>
    %109 = vector.extract_strided_slice %108 {offsets = [0, 0, 0], sizes = [8, 16, 24], strides = [1, 1, 1]} : vector<10x16x24xf32> to vector<8x16x24xf32>
    %110 = vector.extract_strided_slice %61 {offsets = [0, 2, 0], sizes = [1, 1, 24], strides = [1, 1, 1]} : vector<3x3x24xf32> to vector<1x1x24xf32>
    %111 = vector.shape_cast %110 : vector<1x1x24xf32> to vector<24xf32>
    %112 = vector.shape_cast %111 : vector<24xf32> to vector<1x1x24xf32>
    %113 = vector.broadcast %112 : vector<1x1x24xf32> to vector<8x16x24xf32>
    %114 = arith.mulf %109, %113 : vector<8x16x24xf32>
    %115 = arith.addf %100, %114 : vector<8x16x24xf32>
    %116 = vector.extract_strided_slice %108 {offsets = [1, 0, 0], sizes = [8, 16, 24], strides = [1, 1, 1]} : vector<10x16x24xf32> to vector<8x16x24xf32>
    %117 = vector.extract_strided_slice %61 {offsets = [1, 2, 0], sizes = [1, 1, 24], strides = [1, 1, 1]} : vector<3x3x24xf32> to vector<1x1x24xf32>
    %118 = vector.shape_cast %117 : vector<1x1x24xf32> to vector<24xf32>
    %119 = vector.shape_cast %118 : vector<24xf32> to vector<1x1x24xf32>
    %120 = vector.broadcast %119 : vector<1x1x24xf32> to vector<8x16x24xf32>
    %121 = arith.mulf %116, %120 : vector<8x16x24xf32>
    %122 = arith.addf %107, %121 : vector<8x16x24xf32>
    %123 = vector.extract_strided_slice %108 {offsets = [2, 0, 0], sizes = [8, 16, 24], strides = [1, 1, 1]} : vector<10x16x24xf32> to vector<8x16x24xf32>
    %124 = vector.extract_strided_slice %61 {offsets = [2, 2, 0], sizes = [1, 1, 24], strides = [1, 1, 1]} : vector<3x3x24xf32> to vector<1x1x24xf32>
    %125 = vector.shape_cast %124 : vector<1x1x24xf32> to vector<24xf32>
    %126 = vector.shape_cast %125 : vector<24xf32> to vector<1x1x24xf32>
    %127 = vector.broadcast %126 : vector<1x1x24xf32> to vector<8x16x24xf32>
    %128 = arith.mulf %123, %127 : vector<8x16x24xf32>
    %129 = arith.addf %115, %128 : vector<8x16x24xf32>
    %130 = arith.addf %129, %122 : vector<8x16x24xf32>
    %c0_44 = arith.constant 0 : index
    %c0_45 = arith.constant 0 : index
    %131 = vector.load %arg8[%c0_44, %c0_45] : memref<1x24xf32, #tpu.memory_space<vmem>>, vector<1x24xf32>
    %132 = vector.shape_cast %131 : vector<1x24xf32> to vector<24xf32>
    %133 = vector.shape_cast %132 : vector<24xf32> to vector<1x1x24xf32>
    %134 = vector.broadcast %133 : vector<1x1x24xf32> to vector<8x16x24xf32>
    %135 = arith.addf %130, %134 : vector<8x16x24xf32>
    %cst_46 = arith.constant 0.000000e+00 : f32
    %136 = vector.broadcast %cst_46 : f32 to vector<8x16x24xf32>
    %137 = arith.maximumf %135, %136 : vector<8x16x24xf32>
    %138 = vector.shape_cast %137 : vector<8x16x24xf32> to vector<128x24xf32>
    %c0_47 = arith.constant 0 : index
    %c0_48 = arith.constant 0 : index
    %139 = vector.load %arg9[%c0_47, %c0_48] : memref<24x4xf32, #tpu.memory_space<vmem>>, vector<24x4xf32>
    %c0_49 = arith.constant 0 : index
    %c0_50 = arith.constant 0 : index
    %140 = vector.load %arg10[%c0_49, %c0_50] : memref<1x4xf32, #tpu.memory_space<vmem>>, vector<1x4xf32>
    %cst_51 = arith.constant 0.000000e+00 : f32
    %141 = vector.broadcast %cst_51 : f32 to vector<128x4xf32>
    %142 = vector.broadcast %140 : vector<1x4xf32> to vector<128x4xf32>
    %143 = arith.addf %141, %142 : vector<128x4xf32>
    %144 = vector.extract_strided_slice %138 {offsets = [0, 0], sizes = [128, 1], strides = [1, 1]} : vector<128x24xf32> to vector<128x1xf32>
    %145 = vector.extract_strided_slice %139 {offsets = [0, 0], sizes = [1, 4], strides = [1, 1]} : vector<24x4xf32> to vector<1x4xf32>
    %146 = vector.broadcast %144 : vector<128x1xf32> to vector<128x4xf32>
    %147 = vector.broadcast %145 : vector<1x4xf32> to vector<128x4xf32>
    %148 = arith.mulf %146, %147 : vector<128x4xf32>
    %149 = arith.addf %143, %148 : vector<128x4xf32>
    %150 = vector.extract_strided_slice %138 {offsets = [0, 1], sizes = [128, 1], strides = [1, 1]} : vector<128x24xf32> to vector<128x1xf32>
    %151 = vector.extract_strided_slice %139 {offsets = [1, 0], sizes = [1, 4], strides = [1, 1]} : vector<24x4xf32> to vector<1x4xf32>
    %152 = vector.broadcast %150 : vector<128x1xf32> to vector<128x4xf32>
    %153 = vector.broadcast %151 : vector<1x4xf32> to vector<128x4xf32>
    %154 = arith.mulf %152, %153 : vector<128x4xf32>
    %155 = arith.addf %149, %154 : vector<128x4xf32>
    %156 = vector.extract_strided_slice %138 {offsets = [0, 2], sizes = [128, 1], strides = [1, 1]} : vector<128x24xf32> to vector<128x1xf32>
    %157 = vector.extract_strided_slice %139 {offsets = [2, 0], sizes = [1, 4], strides = [1, 1]} : vector<24x4xf32> to vector<1x4xf32>
    %158 = vector.broadcast %156 : vector<128x1xf32> to vector<128x4xf32>
    %159 = vector.broadcast %157 : vector<1x4xf32> to vector<128x4xf32>
    %160 = arith.mulf %158, %159 : vector<128x4xf32>
    %161 = arith.addf %155, %160 : vector<128x4xf32>
    %162 = vector.extract_strided_slice %138 {offsets = [0, 3], sizes = [128, 1], strides = [1, 1]} : vector<128x24xf32> to vector<128x1xf32>
    %163 = vector.extract_strided_slice %139 {offsets = [3, 0], sizes = [1, 4], strides = [1, 1]} : vector<24x4xf32> to vector<1x4xf32>
    %164 = vector.broadcast %162 : vector<128x1xf32> to vector<128x4xf32>
    %165 = vector.broadcast %163 : vector<1x4xf32> to vector<128x4xf32>
    %166 = arith.mulf %164, %165 : vector<128x4xf32>
    %167 = arith.addf %161, %166 : vector<128x4xf32>
    %168 = vector.extract_strided_slice %138 {offsets = [0, 4], sizes = [128, 1], strides = [1, 1]} : vector<128x24xf32> to vector<128x1xf32>
    %169 = vector.extract_strided_slice %139 {offsets = [4, 0], sizes = [1, 4], strides = [1, 1]} : vector<24x4xf32> to vector<1x4xf32>
    %170 = vector.broadcast %168 : vector<128x1xf32> to vector<128x4xf32>
    %171 = vector.broadcast %169 : vector<1x4xf32> to vector<128x4xf32>
    %172 = arith.mulf %170, %171 : vector<128x4xf32>
    %173 = arith.addf %167, %172 : vector<128x4xf32>
    %174 = vector.extract_strided_slice %138 {offsets = [0, 5], sizes = [128, 1], strides = [1, 1]} : vector<128x24xf32> to vector<128x1xf32>
    %175 = vector.extract_strided_slice %139 {offsets = [5, 0], sizes = [1, 4], strides = [1, 1]} : vector<24x4xf32> to vector<1x4xf32>
    %176 = vector.broadcast %174 : vector<128x1xf32> to vector<128x4xf32>
    %177 = vector.broadcast %175 : vector<1x4xf32> to vector<128x4xf32>
    %178 = arith.mulf %176, %177 : vector<128x4xf32>
    %179 = arith.addf %173, %178 : vector<128x4xf32>
    %180 = vector.extract_strided_slice %138 {offsets = [0, 6], sizes = [128, 1], strides = [1, 1]} : vector<128x24xf32> to vector<128x1xf32>
    %181 = vector.extract_strided_slice %139 {offsets = [6, 0], sizes = [1, 4], strides = [1, 1]} : vector<24x4xf32> to vector<1x4xf32>
    %182 = vector.broadcast %180 : vector<128x1xf32> to vector<128x4xf32>
    %183 = vector.broadcast %181 : vector<1x4xf32> to vector<128x4xf32>
    %184 = arith.mulf %182, %183 : vector<128x4xf32>
    %185 = arith.addf %179, %184 : vector<128x4xf32>
    %186 = vector.extract_strided_slice %138 {offsets = [0, 7], sizes = [128, 1], strides = [1, 1]} : vector<128x24xf32> to vector<128x1xf32>
    %187 = vector.extract_strided_slice %139 {offsets = [7, 0], sizes = [1, 4], strides = [1, 1]} : vector<24x4xf32> to vector<1x4xf32>
    %188 = vector.broadcast %186 : vector<128x1xf32> to vector<128x4xf32>
    %189 = vector.broadcast %187 : vector<1x4xf32> to vector<128x4xf32>
    %190 = arith.mulf %188, %189 : vector<128x4xf32>
    %191 = arith.addf %185, %190 : vector<128x4xf32>
    %192 = vector.extract_strided_slice %138 {offsets = [0, 8], sizes = [128, 1], strides = [1, 1]} : vector<128x24xf32> to vector<128x1xf32>
    %193 = vector.extract_strided_slice %139 {offsets = [8, 0], sizes = [1, 4], strides = [1, 1]} : vector<24x4xf32> to vector<1x4xf32>
    %194 = vector.broadcast %192 : vector<128x1xf32> to vector<128x4xf32>
    %195 = vector.broadcast %193 : vector<1x4xf32> to vector<128x4xf32>
    %196 = arith.mulf %194, %195 : vector<128x4xf32>
    %197 = arith.addf %191, %196 : vector<128x4xf32>
    %198 = vector.extract_strided_slice %138 {offsets = [0, 9], sizes = [128, 1], strides = [1, 1]} : vector<128x24xf32> to vector<128x1xf32>
    %199 = vector.extract_strided_slice %139 {offsets = [9, 0], sizes = [1, 4], strides = [1, 1]} : vector<24x4xf32> to vector<1x4xf32>
    %200 = vector.broadcast %198 : vector<128x1xf32> to vector<128x4xf32>
    %201 = vector.broadcast %199 : vector<1x4xf32> to vector<128x4xf32>
    %202 = arith.mulf %200, %201 : vector<128x4xf32>
    %203 = arith.addf %197, %202 : vector<128x4xf32>
    %204 = vector.extract_strided_slice %138 {offsets = [0, 10], sizes = [128, 1], strides = [1, 1]} : vector<128x24xf32> to vector<128x1xf32>
    %205 = vector.extract_strided_slice %139 {offsets = [10, 0], sizes = [1, 4], strides = [1, 1]} : vector<24x4xf32> to vector<1x4xf32>
    %206 = vector.broadcast %204 : vector<128x1xf32> to vector<128x4xf32>
    %207 = vector.broadcast %205 : vector<1x4xf32> to vector<128x4xf32>
    %208 = arith.mulf %206, %207 : vector<128x4xf32>
    %209 = arith.addf %203, %208 : vector<128x4xf32>
    %210 = vector.extract_strided_slice %138 {offsets = [0, 11], sizes = [128, 1], strides = [1, 1]} : vector<128x24xf32> to vector<128x1xf32>
    %211 = vector.extract_strided_slice %139 {offsets = [11, 0], sizes = [1, 4], strides = [1, 1]} : vector<24x4xf32> to vector<1x4xf32>
    %212 = vector.broadcast %210 : vector<128x1xf32> to vector<128x4xf32>
    %213 = vector.broadcast %211 : vector<1x4xf32> to vector<128x4xf32>
    %214 = arith.mulf %212, %213 : vector<128x4xf32>
    %215 = arith.addf %209, %214 : vector<128x4xf32>
    %216 = vector.extract_strided_slice %138 {offsets = [0, 12], sizes = [128, 1], strides = [1, 1]} : vector<128x24xf32> to vector<128x1xf32>
    %217 = vector.extract_strided_slice %139 {offsets = [12, 0], sizes = [1, 4], strides = [1, 1]} : vector<24x4xf32> to vector<1x4xf32>
    %218 = vector.broadcast %216 : vector<128x1xf32> to vector<128x4xf32>
    %219 = vector.broadcast %217 : vector<1x4xf32> to vector<128x4xf32>
    %220 = arith.mulf %218, %219 : vector<128x4xf32>
    %221 = arith.addf %215, %220 : vector<128x4xf32>
    %222 = vector.extract_strided_slice %138 {offsets = [0, 13], sizes = [128, 1], strides = [1, 1]} : vector<128x24xf32> to vector<128x1xf32>
    %223 = vector.extract_strided_slice %139 {offsets = [13, 0], sizes = [1, 4], strides = [1, 1]} : vector<24x4xf32> to vector<1x4xf32>
    %224 = vector.broadcast %222 : vector<128x1xf32> to vector<128x4xf32>
    %225 = vector.broadcast %223 : vector<1x4xf32> to vector<128x4xf32>
    %226 = arith.mulf %224, %225 : vector<128x4xf32>
    %227 = arith.addf %221, %226 : vector<128x4xf32>
    %228 = vector.extract_strided_slice %138 {offsets = [0, 14], sizes = [128, 1], strides = [1, 1]} : vector<128x24xf32> to vector<128x1xf32>
    %229 = vector.extract_strided_slice %139 {offsets = [14, 0], sizes = [1, 4], strides = [1, 1]} : vector<24x4xf32> to vector<1x4xf32>
    %230 = vector.broadcast %228 : vector<128x1xf32> to vector<128x4xf32>
    %231 = vector.broadcast %229 : vector<1x4xf32> to vector<128x4xf32>
    %232 = arith.mulf %230, %231 : vector<128x4xf32>
    %233 = arith.addf %227, %232 : vector<128x4xf32>
    %234 = vector.extract_strided_slice %138 {offsets = [0, 15], sizes = [128, 1], strides = [1, 1]} : vector<128x24xf32> to vector<128x1xf32>
    %235 = vector.extract_strided_slice %139 {offsets = [15, 0], sizes = [1, 4], strides = [1, 1]} : vector<24x4xf32> to vector<1x4xf32>
    %236 = vector.broadcast %234 : vector<128x1xf32> to vector<128x4xf32>
    %237 = vector.broadcast %235 : vector<1x4xf32> to vector<128x4xf32>
    %238 = arith.mulf %236, %237 : vector<128x4xf32>
    %239 = arith.addf %233, %238 : vector<128x4xf32>
    %240 = vector.extract_strided_slice %138 {offsets = [0, 16], sizes = [128, 1], strides = [1, 1]} : vector<128x24xf32> to vector<128x1xf32>
    %241 = vector.extract_strided_slice %139 {offsets = [16, 0], sizes = [1, 4], strides = [1, 1]} : vector<24x4xf32> to vector<1x4xf32>
    %242 = vector.broadcast %240 : vector<128x1xf32> to vector<128x4xf32>
    %243 = vector.broadcast %241 : vector<1x4xf32> to vector<128x4xf32>
    %244 = arith.mulf %242, %243 : vector<128x4xf32>
    %245 = arith.addf %239, %244 : vector<128x4xf32>
    %246 = vector.extract_strided_slice %138 {offsets = [0, 17], sizes = [128, 1], strides = [1, 1]} : vector<128x24xf32> to vector<128x1xf32>
    %247 = vector.extract_strided_slice %139 {offsets = [17, 0], sizes = [1, 4], strides = [1, 1]} : vector<24x4xf32> to vector<1x4xf32>
    %248 = vector.broadcast %246 : vector<128x1xf32> to vector<128x4xf32>
    %249 = vector.broadcast %247 : vector<1x4xf32> to vector<128x4xf32>
    %250 = arith.mulf %248, %249 : vector<128x4xf32>
    %251 = arith.addf %245, %250 : vector<128x4xf32>
    %252 = vector.extract_strided_slice %138 {offsets = [0, 18], sizes = [128, 1], strides = [1, 1]} : vector<128x24xf32> to vector<128x1xf32>
    %253 = vector.extract_strided_slice %139 {offsets = [18, 0], sizes = [1, 4], strides = [1, 1]} : vector<24x4xf32> to vector<1x4xf32>
    %254 = vector.broadcast %252 : vector<128x1xf32> to vector<128x4xf32>
    %255 = vector.broadcast %253 : vector<1x4xf32> to vector<128x4xf32>
    %256 = arith.mulf %254, %255 : vector<128x4xf32>
    %257 = arith.addf %251, %256 : vector<128x4xf32>
    %258 = vector.extract_strided_slice %138 {offsets = [0, 19], sizes = [128, 1], strides = [1, 1]} : vector<128x24xf32> to vector<128x1xf32>
    %259 = vector.extract_strided_slice %139 {offsets = [19, 0], sizes = [1, 4], strides = [1, 1]} : vector<24x4xf32> to vector<1x4xf32>
    %260 = vector.broadcast %258 : vector<128x1xf32> to vector<128x4xf32>
    %261 = vector.broadcast %259 : vector<1x4xf32> to vector<128x4xf32>
    %262 = arith.mulf %260, %261 : vector<128x4xf32>
    %263 = arith.addf %257, %262 : vector<128x4xf32>
    %264 = vector.extract_strided_slice %138 {offsets = [0, 20], sizes = [128, 1], strides = [1, 1]} : vector<128x24xf32> to vector<128x1xf32>
    %265 = vector.extract_strided_slice %139 {offsets = [20, 0], sizes = [1, 4], strides = [1, 1]} : vector<24x4xf32> to vector<1x4xf32>
    %266 = vector.broadcast %264 : vector<128x1xf32> to vector<128x4xf32>
    %267 = vector.broadcast %265 : vector<1x4xf32> to vector<128x4xf32>
    %268 = arith.mulf %266, %267 : vector<128x4xf32>
    %269 = arith.addf %263, %268 : vector<128x4xf32>
    %270 = vector.extract_strided_slice %138 {offsets = [0, 21], sizes = [128, 1], strides = [1, 1]} : vector<128x24xf32> to vector<128x1xf32>
    %271 = vector.extract_strided_slice %139 {offsets = [21, 0], sizes = [1, 4], strides = [1, 1]} : vector<24x4xf32> to vector<1x4xf32>
    %272 = vector.broadcast %270 : vector<128x1xf32> to vector<128x4xf32>
    %273 = vector.broadcast %271 : vector<1x4xf32> to vector<128x4xf32>
    %274 = arith.mulf %272, %273 : vector<128x4xf32>
    %275 = arith.addf %269, %274 : vector<128x4xf32>
    %276 = vector.extract_strided_slice %138 {offsets = [0, 22], sizes = [128, 1], strides = [1, 1]} : vector<128x24xf32> to vector<128x1xf32>
    %277 = vector.extract_strided_slice %139 {offsets = [22, 0], sizes = [1, 4], strides = [1, 1]} : vector<24x4xf32> to vector<1x4xf32>
    %278 = vector.broadcast %276 : vector<128x1xf32> to vector<128x4xf32>
    %279 = vector.broadcast %277 : vector<1x4xf32> to vector<128x4xf32>
    %280 = arith.mulf %278, %279 : vector<128x4xf32>
    %281 = arith.addf %275, %280 : vector<128x4xf32>
    %282 = vector.extract_strided_slice %138 {offsets = [0, 23], sizes = [128, 1], strides = [1, 1]} : vector<128x24xf32> to vector<128x1xf32>
    %283 = vector.extract_strided_slice %139 {offsets = [23, 0], sizes = [1, 4], strides = [1, 1]} : vector<24x4xf32> to vector<1x4xf32>
    %284 = vector.broadcast %282 : vector<128x1xf32> to vector<128x4xf32>
    %285 = vector.broadcast %283 : vector<1x4xf32> to vector<128x4xf32>
    %286 = arith.mulf %284, %285 : vector<128x4xf32>
    %287 = arith.addf %281, %286 : vector<128x4xf32>
    %288 = arith.addf %287, %2 : vector<128x4xf32>
    %cst_52 = arith.constant 0.000000e+00 : f32
    %289 = vector.broadcast %cst_52 : f32 to vector<128x4xf32>
    %290 = arith.maximumf %288, %289 : vector<128x4xf32>
    %291 = vector.shape_cast %290 : vector<128x4xf32> to vector<8x16x4xf32>
    %c0_53 = arith.constant 0 : index
    %c0_54 = arith.constant 0 : index
    %c0_55 = arith.constant 0 : index
    %c0_56 = arith.constant 0 : index
    %292 = vector.load %arg11[%c0_53, %c0_54, %c0_55, %c0_56] : memref<1x8x16x4xf32, #tpu.memory_space<vmem>>, vector<1x8x16x4xf32>
    %293 = vector.shape_cast %292 : vector<1x8x16x4xf32> to vector<8x16x4xf32>
    %294 = vector.shape_cast %291 : vector<8x16x4xf32> to vector<1x8x16x4xf32>
    tpu.vector_store %arg11[%c0_53, %c0_54, %c0_55, %c0_56], %294 {strides = array<i32>} : memref<1x8x16x4xf32, #tpu.memory_space<vmem>>, vector<1x8x16x4xf32>,
    return
  }
  func.func @transform_0(%arg0: i32, %arg1: i32) -> (i32, i32, i32, i32) {
    %c8_i32 = arith.constant 8 : i32
    %0 = arith.muli %arg1, %c8_i32 : i32
    %c1_i32 = arith.constant 1 : i32
    %1 = arith.subi %0, %c1_i32 : i32
    %c0_i32 = arith.constant 0 : i32
    %2 = arith.maxsi %1, %c0_i32 : i32
    %c0_i32_0 = arith.constant 0 : i32
    %c0_i32_1 = arith.constant 0 : i32
    %c0_i32_2 = arith.constant 0 : i32
    return %arg0, %2, %c0_i32_0, %c0_i32_1 : i32, i32, i32, i32
  }
  func.func @transform_1(%arg0: i32, %arg1: i32) -> (i32, i32, i32, i32) {
    %c0_i32 = arith.constant 0 : i32
    %c0_i32_0 = arith.constant 0 : i32
    %c0_i32_1 = arith.constant 0 : i32
    return %arg0, %arg1, %c0_i32, %c0_i32_0 : i32, i32, i32, i32
  }
  func.func @transform_2(%arg0: i32, %arg1: i32) -> (i32, i32, i32, i32) {
    %c1_i32 = arith.constant 1 : i32
    %0 = arith.addi %arg1, %c1_i32 : i32
    %c8_i32 = arith.constant 8 : i32
    %1 = arith.muli %0, %c8_i32 : i32
    %c15_i32 = arith.constant 15 : i32
    %2 = arith.minsi %1, %c15_i32 : i32
    %c0_i32 = arith.constant 0 : i32
    %c0_i32_0 = arith.constant 0 : i32
    %c0_i32_1 = arith.constant 0 : i32
    return %arg0, %2, %c0_i32, %c0_i32_0 : i32, i32, i32, i32
  }
  func.func @transform_3(%arg0: i32, %arg1: i32) -> (i32, i32) {
    %c0_i32 = arith.constant 0 : i32
    %c0_i32_0 = arith.constant 0 : i32
    %c0_i32_1 = arith.constant 0 : i32
    return %c0_i32, %c0_i32_0 : i32, i32
  }
  func.func @transform_4(%arg0: i32, %arg1: i32) -> (i32, i32) {
    %c0_i32 = arith.constant 0 : i32
    %c0_i32_0 = arith.constant 0 : i32
    %c0_i32_1 = arith.constant 0 : i32
    return %c0_i32, %c0_i32_0 : i32, i32
  }
  func.func @transform_5(%arg0: i32, %arg1: i32) -> (i32, i32, i32) {
    %c0_i32 = arith.constant 0 : i32
    %c0_i32_0 = arith.constant 0 : i32
    %c0_i32_1 = arith.constant 0 : i32
    %c0_i32_2 = arith.constant 0 : i32
    return %c0_i32, %c0_i32_0, %c0_i32_1 : i32, i32, i32
  }
  func.func @transform_6(%arg0: i32, %arg1: i32) -> (i32, i32) {
    %c0_i32 = arith.constant 0 : i32
    %c0_i32_0 = arith.constant 0 : i32
    %c0_i32_1 = arith.constant 0 : i32
    return %c0_i32, %c0_i32_0 : i32, i32
  }
  func.func @transform_7(%arg0: i32, %arg1: i32) -> (i32, i32) {
    %c0_i32 = arith.constant 0 : i32
    %c0_i32_0 = arith.constant 0 : i32
    %c0_i32_1 = arith.constant 0 : i32
    return %c0_i32, %c0_i32_0 : i32, i32
  }
  func.func @transform_8(%arg0: i32, %arg1: i32) -> (i32, i32) {
    %c0_i32 = arith.constant 0 : i32
    %c0_i32_0 = arith.constant 0 : i32
    %c0_i32_1 = arith.constant 0 : i32
    return %c0_i32, %c0_i32_0 : i32, i32
  }
  func.func @transform_9(%arg0: i32, %arg1: i32) -> (i32, i32, i32, i32) {
    %c0_i32 = arith.constant 0 : i32
    %c0_i32_0 = arith.constant 0 : i32
    %c0_i32_1 = arith.constant 0 : i32
    return %arg0, %arg1, %c0_i32, %c0_i32_0 : i32, i32, i32, i32
  }
}

</mosaic_0001>

<llo_original>
// kernel: tpu_custom_call.1
$region0: #{tpu_custom_call.1}
  #allocation0 [shape = 'u32[]', space=smem, size = 0x4, offset = 0x4, fixed_abs, tag = 'smem constant byte address 0x4 - core index']
  #allocation1 [shape = 'u32[144,128]{1,0:T(1,128)}', space=vmem, size = 0x12000, scoped, tag = 'internal scratch']
  #allocation2 [shape = 'f32[10,18,24]{2,1,0:T(8,128)}', space=vmem, size = 0x1e000, scoped, tag = 'scratch operand']
  %s0 = inlined_call_operand.vmem [shape: f32[2,16,16,4], index: 0, kind: input, shape index: {}]
  %s1 = inlined_call_operand.vmem [shape: f32[2,16,16,4], index: 1, kind: input, shape index: {}]
  %s2 = inlined_call_operand.vmem [shape: f32[2,16,16,4], index: 2, kind: input, shape index: {}]
  %s3 = inlined_call_operand.vmem [shape: f32[4,24], index: 3, kind: input, shape index: {}]
  %s4 = inlined_call_operand.vmem [shape: f32[1,24], index: 4, kind: input, shape index: {}]
  %s5 = inlined_call_operand.vmem [shape: f32[3,3,24], index: 5, kind: input, shape index: {}]
  %s6 = inlined_call_operand.vmem [shape: f32[1,24], index: 6, kind: input, shape index: {}]
  %s7 = inlined_call_operand.vmem [shape: f32[24,4], index: 7, kind: input, shape index: {}]
  %s8 = inlined_call_operand.vmem [shape: f32[1,4], index: 8, kind: input, shape index: {}]
  %s9 = inlined_call_operand.vmem [shape: f32[2,16,16,4], index: 9, kind: output, shape index: {}]
  %s10 = sld [smem:[#allocation0]]
  $region69: #{tpu_custom_call.1} parent=0
    _
  %s12 = ssub.s32 1, %s10
  %s13 = scalar_select 0, %s12, %s10
  loop: start=0, step=1, limit=6
  $region2: #{tpu_custom_call.1} parent=0 // loop_pre_header
    _
  $region3: #{tpu_custom_call.1} parent=0 // loop_header
    %s15 = sphi 0, %s19
    %p16 = scmp.ge.s32.totalorder %s15, 6
    %s22 = sphi 0, %s34
    %s23 = sphi 0, %s30
    %s24 = sphi 0, %s22
    %s25 = sphi 0, %s23
    %s26 = sphi 0, %s24
    %s27 = sphi 0, %s25
    %s47 = sphi 0, %s49
    %s50 = sphi 0, %s47
    %s51 = sphi 0, %s50
    %s67 = sphi 0, %s51
    %s75 = sphi 0, %s77
    %s78 = sphi 0, %s75
    %s79 = sphi 0, %s78
    %s95 = sphi 0, %s79
    %s111 = sphi 0, %s113
    %s114 = sphi 0, %s111
    %s115 = sphi 0, %s114
    %s131 = sphi 0, %s115
    %s135 = sphi 0, %s135
    %s137 = sphi 0, %s135
    %s138 = sphi 0, %s137
    %s152 = sphi 0, %s138
    %s156 = sphi 0, %s156
    %s158 = sphi 0, %s156
    %s159 = sphi 0, %s158
    %s173 = sphi 0, %s159
    %s177 = sphi 0, %s177
    %s179 = sphi 0, %s177
    %s180 = sphi 0, %s179
    %s194 = sphi 0, %s180
    %s198 = sphi 0, %s198
    %s200 = sphi 0, %s198
    %s201 = sphi 0, %s200
    %s215 = sphi 0, %s201
    %s219 = sphi 0, %s219
    %s221 = sphi 0, %s219
    %s222 = sphi 0, %s221
    %s236 = sphi 0, %s222
    %s240 = sphi 0, %s240
    %s242 = sphi 0, %s240
    %s243 = sphi 0, %s242
    %s257 = sphi 0, %s243
    %s265 = sphi 0, %s267
    %s268 = sphi 0, %s265
    %s269 = sphi 0, %s268
    %s285 = sphi 0, %s269
  $region4: #{tpu_custom_call.1} parent=0 // loop_header_branch
    %18 = sbr.rel (%p16) target = $region8
  $region5: #{tpu_custom_call.1} parent=0 // loop_body
    %s20 = ssub.s32 %s15, 1
    %s21 = ssub.s32 %s15, 2
    %s28 = sadd.s32 1, %s23
    %p29 = scmp.ge.s32.totalorder %s28, 2
    %s30 = scalar_select %p29, 0, %s28
    %s31 = sadd.s32 1, %s22
    %s32 = scalar_select %p29, %s31, %s22
    %p33 = scmp.ge.s32.totalorder %s32, 2
    %s34 = scalar_select %p33, 0, %s32
    %s35 = smul.u32 %s23, 8
    %s36 = ssub.s32 %s35, 1
    %p37 = scmp.gt.s32.totalorder %s36, 0
    %s38 = scalar_select %p37, %s36, 0
    %s39 = smul.u32 %s30, 8
    %s40 = ssub.s32 %s39, 1
    %p41 = scmp.gt.s32.totalorder %s40, 0
    %s42 = scalar_select %p41, %s40, 0
    %s43 = ssub.s32 %s22, %s34
    %s44 = ssub.s32 %s38, %s42
    %s45 = sor.u32 %s43, %s44
    %p46 = scmp.eq.s32.totalorder %s45, 0
    %s48 = sadd.s32 %s47, 1
    %s49 = scalar_select %p46, %s47, %s48
    %p52 = pneg %p46
    %p53 = scmp.eq.s32.totalorder %s15, 3
    %p54 = por %p52, %p53
    %p55 = scmp.ne.s32.totalorder %s47, %s50
    %p56 = scmp.eq.s32.totalorder %s15, 0
    %p57 = por %p55, %p56
    %p58 = scmp.ne.s32.totalorder %s47, %s50
    %p59 = scmp.eq.s32.totalorder %s20, 3
    %p60 = por %p58, %p59
    %p61 = scmp.ne.s32.totalorder %s50, %s51
    %p62 = scmp.eq.s32.totalorder %s20, 0
    %p63 = por %p61, %p62
    %p64 = scmp.ne.s32.totalorder %s50, %s51
    %p65 = scmp.eq.s32.totalorder %s21, 3
    %p66 = por %p64, %p65
    %p68 = scmp.ne.s32.totalorder %s51, %s67
    %p69 = scmp.eq.s32.totalorder %s21, 0
    %p70 = por %p68, %p69
    %s71 = ssub.s32 %s22, %s34
    %s72 = ssub.s32 %s23, %s30
    %s73 = sor.u32 %s71, %s72
    %p74 = scmp.eq.s32.totalorder %s73, 0
    %s76 = sadd.s32 %s75, 1
    %s77 = scalar_select %p74, %s75, %s76
    %p80 = pneg %p74
    %p81 = scmp.eq.s32.totalorder %s15, 3
    %p82 = por %p80, %p81
    %p83 = scmp.ne.s32.totalorder %s75, %s78
    %p84 = scmp.eq.s32.totalorder %s15, 0
    %p85 = por %p83, %p84
    %p86 = scmp.ne.s32.totalorder %s75, %s78
    %p87 = scmp.eq.s32.totalorder %s20, 3
    %p88 = por %p86, %p87
    %p89 = scmp.ne.s32.totalorder %s78, %s79
    %p90 = scmp.eq.s32.totalorder %s20, 0
    %p91 = por %p89, %p90
    %p92 = scmp.ne.s32.totalorder %s78, %s79
    %p93 = scmp.eq.s32.totalorder %s21, 3
    %p94 = por %p92, %p93
    %p96 = scmp.ne.s32.totalorder %s79, %s95
    %p97 = scmp.eq.s32.totalorder %s21, 0
    %p98 = por %p96, %p97
    %s99 = sadd.s32 %s23, 1
    %s100 = smul.u32 %s99, 8
    %p101 = scmp.lt.s32.totalorder %s100, 15
    %s102 = scalar_select %p101, %s100, 15
    %s103 = sadd.s32 %s30, 1
    %s104 = smul.u32 %s103, 8
    %p105 = scmp.lt.s32.totalorder %s104, 15
    %s106 = scalar_select %p105, %s104, 15
    %s107 = ssub.s32 %s22, %s34
    %s108 = ssub.s32 %s102, %s106
    %s109 = sor.u32 %s107, %s108
    %p110 = scmp.eq.s32.totalorder %s109, 0
    %s112 = sadd.s32 %s111, 1
    %s113 = scalar_select %p110, %s111, %s112
    %p116 = pneg %p110
    %p117 = scmp.eq.s32.totalorder %s15, 3
    %p118 = por %p116, %p117
    %p119 = scmp.ne.s32.totalorder %s111, %s114
    %p120 = scmp.eq.s32.totalorder %s15, 0
    %p121 = por %p119, %p120
    %p122 = scmp.ne.s32.totalorder %s111, %s114
    %p123 = scmp.eq.s32.totalorder %s20, 3
    %p124 = por %p122, %p123
    %p125 = scmp.ne.s32.totalorder %s114, %s115
    %p126 = scmp.eq.s32.totalorder %s20, 0
    %p127 = por %p125, %p126
    %p128 = scmp.ne.s32.totalorder %s114, %s115
    %p129 = scmp.eq.s32.totalorder %s21, 3
    %p130 = por %p128, %p129
    %p132 = scmp.ne.s32.totalorder %s115, %s131
    %p133 = scmp.eq.s32.totalorder %s21, 0
    %p134 = por %p132, %p133
    %s136 = sadd.s32 %s135, 1
    %p139 = scmp.eq.s32.totalorder %s15, 3
    %p140 = scmp.ne.s32.totalorder %s135, %s137
    %p141 = scmp.eq.s32.totalorder %s15, 0
    %p142 = por %p140, %p141
    %p143 = scmp.ne.s32.totalorder %s135, %s137
    %p144 = scmp.eq.s32.totalorder %s20, 3
    %p145 = por %p143, %p144
    %p146 = scmp.ne.s32.totalorder %s137, %s138
    %p147 = scmp.eq.s32.totalorder %s20, 0
    %p148 = por %p146, %p147
    %p149 = scmp.ne.s32.totalorder %s137, %s138
    %p150 = scmp.eq.s32.totalorder %s21, 3
    %p151 = por %p149, %p150
    %p153 = scmp.ne.s32.totalorder %s138, %s152
    %p154 = scmp.eq.s32.totalorder %s21, 0
    %p155 = por %p153, %p154
    %s157 = sadd.s32 %s156, 1
    %p160 = scmp.eq.s32.totalorder %s15, 3
    %p161 = scmp.ne.s32.totalorder %s156, %s158
    %p162 = scmp.eq.s32.totalorder %s15, 0
    %p163 = por %p161, %p162
    %p164 = scmp.ne.s32.totalorder %s156, %s158
    %p165 = scmp.eq.s32.totalorder %s20, 3
    %p166 = por %p164, %p165
    %p167 = scmp.ne.s32.totalorder %s158, %s159
    %p168 = scmp.eq.s32.totalorder %s20, 0
    %p169 = por %p167, %p168
    %p170 = scmp.ne.s32.totalorder %s158, %s159
    %p171 = scmp.eq.s32.totalorder %s21, 3
    %p172 = por %p170, %p171
    %p174 = scmp.ne.s32.totalorder %s159, %s173
    %p175 = scmp.eq.s32.totalorder %s21, 0
    %p176 = por %p174, %p175
    %s178 = sadd.s32 %s177, 1
    %p181 = scmp.eq.s32.totalorder %s15, 3
    %p182 = scmp.ne.s32.totalorder %s177, %s179
    %p183 = scmp.eq.s32.totalorder %s15, 0
    %p184 = por %p182, %p183
    %p185 = scmp.ne.s32.totalorder %s177, %s179
    %p186 = scmp.eq.s32.totalorder %s20, 3
    %p187 = por %p185, %p186
    %p188 = scmp.ne.s32.totalorder %s179, %s180
    %p189 = scmp.eq.s32.totalorder %s20, 0
    %p190 = por %p188, %p189
    %p191 = scmp.ne.s32.totalorder %s179, %s180
    %p192 = scmp.eq.s32.totalorder %s21, 3
    %p193 = por %p191, %p192
    %p195 = scmp.ne.s32.totalorder %s180, %s194
    %p196 = scmp.eq.s32.totalorder %s21, 0
    %p197 = por %p195, %p196
    %s199 = sadd.s32 %s198, 1
    %p202 = scmp.eq.s32.totalorder %s15, 3
    %p203 = scmp.ne.s32.totalorder %s198, %s200
    %p204 = scmp.eq.s32.totalorder %s15, 0
    %p205 = por %p203, %p204
    %p206 = scmp.ne.s32.totalorder %s198, %s200
    %p207 = scmp.eq.s32.totalorder %s20, 3
    %p208 = por %p206, %p207
    %p209 = scmp.ne.s32.totalorder %s200, %s201
    %p210 = scmp.eq.s32.totalorder %s20, 0
    %p211 = por %p209, %p210
    %p212 = scmp.ne.s32.totalorder %s200, %s201
    %p213 = scmp.eq.s32.totalorder %s21, 3
    %p214 = por %p212, %p213
    %p216 = scmp.ne.s32.totalorder %s201, %s215
    %p217 = scmp.eq.s32.totalorder %s21, 0
    %p218 = por %p216, %p217
    %s220 = sadd.s32 %s219, 1
    %p223 = scmp.eq.s32.totalorder %s15, 3
    %p224 = scmp.ne.s32.totalorder %s219, %s221
    %p225 = scmp.eq.s32.totalorder %s15, 0
    %p226 = por %p224, %p225
    %p227 = scmp.ne.s32.totalorder %s219, %s221
    %p228 = scmp.eq.s32.totalorder %s20, 3
    %p229 = por %p227, %p228
    %p230 = scmp.ne.s32.totalorder %s221, %s222
    %p231 = scmp.eq.s32.totalorder %s20, 0
    %p232 = por %p230, %p231
    %p233 = scmp.ne.s32.totalorder %s221, %s222
    %p234 = scmp.eq.s32.totalorder %s21, 3
    %p235 = por %p233, %p234
    %p237 = scmp.ne.s32.totalorder %s222, %s236
    %p238 = scmp.eq.s32.totalorder %s21, 0
    %p239 = por %p237, %p238
    %s241 = sadd.s32 %s240, 1
    %p244 = scmp.eq.s32.totalorder %s15, 3
    %p245 = scmp.ne.s32.totalorder %s240, %s242
    %p246 = scmp.eq.s32.totalorder %s15, 0
    %p247 = por %p245, %p246
    %p248 = scmp.ne.s32.totalorder %s240, %s242
    %p249 = scmp.eq.s32.totalorder %s20, 3
    %p250 = por %p248, %p249
    %p251 = scmp.ne.s32.totalorder %s242, %s243
    %p252 = scmp.eq.s32.totalorder %s20, 0
    %p253 = por %p251, %p252
    %p254 = scmp.ne.s32.totalorder %s242, %s243
    %p255 = scmp.eq.s32.totalorder %s21, 3
    %p256 = por %p254, %p255
    %p258 = scmp.ne.s32.totalorder %s243, %s257
    %p259 = scmp.eq.s32.totalorder %s21, 0
    %p260 = por %p258, %p259
    %s261 = ssub.s32 %s22, %s34
    %s262 = ssub.s32 %s23, %s30
    %s263 = sor.u32 %s261, %s262
    %p264 = scmp.eq.s32.totalorder %s263, 0
    %s266 = sadd.s32 %s265, 1
    %s267 = scalar_select %p264, %s265, %s266
    %p270 = pneg %p264
    %p271 = scmp.eq.s32.totalorder %s15, 3
    %p272 = por %p270, %p271
    %p273 = scmp.ne.s32.totalorder %s265, %s268
    %p274 = scmp.eq.s32.totalorder %s15, 0
    %p275 = por %p273, %p274
    %p276 = scmp.ne.s32.totalorder %s265, %s268
    %p277 = scmp.eq.s32.totalorder %s20, 3
    %p278 = por %p276, %p277
    %p279 = scmp.ne.s32.totalorder %s268, %s269
    %p280 = scmp.eq.s32.totalorder %s20, 0
    %p281 = por %p279, %p280
    %p282 = scmp.ne.s32.totalorder %s268, %s269
    %p283 = scmp.eq.s32.totalorder %s21, 3
    %p284 = por %p282, %p283
    %p286 = scmp.ne.s32.totalorder %s269, %s285
    %p287 = scmp.eq.s32.totalorder %s21, 0
    %p288 = por %p286, %p287
    %p289 = scmp.le.s32.totalorder 1, %s15
    %p290 = scmp.lt.s32.totalorder %s15, 5
    %p291 = pnand %p289, %p290
    %p292 = pneg %p291
    // Predicated region
    $region9: #{tpu_custom_call.1} parent=5 // pred_check
      _
    $region10: #{tpu_custom_call.1} parent=5 // pred_check_branch
      %294 = sbr.rel (%p291) target = $region12
    $region11: #{tpu_custom_call.1} parent=5 // pred_region
      %s295 = ssub.s32 %s15, 1
      // Predicated region
      $region13: #{tpu_custom_call.1} parent=11 // pred_check
        %p296 = pneg %p148
      $region14: #{tpu_custom_call.1} parent=11 // pred_check_branch
        %298 = sbr.rel (%p296) target = $region16
      $region15: #{tpu_custom_call.1} parent=11 // pred_region
        _
      $region16: #{tpu_custom_call.1} parent=11 // pred_fallthru
        _
      // Predicated region
      $region17: #{tpu_custom_call.1} parent=11 // pred_check
        %p299 = pneg %p169
      $region18: #{tpu_custom_call.1} parent=11 // pred_check_branch
        %301 = sbr.rel (%p299) target = $region20
      $region19: #{tpu_custom_call.1} parent=11 // pred_region
        _
      $region20: #{tpu_custom_call.1} parent=11 // pred_fallthru
        _
      // Predicated region
      $region21: #{tpu_custom_call.1} parent=11 // pred_check
        %p302 = pneg %p190
      $region22: #{tpu_custom_call.1} parent=11 // pred_check_branch
        %304 = sbr.rel (%p302) target = $region24
      $region23: #{tpu_custom_call.1} parent=11 // pred_region
        _
      $region24: #{tpu_custom_call.1} parent=11 // pred_fallthru
        _
      // Predicated region
      $region25: #{tpu_custom_call.1} parent=11 // pred_check
        %p305 = pneg %p211
      $region26: #{tpu_custom_call.1} parent=11 // pred_check_branch
        %307 = sbr.rel (%p305) target = $region28
      $region27: #{tpu_custom_call.1} parent=11 // pred_region
        _
      $region28: #{tpu_custom_call.1} parent=11 // pred_fallthru
        _
      // Predicated region
      $region29: #{tpu_custom_call.1} parent=11 // pred_check
        %p308 = pneg %p232
      $region30: #{tpu_custom_call.1} parent=11 // pred_check_branch
        %310 = sbr.rel (%p308) target = $region32
      $region31: #{tpu_custom_call.1} parent=11 // pred_region
        _
      $region32: #{tpu_custom_call.1} parent=11 // pred_fallthru
        _
      // Predicated region
      $region33: #{tpu_custom_call.1} parent=11 // pred_check
        %p311 = pneg %p253
      $region34: #{tpu_custom_call.1} parent=11 // pred_check_branch
        %313 = sbr.rel (%p311) target = $region36
      $region35: #{tpu_custom_call.1} parent=11 // pred_region
        _
      $region36: #{tpu_custom_call.1} parent=11 // pred_fallthru
        _
    $region12: #{tpu_custom_call.1} parent=5 // pred_fallthru
      _
    %p314 = scmp.lt.s32.totalorder %s15, 4
    // Predicated region
    $region37: #{tpu_custom_call.1} parent=5 // pred_check
      %p315 = pneg %p314
    $region38: #{tpu_custom_call.1} parent=5 // pred_check_branch
      %317 = sbr.rel (%p315) target = $region40
    $region39: #{tpu_custom_call.1} parent=5 // pred_region
      // Predicated region
      $region41: #{tpu_custom_call.1} parent=39 // pred_check
        %p318 = pneg %p57
      $region42: #{tpu_custom_call.1} parent=39 // pred_check_branch
        %320 = sbr.rel (%p318) target = $region44
      $region43: #{tpu_custom_call.1} parent=39 // pred_region
        %s321 = smul.u32 %s23, 8
        %s322 = ssub.s32 %s321, 1
        %p323 = scmp.gt.s32.totalorder %s322, 0
        %s324 = scalar_select %p323, %s322, 0
        %p325 = scmp.lt.s32.totalorder %s22, 1
        %s326 = scalar_select %p325, %s22, 1
        %p327 = scmp.lt.s32.totalorder %s324, 15
        %s328 = scalar_select %p327, %s324, 15
        %s329 = smul.addr %s328, 2
        %s330 = smul.addr %s326, 32
        %s331 = sadd.s32 %s329, %s330
        %s332 = smul.addr %s331, 8
        %s333 = scalar_lea.vmem %s0, %s332
        %s334 = smul.u32 %s23, 8
        %s335 = ssub.s32 %s334, 1
        %p336 = scmp.gt.s32.totalorder %s335, 0
        %s337 = scalar_select %p336, %s335, 0
      $region44: #{tpu_custom_call.1} parent=39 // pred_fallthru
        _
      // Predicated region
      $region45: #{tpu_custom_call.1} parent=39 // pred_check
        %p338 = pneg %p85
      $region46: #{tpu_custom_call.1} parent=39 // pred_check_branch
        %340 = sbr.rel (%p338) target = $region48
      $region47: #{tpu_custom_call.1} parent=39 // pred_region
        %s341 = smul.u32 8, %s23
        %p342 = scmp.lt.s32.totalorder %s22, 1
        %s343 = scalar_select %p342, %s22, 1
        %p344 = scmp.lt.s32.totalorder %s341, 15
        %s345 = scalar_select %p344, %s341, 15
        %s346 = smul.addr %s345, 2
        %s347 = smul.addr %s343, 32
        %s348 = sadd.s32 %s346, %s347
        %s349 = smul.addr %s348, 8
        %s350 = scalar_lea.vmem %s1, %s349
        %s351 = smul.u32 8, %s23
      $region48: #{tpu_custom_call.1} parent=39 // pred_fallthru
        _
      // Predicated region
      $region49: #{tpu_custom_call.1} parent=39 // pred_check
        %p352 = pneg %p121
      $region50: #{tpu_custom_call.1} parent=39 // pred_check_branch
        %354 = sbr.rel (%p352) target = $region52
      $region51: #{tpu_custom_call.1} parent=39 // pred_region
        %s355 = sadd.s32 %s23, 1
        %s356 = smul.u32 %s355, 8
        %p357 = scmp.lt.s32.totalorder %s356, 15
        %s358 = scalar_select %p357, %s356, 15
        %p359 = scmp.lt.s32.totalorder %s22, 1
        %s360 = scalar_select %p359, %s22, 1
        %p361 = scmp.lt.s32.totalorder %s358, 15
        %s362 = scalar_select %p361, %s358, 15
        %s363 = smul.addr %s362, 2
        %s364 = smul.addr %s360, 32
        %s365 = sadd.s32 %s363, %s364
        %s366 = smul.addr %s365, 8
        %s367 = scalar_lea.vmem %s2, %s366
        %s368 = sadd.s32 %s23, 1
        %s369 = smul.u32 %s368, 8
        %p370 = scmp.lt.s32.totalorder %s369, 15
        %s371 = scalar_select %p370, %s369, 15
      $region52: #{tpu_custom_call.1} parent=39 // pred_fallthru
        _
    $region40: #{tpu_custom_call.1} parent=5 // pred_fallthru
      _
    %p372 = scmp.le.s32.totalorder 1, %s15
    %p373 = scmp.lt.s32.totalorder %s15, 5
    %p374 = pnand %p372, %p373
    %p375 = pneg %p374
    // Predicated region
    $region53: #{tpu_custom_call.1} parent=5 // pred_check
      _
    $region54: #{tpu_custom_call.1} parent=5 // pred_check_branch
      %377 = sbr.rel (%p374) target = $region56
    $region55: #{tpu_custom_call.1} parent=5 // pred_region
      %s378 = ssub.s32 %s15, 1
      %s379 = smul.u32 %s25, 8
      %s380 = ssub.s32 %s379, 1
      %p381 = scmp.gt.s32.totalorder %s380, 0
      %s382 = scalar_select %p381, %s380, 0
      %p383 = scmp.lt.s32.totalorder %s24, 1
      %s384 = scalar_select %p383, %s24, 1
      %p385 = scmp.lt.s32.totalorder %s382, 15
      %s386 = scalar_select %p385, %s382, 15
      %s387 = smul.addr %s386, 2
      %s388 = smul.addr %s384, 32
      %s389 = sadd.s32 %s387, %s388
      %s390 = smul.addr %s389, 8
      %s391 = scalar_lea.vmem %s0, %s390
      %p392 = pneg %p63
      %p393 = pneg %p60
      %s394 = smul.u32 8, %s25
      %p395 = scmp.lt.s32.totalorder %s24, 1
      %s396 = scalar_select %p395, %s24, 1
      %p397 = scmp.lt.s32.totalorder %s394, 15
      %s398 = scalar_select %p397, %s394, 15
      %s399 = smul.addr %s398, 2
      %s400 = smul.addr %s396, 32
      %s401 = sadd.s32 %s399, %s400
      %s402 = smul.addr %s401, 8
      %s403 = scalar_lea.vmem %s1, %s402
      %p404 = pneg %p91
      %p405 = pneg %p88
      %s406 = sadd.s32 %s25, 1
      %s407 = smul.u32 %s406, 8
      %p408 = scmp.lt.s32.totalorder %s407, 15
      %s409 = scalar_select %p408, %s407, 15
      %p410 = scmp.lt.s32.totalorder %s24, 1
      %s411 = scalar_select %p410, %s24, 1
      %p412 = scmp.lt.s32.totalorder %s409, 15
      %s413 = scalar_select %p412, %s409, 15
      %s414 = smul.addr %s413, 2
      %s415 = smul.addr %s411, 32
      %s416 = sadd.s32 %s414, %s415
      %s417 = smul.addr %s416, 8
      %s418 = scalar_lea.vmem %s2, %s417
      %p419 = pneg %p127
      %p420 = pneg %p124
      %p421 = pneg %p148
      %p422 = pneg %p145
      %p423 = pneg %p169
      %p424 = pneg %p166
      %p425 = pneg %p190
      %p426 = pneg %p187
      %p427 = pneg %p211
      %p428 = pneg %p208
      %p429 = pneg %p232
      %p430 = pneg %p229
      %p431 = pneg %p253
      %p432 = pneg %p250
      %p433 = pneg %p281
      %p434 = pneg %p278
      %s435 = smul.u32 8, %s25
      %p436 = scmp.lt.s32.totalorder %s24, 1
      %s437 = scalar_select %p436, %s24, 1
      %p438 = scmp.lt.s32.totalorder %s435, 15
      %s439 = scalar_select %p438, %s435, 15
      %s440 = smul.addr %s439, 2
      %s441 = smul.addr %s437, 32
      %s442 = sadd.s32 %s440, %s441
      %s443 = smul.addr %s442, 8
      %s444 = scalar_lea.vmem %s9, %s443
      %s445 = smul.u32 %s25, 8
      %s446 = ssub.s32 %s445, 1
      %p447 = scmp.gt.s32.totalorder %s446, 0
      %s448 = scalar_select %p447, %s446, 0
      %p449 = scmp.lt.s32.totalorder %s24, 1
      %s450 = scalar_select %p449, %s24, 1
      %p451 = scmp.lt.s32.totalorder %s448, 15
      %s452 = scalar_select %p451, %s448, 15
      %s453 = smul.addr %s452, 2
      %s454 = smul.addr %s450, 32
      %s455 = sadd.s32 %s453, %s454
      %s456 = smul.addr %s455, 8
      %s457 = scalar_lea.vmem %s0, %s456
      %s458 = smul.u32 %s25, 8
      %s459 = ssub.s32 %s458, 1
      %p460 = scmp.gt.s32.totalorder %s459, 0
      %s461 = scalar_select %p460, %s459, 0
      %s462 = smul.u32 8, %s25
      %p463 = scmp.lt.s32.totalorder %s24, 1
      %s464 = scalar_select %p463, %s24, 1
      %p465 = scmp.lt.s32.totalorder %s462, 15
      %s466 = scalar_select %p465, %s462, 15
      %s467 = smul.addr %s466, 2
      %s468 = smul.addr %s464, 32
      %s469 = sadd.s32 %s467, %s468
      %s470 = smul.addr %s469, 8
      %s471 = scalar_lea.vmem %s1, %s470
      %s472 = smul.u32 8, %s25
      %s473 = sadd.s32 %s25, 1
      %s474 = smul.u32 %s473, 8
      %p475 = scmp.lt.s32.totalorder %s474, 15
      %s476 = scalar_select %p475, %s474, 15
      %p477 = scmp.lt.s32.totalorder %s24, 1
      %s478 = scalar_select %p477, %s24, 1
      %p479 = scmp.lt.s32.totalorder %s476, 15
      %s480 = scalar_select %p479, %s476, 15
      %s481 = smul.addr %s480, 2
      %s482 = smul.addr %s478, 32
      %s483 = sadd.s32 %s481, %s482
      %s484 = smul.addr %s483, 8
      %s485 = scalar_lea.vmem %s2, %s484
      %s486 = sadd.s32 %s25, 1
      %s487 = smul.u32 %s486, 8
      %p488 = scmp.lt.s32.totalorder %s487, 15
      %s489 = scalar_select %p488, %s487, 15
      %s490 = smul.u32 8, %s25
      %p491 = scmp.lt.s32.totalorder %s24, 1
      %s492 = scalar_select %p491, %s24, 1
      %p493 = scmp.lt.s32.totalorder %s490, 15
      %s494 = scalar_select %p493, %s490, 15
      %s495 = smul.addr %s494, 2
      %s496 = smul.addr %s492, 32
      %s497 = sadd.s32 %s495, %s496
      %s498 = smul.addr %s497, 8
      %s499 = scalar_lea.vmem %s9, %s498
      %s500 = smul.u32 8, %s25
      %v501 = vld [vmem:[%s471] sm:$0xff]
      %v502 = vld [vmem:[%s471 + $0x8] sm:$0xff]
      %v503 = vld [vmem:[%s471 + $0x10] sm:$0xff]
      %v504 = vld [vmem:[%s471 + $0x18] sm:$0xff]
      %v505 = vld [vmem:[%s471 + $0x20] sm:$0xff]
      %v506 = vld [vmem:[%s471 + $0x28] sm:$0xff]
      %v507 = vld [vmem:[%s471 + $0x30] sm:$0xff]
      %v508 = vld [vmem:[%s471 + $0x38] sm:$0xff]
      %v509 = vld [vmem:[%s471 + $0x40] sm:$0xff]
      %v510 = vld [vmem:[%s471 + $0x48] sm:$0xff]
      %v511 = vld [vmem:[%s471 + $0x50] sm:$0xff]
      %v512 = vld [vmem:[%s471 + $0x58] sm:$0xff]
      %v513 = vld [vmem:[%s471 + $0x60] sm:$0xff]
      %v514 = vld [vmem:[%s471 + $0x68] sm:$0xff]
      %v515 = vld [vmem:[%s471 + $0x70] sm:$0xff]
      %v516 = vld [vmem:[%s471 + $0x78] sm:$0xff]
      %v517 = vld [vmem:[%s457] sm:$0xff]
      %v518 = vld [vmem:[%s457 + $0x8] sm:$0xff]
      %v519 = vld [vmem:[%s485] sm:$0xff]
      %v520 = vld [vmem:[%s485 + $0x8] sm:$0xff]
      %v521 = vld [vmem:[%s3] sm:$0xf]
      %v522 = vld [vmem:[%s4] sm:$0x1]
      %v524 = vlaneseq
      %v525 = vshrl.u32 %v524, 7
      %v526 = vsub.s32 0, %v525
      %v527 = vrot.slane %v522, %v526
      %v529 = vadd.f32 %v527, 0.0
      %531 = vset.pattern.permute.xlu0 0
      %532 = vperm.xlu0 %531, %v517
      %v533 = vpop.permute.xlu0 %532
      %536 = vset.pattern.permute.xlu0 0
      %537 = vperm.xlu0 %536, %v518
      %v538 = vpop.permute.xlu0 %537
      %541 = vset.pattern.permute.xlu0 0
      %542 = vperm.xlu0 %541, %v501
      %v543 = vpop.permute.xlu0 %542
      %546 = vset.pattern.permute.xlu0 0
      %547 = vperm.xlu0 %546, %v502
      %v548 = vpop.permute.xlu0 %547
      %551 = vset.pattern.permute.xlu0 0
      %552 = vperm.xlu0 %551, %v503
      %v553 = vpop.permute.xlu0 %552
      %556 = vset.pattern.permute.xlu0 0
      %557 = vperm.xlu0 %556, %v504
      %v558 = vpop.permute.xlu0 %557
      %561 = vset.pattern.permute.xlu0 0
      %562 = vperm.xlu0 %561, %v505
      %v563 = vpop.permute.xlu0 %562
      %566 = vset.pattern.permute.xlu0 0
      %567 = vperm.xlu0 %566, %v506
      %v568 = vpop.permute.xlu0 %567
      %571 = vset.pattern.permute.xlu0 0
      %572 = vperm.xlu0 %571, %v507
      %v573 = vpop.permute.xlu0 %572
      %576 = vset.pattern.permute.xlu0 0
      %577 = vperm.xlu0 %576, %v508
      %v578 = vpop.permute.xlu0 %577
      %581 = vset.pattern.permute.xlu0 0
      %582 = vperm.xlu0 %581, %v509
      %v583 = vpop.permute.xlu0 %582
      %586 = vset.pattern.permute.xlu0 0
      %587 = vperm.xlu0 %586, %v510
      %v588 = vpop.permute.xlu0 %587
      %591 = vset.pattern.permute.xlu0 0
      %592 = vperm.xlu0 %591, %v511
      %v593 = vpop.permute.xlu0 %592
      %596 = vset.pattern.permute.xlu0 0
      %597 = vperm.xlu0 %596, %v512
      %v598 = vpop.permute.xlu0 %597
      %601 = vset.pattern.permute.xlu0 0
      %602 = vperm.xlu0 %601, %v513
      %v603 = vpop.permute.xlu0 %602
      %606 = vset.pattern.permute.xlu0 0
      %607 = vperm.xlu0 %606, %v514
      %v608 = vpop.permute.xlu0 %607
      %611 = vset.pattern.permute.xlu0 0
      %612 = vperm.xlu0 %611, %v515
      %v613 = vpop.permute.xlu0 %612
      %616 = vset.pattern.permute.xlu0 0
      %617 = vperm.xlu0 %616, %v516
      %v618 = vpop.permute.xlu0 %617
      %621 = vset.pattern.permute.xlu0 0
      %622 = vperm.xlu0 %621, %v519
      %v623 = vpop.permute.xlu0 %622
      %626 = vset.pattern.permute.xlu0 0
      %627 = vperm.xlu0 %626, %v520
      %v628 = vpop.permute.xlu0 %627
      %v630 = vlaneseq
      %v631 = vshrl.u32 %v630, 7
      %v632 = vsub.s32 0, %v631
      %v633 = vrot.slane %v521, %v632
      %v634 = vmul.f32 %v533, %v633
      %v635 = vmul.f32 %v538, %v633
      %v636 = vmul.f32 %v543, %v633
      %v637 = vmul.f32 %v548, %v633
      %v638 = vmul.f32 %v553, %v633
      %v639 = vmul.f32 %v558, %v633
      %v640 = vmul.f32 %v563, %v633
      %v641 = vmul.f32 %v568, %v633
      %v642 = vmul.f32 %v573, %v633
      %v643 = vmul.f32 %v578, %v633
      %v644 = vmul.f32 %v583, %v633
      %v645 = vmul.f32 %v588, %v633
      %v646 = vmul.f32 %v593, %v633
      %v647 = vmul.f32 %v598, %v633
      %v648 = vmul.f32 %v603, %v633
      %v649 = vmul.f32 %v608, %v633
      %v650 = vmul.f32 %v613, %v633
      %v651 = vmul.f32 %v618, %v633
      %v652 = vmul.f32 %v623, %v633
      %v653 = vmul.f32 %v628, %v633
      %v654 = vadd.f32 %v529, %v634
      %v655 = vadd.f32 %v529, %v635
      %v656 = vadd.f32 %v529, %v636
      %v657 = vadd.f32 %v529, %v637
      %v658 = vadd.f32 %v529, %v638
      %v659 = vadd.f32 %v529, %v639
      %v660 = vadd.f32 %v529, %v640
      %v661 = vadd.f32 %v529, %v641
      %v662 = vadd.f32 %v529, %v642
      %v663 = vadd.f32 %v529, %v643
      %v664 = vadd.f32 %v529, %v644
      %v665 = vadd.f32 %v529, %v645
      %v666 = vadd.f32 %v529, %v646
      %v667 = vadd.f32 %v529, %v647
      %v668 = vadd.f32 %v529, %v648
      %v669 = vadd.f32 %v529, %v649
      %v670 = vadd.f32 %v529, %v650
      %v671 = vadd.f32 %v529, %v651
      %v672 = vadd.f32 %v529, %v652
      %v673 = vadd.f32 %v529, %v653
      %674 = vset.pattern.permute.xlu0 1
      %675 = vperm.xlu0 %674, %v517
      %v676 = vpop.permute.xlu0 %675
      %678 = vset.pattern.permute.xlu0 1
      %679 = vperm.xlu0 %678, %v518
      %v680 = vpop.permute.xlu0 %679
      %682 = vset.pattern.permute.xlu0 1
      %683 = vperm.xlu0 %682, %v501
      %v684 = vpop.permute.xlu0 %683
      %686 = vset.pattern.permute.xlu0 1
      %687 = vperm.xlu0 %686, %v502
      %v688 = vpop.permute.xlu0 %687
      %690 = vset.pattern.permute.xlu0 1
      %691 = vperm.xlu0 %690, %v503
      %v692 = vpop.permute.xlu0 %691
      %694 = vset.pattern.permute.xlu0 1
      %695 = vperm.xlu0 %694, %v504
      %v696 = vpop.permute.xlu0 %695
      %698 = vset.pattern.permute.xlu0 1
      %699 = vperm.xlu0 %698, %v505
      %v700 = vpop.permute.xlu0 %699
      %702 = vset.pattern.permute.xlu0 1
      %703 = vperm.xlu0 %702, %v506
      %v704 = vpop.permute.xlu0 %703
      %706 = vset.pattern.permute.xlu0 1
      %707 = vperm.xlu0 %706, %v507
      %v708 = vpop.permute.xlu0 %707
      %710 = vset.pattern.permute.xlu0 1
      %711 = vperm.xlu0 %710, %v508
      %v712 = vpop.permute.xlu0 %711
      %714 = vset.pattern.permute.xlu0 1
      %715 = vperm.xlu0 %714, %v509
      %v716 = vpop.permute.xlu0 %715
      %718 = vset.pattern.permute.xlu0 1
      %719 = vperm.xlu0 %718, %v510
      %v720 = vpop.permute.xlu0 %719
      %722 = vset.pattern.permute.xlu0 1
      %723 = vperm.xlu0 %722, %v511
      %v724 = vpop.permute.xlu0 %723
      %726 = vset.pattern.permute.xlu0 1
      %727 = vperm.xlu0 %726, %v512
      %v728 = vpop.permute.xlu0 %727
      %730 = vset.pattern.permute.xlu0 1
      %731 = vperm.xlu0 %730, %v513
      %v732 = vpop.permute.xlu0 %731
      %734 = vset.pattern.permute.xlu0 1
      %735 = vperm.xlu0 %734, %v514
      %v736 = vpop.permute.xlu0 %735
      %738 = vset.pattern.permute.xlu0 1
      %739 = vperm.xlu0 %738, %v515
      %v740 = vpop.permute.xlu0 %739
      %742 = vset.pattern.permute.xlu0 1
      %743 = vperm.xlu0 %742, %v516
      %v744 = vpop.permute.xlu0 %743
      %746 = vset.pattern.permute.xlu0 1
      %747 = vperm.xlu0 %746, %v519
      %v748 = vpop.permute.xlu0 %747
      %750 = vset.pattern.permute.xlu0 1
      %751 = vperm.xlu0 %750, %v520
      %v752 = vpop.permute.xlu0 %751
      %v754 = vlaneseq
      %v755 = vshrl.u32 %v754, 7
      %v756 = vsub.s32 1, %v755
      %v757 = vrot.slane %v521, %v756
      %v758 = vmul.f32 %v676, %v757
      %v759 = vmul.f32 %v680, %v757
      %v760 = vmul.f32 %v684, %v757
      %v761 = vmul.f32 %v688, %v757
      %v762 = vmul.f32 %v692, %v757
      %v763 = vmul.f32 %v696, %v757
      %v764 = vmul.f32 %v700, %v757
      %v765 = vmul.f32 %v704, %v757
      %v766 = vmul.f32 %v708, %v757
      %v767 = vmul.f32 %v712, %v757
      %v768 = vmul.f32 %v716, %v757
      %v769 = vmul.f32 %v720, %v757
      %v770 = vmul.f32 %v724, %v757
      %v771 = vmul.f32 %v728, %v757
      %v772 = vmul.f32 %v732, %v757
      %v773 = vmul.f32 %v736, %v757
      %v774 = vmul.f32 %v740, %v757
      %v775 = vmul.f32 %v744, %v757
      %v776 = vmul.f32 %v748, %v757
      %v777 = vmul.f32 %v752, %v757
      %v778 = vadd.f32 %v654, %v758
      %v779 = vadd.f32 %v655, %v759
      %v780 = vadd.f32 %v656, %v760
      %v781 = vadd.f32 %v657, %v761
      %v782 = vadd.f32 %v658, %v762
      %v783 = vadd.f32 %v659, %v763
      %v784 = vadd.f32 %v660, %v764
      %v785 = vadd.f32 %v661, %v765
      %v786 = vadd.f32 %v662, %v766
      %v787 = vadd.f32 %v663, %v767
      %v788 = vadd.f32 %v664, %v768
      %v789 = vadd.f32 %v665, %v769
      %v790 = vadd.f32 %v666, %v770
      %v791 = vadd.f32 %v667, %v771
      %v792 = vadd.f32 %v668, %v772
      %v793 = vadd.f32 %v669, %v773
      %v794 = vadd.f32 %v670, %v774
      %v795 = vadd.f32 %v671, %v775
      %v796 = vadd.f32 %v672, %v776
      %v797 = vadd.f32 %v673, %v777
      %798 = vset.pattern.permute.xlu0 2
      %799 = vperm.xlu0 %798, %v517
      %v800 = vpop.permute.xlu0 %799
      %802 = vset.pattern.permute.xlu0 2
      %803 = vperm.xlu0 %802, %v518
      %v804 = vpop.permute.xlu0 %803
      %806 = vset.pattern.permute.xlu0 2
      %807 = vperm.xlu0 %806, %v501
      %v808 = vpop.permute.xlu0 %807
      %810 = vset.pattern.permute.xlu0 2
      %811 = vperm.xlu0 %810, %v502
      %v812 = vpop.permute.xlu0 %811
      %814 = vset.pattern.permute.xlu0 2
      %815 = vperm.xlu0 %814, %v503
      %v816 = vpop.permute.xlu0 %815
      %818 = vset.pattern.permute.xlu0 2
      %819 = vperm.xlu0 %818, %v504
      %v820 = vpop.permute.xlu0 %819
      %822 = vset.pattern.permute.xlu0 2
      %823 = vperm.xlu0 %822, %v505
      %v824 = vpop.permute.xlu0 %823
      %826 = vset.pattern.permute.xlu0 2
      %827 = vperm.xlu0 %826, %v506
      %v828 = vpop.permute.xlu0 %827
      %830 = vset.pattern.permute.xlu0 2
      %831 = vperm.xlu0 %830, %v507
      %v832 = vpop.permute.xlu0 %831
      %834 = vset.pattern.permute.xlu0 2
      %835 = vperm.xlu0 %834, %v508
      %v836 = vpop.permute.xlu0 %835
      %838 = vset.pattern.permute.xlu0 2
      %839 = vperm.xlu0 %838, %v509
      %v840 = vpop.permute.xlu0 %839
      %842 = vset.pattern.permute.xlu0 2
      %843 = vperm.xlu0 %842, %v510
      %v844 = vpop.permute.xlu0 %843
      %846 = vset.pattern.permute.xlu0 2
      %847 = vperm.xlu0 %846, %v511
      %v848 = vpop.permute.xlu0 %847
      %850 = vset.pattern.permute.xlu0 2
      %851 = vperm.xlu0 %850, %v512
      %v852 = vpop.permute.xlu0 %851
      %854 = vset.pattern.permute.xlu0 2
      %855 = vperm.xlu0 %854, %v513
      %v856 = vpop.permute.xlu0 %855
      %858 = vset.pattern.permute.xlu0 2
      %859 = vperm.xlu0 %858, %v514
      %v860 = vpop.permute.xlu0 %859
      %862 = vset.pattern.permute.xlu0 2
      %863 = vperm.xlu0 %862, %v515
      %v864 = vpop.permute.xlu0 %863
      %866 = vset.pattern.permute.xlu0 2
      %867 = vperm.xlu0 %866, %v516
      %v868 = vpop.permute.xlu0 %867
      %870 = vset.pattern.permute.xlu0 2
      %871 = vperm.xlu0 %870, %v519
      %v872 = vpop.permute.xlu0 %871
      %874 = vset.pattern.permute.xlu0 2
      %875 = vperm.xlu0 %874, %v520
      %v876 = vpop.permute.xlu0 %875
      %v878 = vlaneseq
      %v879 = vshrl.u32 %v878, 7
      %v880 = vsub.s32 2, %v879
      %v881 = vrot.slane %v521, %v880
      %v882 = vmul.f32 %v800, %v881
      %v883 = vmul.f32 %v804, %v881
      %v884 = vmul.f32 %v808, %v881
      %v885 = vmul.f32 %v812, %v881
      %v886 = vmul.f32 %v816, %v881
      %v887 = vmul.f32 %v820, %v881
      %v888 = vmul.f32 %v824, %v881
      %v889 = vmul.f32 %v828, %v881
      %v890 = vmul.f32 %v832, %v881
      %v891 = vmul.f32 %v836, %v881
      %v892 = vmul.f32 %v840, %v881
      %v893 = vmul.f32 %v844, %v881
      %v894 = vmul.f32 %v848, %v881
      %v895 = vmul.f32 %v852, %v881
      %v896 = vmul.f32 %v856, %v881
      %v897 = vmul.f32 %v860, %v881
      %v898 = vmul.f32 %v864, %v881
      %v899 = vmul.f32 %v868, %v881
      %v900 = vmul.f32 %v872, %v881
      %v901 = vmul.f32 %v876, %v881
      %v902 = vadd.f32 %v778, %v882
      %v903 = vadd.f32 %v779, %v883
      %v904 = vadd.f32 %v780, %v884
      %v905 = vadd.f32 %v781, %v885
      %v906 = vadd.f32 %v782, %v886
      %v907 = vadd.f32 %v783, %v887
      %v908 = vadd.f32 %v784, %v888
      %v909 = vadd.f32 %v785, %v889
      %v910 = vadd.f32 %v786, %v890
      %v911 = vadd.f32 %v787, %v891
      %v912 = vadd.f32 %v788, %v892
      %v913 = vadd.f32 %v789, %v893
      %v914 = vadd.f32 %v790, %v894
      %v915 = vadd.f32 %v791, %v895
      %v916 = vadd.f32 %v792, %v896
      %v917 = vadd.f32 %v793, %v897
      %v918 = vadd.f32 %v794, %v898
      %v919 = vadd.f32 %v795, %v899
      %v920 = vadd.f32 %v796, %v900
      %v921 = vadd.f32 %v797, %v901
      %922 = vset.pattern.permute.xlu0 3
      %923 = vperm.xlu0 %922, %v517
      %v924 = vpop.permute.xlu0 %923
      %926 = vset.pattern.permute.xlu0 3
      %927 = vperm.xlu0 %926, %v518
      %v928 = vpop.permute.xlu0 %927
      %930 = vset.pattern.permute.xlu0 3
      %931 = vperm.xlu0 %930, %v501
      %v932 = vpop.permute.xlu0 %931
      %934 = vset.pattern.permute.xlu0 3
      %935 = vperm.xlu0 %934, %v502
      %v936 = vpop.permute.xlu0 %935
      %938 = vset.pattern.permute.xlu0 3
      %939 = vperm.xlu0 %938, %v503
      %v940 = vpop.permute.xlu0 %939
      %942 = vset.pattern.permute.xlu0 3
      %943 = vperm.xlu0 %942, %v504
      %v944 = vpop.permute.xlu0 %943
      %946 = vset.pattern.permute.xlu0 3
      %947 = vperm.xlu0 %946, %v505
      %v948 = vpop.permute.xlu0 %947
      %950 = vset.pattern.permute.xlu0 3
      %951 = vperm.xlu0 %950, %v506
      %v952 = vpop.permute.xlu0 %951
      %954 = vset.pattern.permute.xlu0 3
      %955 = vperm.xlu0 %954, %v507
      %v956 = vpop.permute.xlu0 %955
      %958 = vset.pattern.permute.xlu0 3
      %959 = vperm.xlu0 %958, %v508
      %v960 = vpop.permute.xlu0 %959
      %962 = vset.pattern.permute.xlu0 3
      %963 = vperm.xlu0 %962, %v509
      %v964 = vpop.permute.xlu0 %963
      %966 = vset.pattern.permute.xlu0 3
      %967 = vperm.xlu0 %966, %v510
      %v968 = vpop.permute.xlu0 %967
      %970 = vset.pattern.permute.xlu0 3
      %971 = vperm.xlu0 %970, %v511
      %v972 = vpop.permute.xlu0 %971
      %974 = vset.pattern.permute.xlu0 3
      %975 = vperm.xlu0 %974, %v512
      %v976 = vpop.permute.xlu0 %975
      %978 = vset.pattern.permute.xlu0 3
      %979 = vperm.xlu0 %978, %v513
      %v980 = vpop.permute.xlu0 %979
      %982 = vset.pattern.permute.xlu0 3
      %983 = vperm.xlu0 %982, %v514
      %v984 = vpop.permute.xlu0 %983
      %986 = vset.pattern.permute.xlu0 3
      %987 = vperm.xlu0 %986, %v515
      %v988 = vpop.permute.xlu0 %987
      %990 = vset.pattern.permute.xlu0 3
      %991 = vperm.xlu0 %990, %v516
      %v992 = vpop.permute.xlu0 %991
      %994 = vset.pattern.permute.xlu0 3
      %995 = vperm.xlu0 %994, %v519
      %v996 = vpop.permute.xlu0 %995
      %998 = vset.pattern.permute.xlu0 3
      %999 = vperm.xlu0 %998, %v520
      %v1000 = vpop.permute.xlu0 %999
      %v1002 = vlaneseq
      %v1003 = vshrl.u32 %v1002, 7
      %v1004 = vsub.s32 3, %v1003
      %v1005 = vrot.slane %v521, %v1004
      %v1006 = vmul.f32 %v924, %v1005
      %v1007 = vmul.f32 %v928, %v1005
      %v1008 = vmul.f32 %v932, %v1005
      %v1009 = vmul.f32 %v936, %v1005
      %v1010 = vmul.f32 %v940, %v1005
      %v1011 = vmul.f32 %v944, %v1005
      %v1012 = vmul.f32 %v948, %v1005
      %v1013 = vmul.f32 %v952, %v1005
      %v1014 = vmul.f32 %v956, %v1005
      %v1015 = vmul.f32 %v960, %v1005
      %v1016 = vmul.f32 %v964, %v1005
      %v1017 = vmul.f32 %v968, %v1005
      %v1018 = vmul.f32 %v972, %v1005
      %v1019 = vmul.f32 %v976, %v1005
      %v1020 = vmul.f32 %v980, %v1005
      %v1021 = vmul.f32 %v984, %v1005
      %v1022 = vmul.f32 %v988, %v1005
      %v1023 = vmul.f32 %v992, %v1005
      %v1024 = vmul.f32 %v996, %v1005
      %v1025 = vmul.f32 %v1000, %v1005
      %v1026 = vadd.f32 %v902, %v1006
      %v1027 = vadd.f32 %v903, %v1007
      %v1028 = vadd.f32 %v904, %v1008
      %v1029 = vadd.f32 %v905, %v1009
      %v1030 = vadd.f32 %v906, %v1010
      %v1031 = vadd.f32 %v907, %v1011
      %v1032 = vadd.f32 %v908, %v1012
      %v1033 = vadd.f32 %v909, %v1013
      %v1034 = vadd.f32 %v910, %v1014
      %v1035 = vadd.f32 %v911, %v1015
      %v1036 = vadd.f32 %v912, %v1016
      %v1037 = vadd.f32 %v913, %v1017
      %v1038 = vadd.f32 %v914, %v1018
      %v1039 = vadd.f32 %v915, %v1019
      %v1040 = vadd.f32 %v916, %v1020
      %v1041 = vadd.f32 %v917, %v1021
      %v1042 = vadd.f32 %v918, %v1022
      %v1043 = vadd.f32 %v919, %v1023
      %v1044 = vadd.f32 %v920, %v1024
      %v1045 = vadd.f32 %v921, %v1025
      %v1046 = vmax.f32 %v1026, 0.0
      %v1047 = vmax.f32 %v1027, 0.0
      %v1048 = vmax.f32 %v1028, 0.0
      %v1049 = vmax.f32 %v1029, 0.0
      %v1050 = vmax.f32 %v1030, 0.0
      %v1051 = vmax.f32 %v1031, 0.0
      %v1052 = vmax.f32 %v1032, 0.0
      %v1053 = vmax.f32 %v1033, 0.0
      %v1054 = vmax.f32 %v1034, 0.0
      %v1055 = vmax.f32 %v1035, 0.0
      %v1056 = vmax.f32 %v1036, 0.0
      %v1057 = vmax.f32 %v1037, 0.0
      %v1058 = vmax.f32 %v1038, 0.0
      %v1059 = vmax.f32 %v1039, 0.0
      %v1060 = vmax.f32 %v1040, 0.0
      %v1061 = vmax.f32 %v1041, 0.0
      %v1062 = vmax.f32 %v1042, 0.0
      %v1063 = vmax.f32 %v1043, 0.0
      %v1064 = vmax.f32 %v1044, 0.0
      %v1065 = vmax.f32 %v1045, 0.0
      %s1066 = scalar_lea.vmem [#allocation2], 24
      %vm1067 = vcmask 195584
      %1068 = vst.msk [vmem:[%s1066 + $0x1] sm:$0xff] %vm1067, %v1048
      %1069 = vst.msk [vmem:[%s1066 + $0x9] sm:$0xff] %vm1067, %v1049
      %1070 = vst.msk [vmem:[%s1066 + $0x19] sm:$0xff] %vm1067, %v1050
      %1071 = vst.msk [vmem:[%s1066 + $0x21] sm:$0xff] %vm1067, %v1051
      %1072 = vst.msk [vmem:[%s1066 + $0x31] sm:$0xff] %vm1067, %v1052
      %1073 = vst.msk [vmem:[%s1066 + $0x39] sm:$0xff] %vm1067, %v1053
      %1074 = vst.msk [vmem:[%s1066 + $0x49] sm:$0xff] %vm1067, %v1054
      %1075 = vst.msk [vmem:[%s1066 + $0x51] sm:$0xff] %vm1067, %v1055
      %1076 = vst.msk [vmem:[%s1066 + $0x61] sm:$0xff] %vm1067, %v1056
      %1077 = vst.msk [vmem:[%s1066 + $0x69] sm:$0xff] %vm1067, %v1057
      %1078 = vst.msk [vmem:[%s1066 + $0x79] sm:$0xff] %vm1067, %v1058
      %1079 = vst.msk [vmem:[%s1066 + $0x81] sm:$0xff] %vm1067, %v1059
      %1080 = vst.msk [vmem:[%s1066 + $0x91] sm:$0xff] %vm1067, %v1060
      %1081 = vst.msk [vmem:[%s1066 + $0x99] sm:$0xff] %vm1067, %v1061
      %1082 = vst.msk [vmem:[%s1066 + $0xa9] sm:$0xff] %vm1067, %v1062
      %1083 = vst.msk [vmem:[%s1066 + $0xb1] sm:$0xff] %vm1067, %v1063
      %p1084 = scmp.gt.s32.totalorder %s25, 0
      %s1085 = scalar_select %p1084, 1, 0
      %v1086 = vstv %s1085
      %vm1087 = vcmp.eq.s32.totalorder %v1086, 1
      %v1088 = vsel %vm1087, %v1046, 0.0
      %v1089 = vsel %vm1087, %v1047, 0.0
      %1090 = vst.msk [vmem:[#allocation2 + $0x1] sm:$0xff] %vm1067, %v1088
      %1091 = vst.msk [vmem:[#allocation2 + $0x9] sm:$0xff] %vm1067, %v1089
      %p1092 = scmp.lt.s32.totalorder %s25, 1
      %s1093 = scalar_select %p1092, 1, 0
      %v1094 = vstv %s1093
      %vm1095 = vcmp.eq.s32.totalorder %v1094, 1
      %v1096 = vsel %vm1095, %v1064, 0.0
      %v1097 = vsel %vm1095, %v1065, 0.0
      %s1098 = scalar_lea.vmem [#allocation2], 216
      %1099 = vst.msk [vmem:[%s1098 + $0x1] sm:$0xff] %vm1067, %v1096
      %1100 = vst.msk [vmem:[%s1098 + $0x9] sm:$0xff] %vm1067, %v1097
      %vm1101 = vcmask 188416
      %1102 = vst.msk [vmem:[#allocation2] sm:$0x1] %vm1101, 0.0
      %1103 = vst.msk [vmem:[#allocation2 + $0x18] sm:$0x1] %vm1101, 0.0
      %1104 = vst.msk [vmem:[#allocation2 + $0x30] sm:$0x1] %vm1101, 0.0
      %1105 = vst.msk [vmem:[#allocation2 + $0x48] sm:$0x1] %vm1101, 0.0
      %1106 = vst.msk [vmem:[#allocation2 + $0x60] sm:$0x1] %vm1101, 0.0
      %1107 = vst.msk [vmem:[#allocation2 + $0x78] sm:$0x1] %vm1101, 0.0
      %1108 = vst.msk [vmem:[#allocation2 + $0x90] sm:$0x1] %vm1101, 0.0
      %1109 = vst.msk [vmem:[#allocation2 + $0xa8] sm:$0x1] %vm1101, 0.0
      %1110 = vst.msk [vmem:[#allocation2 + $0xc0] sm:$0x1] %vm1101, 0.0
      %1111 = vst.msk [vmem:[#allocation2 + $0xd8] sm:$0x1] %vm1101, 0.0
      %1112 = vst.msk [vmem:[#allocation2 + $0x11] sm:$0x1] %vm1101, 0.0
      %1113 = vst.msk [vmem:[#allocation2 + $0x29] sm:$0x1] %vm1101, 0.0
      %1114 = vst.msk [vmem:[#allocation2 + $0x41] sm:$0x1] %vm1101, 0.0
      %1115 = vst.msk [vmem:[#allocation2 + $0x59] sm:$0x1] %vm1101, 0.0
      %1116 = vst.msk [vmem:[#allocation2 + $0x71] sm:$0x1] %vm1101, 0.0
      %1117 = vst.msk [vmem:[#allocation2 + $0x89] sm:$0x1] %vm1101, 0.0
      %1118 = vst.msk [vmem:[#allocation2 + $0xa1] sm:$0x1] %vm1101, 0.0
      %1119 = vst.msk [vmem:[#allocation2 + $0xb9] sm:$0x1] %vm1101, 0.0
      %1120 = vst.msk [vmem:[#allocation2 + $0xd1] sm:$0x1] %vm1101, 0.0
      %1121 = vst.msk [vmem:[#allocation2 + $0xe9] sm:$0x1] %vm1101, 0.0
      %v1122 = vld [vmem:[%s5] sm:$0x7]
      %v1123 = vld [vmem:[%s5 + $0x4] sm:$0x7]
      %v1124 = vld [vmem:[%s5 + $0x8] sm:$0x7]
      %v1125 = vld [vmem:[#allocation2] sm:$0xff]
      %v1126 = vld [vmem:[#allocation2 + $0x8] sm:$0xff]
      %v1127 = vld [vmem:[#allocation2 + $0x18] sm:$0xff]
      %v1128 = vld [vmem:[#allocation2 + $0x20] sm:$0xff]
      %v1129 = vld [vmem:[#allocation2 + $0x30] sm:$0xff]
      %v1130 = vld [vmem:[#allocation2 + $0x38] sm:$0xff]
      %v1131 = vld [vmem:[#allocation2 + $0x48] sm:$0xff]
      %v1132 = vld [vmem:[#allocation2 + $0x50] sm:$0xff]
      %v1133 = vld [vmem:[#allocation2 + $0x60] sm:$0xff]
      %v1134 = vld [vmem:[#allocation2 + $0x68] sm:$0xff]
      %v1135 = vld [vmem:[#allocation2 + $0x78] sm:$0xff]
      %v1136 = vld [vmem:[#allocation2 + $0x80] sm:$0xff]
      %v1137 = vld [vmem:[#allocation2 + $0x90] sm:$0xff]
      %v1138 = vld [vmem:[#allocation2 + $0x98] sm:$0xff]
      %v1139 = vld [vmem:[#allocation2 + $0xa8] sm:$0xff]
      %v1140 = vld [vmem:[#allocation2 + $0xb0] sm:$0xff]
      %v1141 = vld [vmem:[#allocation2 + $0xc0] sm:$0xff]
      %v1142 = vld [vmem:[#allocation2 + $0xc8] sm:$0xff]
      %v1143 = vld [vmem:[#allocation2 + $0xd8] sm:$0xff]
      %v1144 = vld [vmem:[#allocation2 + $0xe0] sm:$0xff]
      %v1145 = vlaneseq
      %v1146 = vshrl.u32 %v1145, 7
      %v1147 = vsub.s32 0, %v1146
      %v1148 = vrot.slane %v1122, %v1147
      %v1149 = vmul.f32 %v1125, %v1148
      %v1150 = vmul.f32 %v1126, %v1148
      %v1151 = vmul.f32 %v1127, %v1148
      %v1152 = vmul.f32 %v1128, %v1148
      %v1153 = vmul.f32 %v1129, %v1148
      %v1154 = vmul.f32 %v1130, %v1148
      %v1155 = vmul.f32 %v1131, %v1148
      %v1156 = vmul.f32 %v1132, %v1148
      %v1157 = vmul.f32 %v1133, %v1148
      %v1158 = vmul.f32 %v1134, %v1148
      %v1159 = vmul.f32 %v1135, %v1148
      %v1160 = vmul.f32 %v1136, %v1148
      %v1161 = vmul.f32 %v1137, %v1148
      %v1162 = vmul.f32 %v1138, %v1148
      %v1163 = vmul.f32 %v1139, %v1148
      %v1164 = vmul.f32 %v1140, %v1148
      %v1165 = vadd.f32 %v1149, 0.0
      %v1166 = vadd.f32 %v1150, 0.0
      %v1167 = vadd.f32 %v1151, 0.0
      %v1168 = vadd.f32 %v1152, 0.0
      %v1169 = vadd.f32 %v1153, 0.0
      %v1170 = vadd.f32 %v1154, 0.0
      %v1171 = vadd.f32 %v1155, 0.0
      %v1172 = vadd.f32 %v1156, 0.0
      %v1173 = vadd.f32 %v1157, 0.0
      %v1174 = vadd.f32 %v1158, 0.0
      %v1175 = vadd.f32 %v1159, 0.0
      %v1176 = vadd.f32 %v1160, 0.0
      %v1177 = vadd.f32 %v1161, 0.0
      %v1178 = vadd.f32 %v1162, 0.0
      %v1179 = vadd.f32 %v1163, 0.0
      %v1180 = vadd.f32 %v1164, 0.0
      %v1181 = vlaneseq
      %v1182 = vshrl.u32 %v1181, 7
      %v1183 = vsub.s32 0, %v1182
      %v1184 = vrot.slane %v1123, %v1183
      %v1185 = vmul.f32 %v1127, %v1184
      %v1186 = vmul.f32 %v1128, %v1184
      %v1187 = vmul.f32 %v1129, %v1184
      %v1188 = vmul.f32 %v1130, %v1184
      %v1189 = vmul.f32 %v1131, %v1184
      %v1190 = vmul.f32 %v1132, %v1184
      %v1191 = vmul.f32 %v1133, %v1184
      %v1192 = vmul.f32 %v1134, %v1184
      %v1193 = vmul.f32 %v1135, %v1184
      %v1194 = vmul.f32 %v1136, %v1184
      %v1195 = vmul.f32 %v1137, %v1184
      %v1196 = vmul.f32 %v1138, %v1184
      %v1197 = vmul.f32 %v1139, %v1184
      %v1198 = vmul.f32 %v1140, %v1184
      %v1199 = vmul.f32 %v1141, %v1184
      %v1200 = vmul.f32 %v1142, %v1184
      %v1201 = vadd.f32 %v1185, 0.0
      %v1202 = vadd.f32 %v1186, 0.0
      %v1203 = vadd.f32 %v1187, 0.0
      %v1204 = vadd.f32 %v1188, 0.0
      %v1205 = vadd.f32 %v1189, 0.0
      %v1206 = vadd.f32 %v1190, 0.0
      %v1207 = vadd.f32 %v1191, 0.0
      %v1208 = vadd.f32 %v1192, 0.0
      %v1209 = vadd.f32 %v1193, 0.0
      %v1210 = vadd.f32 %v1194, 0.0
      %v1211 = vadd.f32 %v1195, 0.0
      %v1212 = vadd.f32 %v1196, 0.0
      %v1213 = vadd.f32 %v1197, 0.0
      %v1214 = vadd.f32 %v1198, 0.0
      %v1215 = vadd.f32 %v1199, 0.0
      %v1216 = vadd.f32 %v1200, 0.0
      %v1217 = vlaneseq
      %v1218 = vshrl.u32 %v1217, 7
      %v1219 = vsub.s32 0, %v1218
      %v1220 = vrot.slane %v1124, %v1219
      %v1221 = vmul.f32 %v1129, %v1220
      %v1222 = vmul.f32 %v1130, %v1220
      %v1223 = vmul.f32 %v1131, %v1220
      %v1224 = vmul.f32 %v1132, %v1220
      %v1225 = vmul.f32 %v1133, %v1220
      %v1226 = vmul.f32 %v1134, %v1220
      %v1227 = vmul.f32 %v1135, %v1220
      %v1228 = vmul.f32 %v1136, %v1220
      %v1229 = vmul.f32 %v1137, %v1220
      %v1230 = vmul.f32 %v1138, %v1220
      %v1231 = vmul.f32 %v1139, %v1220
      %v1232 = vmul.f32 %v1140, %v1220
      %v1233 = vmul.f32 %v1141, %v1220
      %v1234 = vmul.f32 %v1142, %v1220
      %v1235 = vmul.f32 %v1143, %v1220
      %v1236 = vmul.f32 %v1144, %v1220
      %v1237 = vadd.f32 %v1165, %v1221
      %v1238 = vadd.f32 %v1166, %v1222
      %v1239 = vadd.f32 %v1167, %v1223
      %v1240 = vadd.f32 %v1168, %v1224
      %v1241 = vadd.f32 %v1169, %v1225
      %v1242 = vadd.f32 %v1170, %v1226
      %v1243 = vadd.f32 %v1171, %v1227
      %v1244 = vadd.f32 %v1172, %v1228
      %v1245 = vadd.f32 %v1173, %v1229
      %v1246 = vadd.f32 %v1174, %v1230
      %v1247 = vadd.f32 %v1175, %v1231
      %v1248 = vadd.f32 %v1176, %v1232
      %v1249 = vadd.f32 %v1177, %v1233
      %v1250 = vadd.f32 %v1178, %v1234
      %v1251 = vadd.f32 %v1179, %v1235
      %v1252 = vadd.f32 %v1180, %v1236
      %v1253 = vld [vmem:[#allocation2 + $0x1] sm:$0xff]
      %v1254 = vld [vmem:[#allocation2 + $0x9] sm:$0xff]
      %v1255 = vld [vmem:[#allocation2 + $0x19] sm:$0xff]
      %v1256 = vld [vmem:[#allocation2 + $0x21] sm:$0xff]
      %v1257 = vld [vmem:[#allocation2 + $0x31] sm:$0xff]
      %v1258 = vld [vmem:[#allocation2 + $0x39] sm:$0xff]
      %v1259 = vld [vmem:[#allocation2 + $0x49] sm:$0xff]
      %v1260 = vld [vmem:[#allocation2 + $0x51] sm:$0xff]
      %v1261 = vld [vmem:[#allocation2 + $0x61] sm:$0xff]
      %v1262 = vld [vmem:[#allocation2 + $0x69] sm:$0xff]
      %v1263 = vld [vmem:[#allocation2 + $0x79] sm:$0xff]
      %v1264 = vld [vmem:[#allocation2 + $0x81] sm:$0xff]
      %v1265 = vld [vmem:[#allocation2 + $0x91] sm:$0xff]
      %v1266 = vld [vmem:[#allocation2 + $0x99] sm:$0xff]
      %v1267 = vld [vmem:[#allocation2 + $0xa9] sm:$0xff]
      %v1268 = vld [vmem:[#allocation2 + $0xb1] sm:$0xff]
      %v1269 = vld [vmem:[#allocation2 + $0xc1] sm:$0xff]
      %v1270 = vld [vmem:[#allocation2 + $0xc9] sm:$0xff]
      %v1271 = vld [vmem:[#allocation2 + $0xd9] sm:$0xff]
      %v1272 = vld [vmem:[#allocation2 + $0xe1] sm:$0xff]
      %v1273 = vlaneseq
      %v1274 = vshrl.u32 %v1273, 7
      %v1275 = vsub.s32 1, %v1274
      %v1276 = vrot.slane %v1122, %v1275
      %v1277 = vmul.f32 %v1253, %v1276
      %v1278 = vmul.f32 %v1254, %v1276
      %v1279 = vmul.f32 %v1255, %v1276
      %v1280 = vmul.f32 %v1256, %v1276
      %v1281 = vmul.f32 %v1257, %v1276
      %v1282 = vmul.f32 %v1258, %v1276
      %v1283 = vmul.f32 %v1259, %v1276
      %v1284 = vmul.f32 %v1260, %v1276
      %v1285 = vmul.f32 %v1261, %v1276
      %v1286 = vmul.f32 %v1262, %v1276
      %v1287 = vmul.f32 %v1263, %v1276
      %v1288 = vmul.f32 %v1264, %v1276
      %v1289 = vmul.f32 %v1265, %v1276
      %v1290 = vmul.f32 %v1266, %v1276
      %v1291 = vmul.f32 %v1267, %v1276
      %v1292 = vmul.f32 %v1268, %v1276
      %v1293 = vadd.f32 %v1201, %v1277
      %v1294 = vadd.f32 %v1202, %v1278
      %v1295 = vadd.f32 %v1203, %v1279
      %v1296 = vadd.f32 %v1204, %v1280
      %v1297 = vadd.f32 %v1205, %v1281
      %v1298 = vadd.f32 %v1206, %v1282
      %v1299 = vadd.f32 %v1207, %v1283
      %v1300 = vadd.f32 %v1208, %v1284
      %v1301 = vadd.f32 %v1209, %v1285
      %v1302 = vadd.f32 %v1210, %v1286
      %v1303 = vadd.f32 %v1211, %v1287
      %v1304 = vadd.f32 %v1212, %v1288
      %v1305 = vadd.f32 %v1213, %v1289
      %v1306 = vadd.f32 %v1214, %v1290
      %v1307 = vadd.f32 %v1215, %v1291
      %v1308 = vadd.f32 %v1216, %v1292
      %v1309 = vlaneseq
      %v1310 = vshrl.u32 %v1309, 7
      %v1311 = vsub.s32 1, %v1310
      %v1312 = vrot.slane %v1123, %v1311
      %v1313 = vmul.f32 %v1255, %v1312
      %v1314 = vmul.f32 %v1256, %v1312
      %v1315 = vmul.f32 %v1257, %v1312
      %v1316 = vmul.f32 %v1258, %v1312
      %v1317 = vmul.f32 %v1259, %v1312
      %v1318 = vmul.f32 %v1260, %v1312
      %v1319 = vmul.f32 %v1261, %v1312
      %v1320 = vmul.f32 %v1262, %v1312
      %v1321 = vmul.f32 %v1263, %v1312
      %v1322 = vmul.f32 %v1264, %v1312
      %v1323 = vmul.f32 %v1265, %v1312
      %v1324 = vmul.f32 %v1266, %v1312
      %v1325 = vmul.f32 %v1267, %v1312
      %v1326 = vmul.f32 %v1268, %v1312
      %v1327 = vmul.f32 %v1269, %v1312
      %v1328 = vmul.f32 %v1270, %v1312
      %v1329 = vadd.f32 %v1237, %v1313
      %v1330 = vadd.f32 %v1238, %v1314
      %v1331 = vadd.f32 %v1239, %v1315
      %v1332 = vadd.f32 %v1240, %v1316
      %v1333 = vadd.f32 %v1241, %v1317
      %v1334 = vadd.f32 %v1242, %v1318
      %v1335 = vadd.f32 %v1243, %v1319
      %v1336 = vadd.f32 %v1244, %v1320
      %v1337 = vadd.f32 %v1245, %v1321
      %v1338 = vadd.f32 %v1246, %v1322
      %v1339 = vadd.f32 %v1247, %v1323
      %v1340 = vadd.f32 %v1248, %v1324
      %v1341 = vadd.f32 %v1249, %v1325
      %v1342 = vadd.f32 %v1250, %v1326
      %v1343 = vadd.f32 %v1251, %v1327
      %v1344 = vadd.f32 %v1252, %v1328
      %v1345 = vlaneseq
      %v1346 = vshrl.u32 %v1345, 7
      %v1347 = vsub.s32 1, %v1346
      %v1348 = vrot.slane %v1124, %v1347
      %v1349 = vmul.f32 %v1257, %v1348
      %v1350 = vmul.f32 %v1258, %v1348
      %v1351 = vmul.f32 %v1259, %v1348
      %v1352 = vmul.f32 %v1260, %v1348
      %v1353 = vmul.f32 %v1261, %v1348
      %v1354 = vmul.f32 %v1262, %v1348
      %v1355 = vmul.f32 %v1263, %v1348
      %v1356 = vmul.f32 %v1264, %v1348
      %v1357 = vmul.f32 %v1265, %v1348
      %v1358 = vmul.f32 %v1266, %v1348
      %v1359 = vmul.f32 %v1267, %v1348
      %v1360 = vmul.f32 %v1268, %v1348
      %v1361 = vmul.f32 %v1269, %v1348
      %v1362 = vmul.f32 %v1270, %v1348
      %v1363 = vmul.f32 %v1271, %v1348
      %v1364 = vmul.f32 %v1272, %v1348
      %v1365 = vadd.f32 %v1293, %v1349
      %v1366 = vadd.f32 %v1294, %v1350
      %v1367 = vadd.f32 %v1295, %v1351
      %v1368 = vadd.f32 %v1296, %v1352
      %v1369 = vadd.f32 %v1297, %v1353
      %v1370 = vadd.f32 %v1298, %v1354
      %v1371 = vadd.f32 %v1299, %v1355
      %v1372 = vadd.f32 %v1300, %v1356
      %v1373 = vadd.f32 %v1301, %v1357
      %v1374 = vadd.f32 %v1302, %v1358
      %v1375 = vadd.f32 %v1303, %v1359
      %v1376 = vadd.f32 %v1304, %v1360
      %v1377 = vadd.f32 %v1305, %v1361
      %v1378 = vadd.f32 %v1306, %v1362
      %v1379 = vadd.f32 %v1307, %v1363
      %v1380 = vadd.f32 %v1308, %v1364
      %v1381 = vld [vmem:[#allocation2 + $0x2] sm:$0xff]
      %v1382 = vld [vmem:[#allocation2 + $0xa] sm:$0xff]
      %v1383 = vld [vmem:[#allocation2 + $0x1a] sm:$0xff]
      %v1384 = vld [vmem:[#allocation2 + $0x22] sm:$0xff]
      %v1385 = vld [vmem:[#allocation2 + $0x32] sm:$0xff]
      %v1386 = vld [vmem:[#allocation2 + $0x3a] sm:$0xff]
      %v1387 = vld [vmem:[#allocation2 + $0x4a] sm:$0xff]
      %v1388 = vld [vmem:[#allocation2 + $0x52] sm:$0xff]
      %v1389 = vld [vmem:[#allocation2 + $0x62] sm:$0xff]
      %v1390 = vld [vmem:[#allocation2 + $0x6a] sm:$0xff]
      %v1391 = vld [vmem:[#allocation2 + $0x7a] sm:$0xff]
      %v1392 = vld [vmem:[#allocation2 + $0x82] sm:$0xff]
      %v1393 = vld [vmem:[#allocation2 + $0x92] sm:$0xff]
      %v1394 = vld [vmem:[#allocation2 + $0x9a] sm:$0xff]
      %v1395 = vld [vmem:[#allocation2 + $0xaa] sm:$0xff]
      %v1396 = vld [vmem:[#allocation2 + $0xb2] sm:$0xff]
      %v1397 = vld [vmem:[#allocation2 + $0xc2] sm:$0xff]
      %v1398 = vld [vmem:[#allocation2 + $0xca] sm:$0xff]
      %v1399 = vld [vmem:[#allocation2 + $0xda] sm:$0xff]
      %v1400 = vld [vmem:[#allocation2 + $0xe2] sm:$0xff]
      %v1401 = vlaneseq
      %v1402 = vshrl.u32 %v1401, 7
      %v1403 = vsub.s32 2, %v1402
      %v1404 = vrot.slane %v1122, %v1403
      %v1405 = vmul.f32 %v1381, %v1404
      %v1406 = vmul.f32 %v1382, %v1404
      %v1407 = vmul.f32 %v1383, %v1404
      %v1408 = vmul.f32 %v1384, %v1404
      %v1409 = vmul.f32 %v1385, %v1404
      %v1410 = vmul.f32 %v1386, %v1404
      %v1411 = vmul.f32 %v1387, %v1404
      %v1412 = vmul.f32 %v1388, %v1404
      %v1413 = vmul.f32 %v1389, %v1404
      %v1414 = vmul.f32 %v1390, %v1404
      %v1415 = vmul.f32 %v1391, %v1404
      %v1416 = vmul.f32 %v1392, %v1404
      %v1417 = vmul.f32 %v1393, %v1404
      %v1418 = vmul.f32 %v1394, %v1404
      %v1419 = vmul.f32 %v1395, %v1404
      %v1420 = vmul.f32 %v1396, %v1404
      %v1421 = vadd.f32 %v1329, %v1405
      %v1422 = vadd.f32 %v1330, %v1406
      %v1423 = vadd.f32 %v1331, %v1407
      %v1424 = vadd.f32 %v1332, %v1408
      %v1425 = vadd.f32 %v1333, %v1409
      %v1426 = vadd.f32 %v1334, %v1410
      %v1427 = vadd.f32 %v1335, %v1411
      %v1428 = vadd.f32 %v1336, %v1412
      %v1429 = vadd.f32 %v1337, %v1413
      %v1430 = vadd.f32 %v1338, %v1414
      %v1431 = vadd.f32 %v1339, %v1415
      %v1432 = vadd.f32 %v1340, %v1416
      %v1433 = vadd.f32 %v1341, %v1417
      %v1434 = vadd.f32 %v1342, %v1418
      %v1435 = vadd.f32 %v1343, %v1419
      %v1436 = vadd.f32 %v1344, %v1420
      %v1437 = vlaneseq
      %v1438 = vshrl.u32 %v1437, 7
      %v1439 = vsub.s32 2, %v1438
      %v1440 = vrot.slane %v1123, %v1439
      %v1441 = vmul.f32 %v1383, %v1440
      %v1442 = vmul.f32 %v1384, %v1440
      %v1443 = vmul.f32 %v1385, %v1440
      %v1444 = vmul.f32 %v1386, %v1440
      %v1445 = vmul.f32 %v1387, %v1440
      %v1446 = vmul.f32 %v1388, %v1440
      %v1447 = vmul.f32 %v1389, %v1440
      %v1448 = vmul.f32 %v1390, %v1440
      %v1449 = vmul.f32 %v1391, %v1440
      %v1450 = vmul.f32 %v1392, %v1440
      %v1451 = vmul.f32 %v1393, %v1440
      %v1452 = vmul.f32 %v1394, %v1440
      %v1453 = vmul.f32 %v1395, %v1440
      %v1454 = vmul.f32 %v1396, %v1440
      %v1455 = vmul.f32 %v1397, %v1440
      %v1456 = vmul.f32 %v1398, %v1440
      %v1457 = vadd.f32 %v1365, %v1441
      %v1458 = vadd.f32 %v1366, %v1442
      %v1459 = vadd.f32 %v1367, %v1443
      %v1460 = vadd.f32 %v1368, %v1444
      %v1461 = vadd.f32 %v1369, %v1445
      %v1462 = vadd.f32 %v1370, %v1446
      %v1463 = vadd.f32 %v1371, %v1447
      %v1464 = vadd.f32 %v1372, %v1448
      %v1465 = vadd.f32 %v1373, %v1449
      %v1466 = vadd.f32 %v1374, %v1450
      %v1467 = vadd.f32 %v1375, %v1451
      %v1468 = vadd.f32 %v1376, %v1452
      %v1469 = vadd.f32 %v1377, %v1453
      %v1470 = vadd.f32 %v1378, %v1454
      %v1471 = vadd.f32 %v1379, %v1455
      %v1472 = vadd.f32 %v1380, %v1456
      %v1473 = vlaneseq
      %v1474 = vshrl.u32 %v1473, 7
      %v1475 = vsub.s32 2, %v1474
      %v1476 = vrot.slane %v1124, %v1475
      %v1477 = vmul.f32 %v1385, %v1476
      %v1478 = vmul.f32 %v1386, %v1476
      %v1479 = vmul.f32 %v1387, %v1476
      %v1480 = vmul.f32 %v1388, %v1476
      %v1481 = vmul.f32 %v1389, %v1476
      %v1482 = vmul.f32 %v1390, %v1476
      %v1483 = vmul.f32 %v1391, %v1476
      %v1484 = vmul.f32 %v1392, %v1476
      %v1485 = vmul.f32 %v1393, %v1476
      %v1486 = vmul.f32 %v1394, %v1476
      %v1487 = vmul.f32 %v1395, %v1476
      %v1488 = vmul.f32 %v1396, %v1476
      %v1489 = vmul.f32 %v1397, %v1476
      %v1490 = vmul.f32 %v1398, %v1476
      %v1491 = vmul.f32 %v1399, %v1476
      %v1492 = vmul.f32 %v1400, %v1476
      %v1493 = vadd.f32 %v1421, %v1477
      %v1494 = vadd.f32 %v1422, %v1478
      %v1495 = vadd.f32 %v1423, %v1479
      %v1496 = vadd.f32 %v1424, %v1480
      %v1497 = vadd.f32 %v1425, %v1481
      %v1498 = vadd.f32 %v1426, %v1482
      %v1499 = vadd.f32 %v1427, %v1483
      %v1500 = vadd.f32 %v1428, %v1484
      %v1501 = vadd.f32 %v1429, %v1485
      %v1502 = vadd.f32 %v1430, %v1486
      %v1503 = vadd.f32 %v1431, %v1487
      %v1504 = vadd.f32 %v1432, %v1488
      %v1505 = vadd.f32 %v1433, %v1489
      %v1506 = vadd.f32 %v1434, %v1490
      %v1507 = vadd.f32 %v1435, %v1491
      %v1508 = vadd.f32 %v1436, %v1492
      %v1509 = vadd.f32 %v1493, %v1457
      %v1510 = vadd.f32 %v1494, %v1458
      %v1511 = vadd.f32 %v1495, %v1459
      %v1512 = vadd.f32 %v1496, %v1460
      %v1513 = vadd.f32 %v1497, %v1461
      %v1514 = vadd.f32 %v1498, %v1462
      %v1515 = vadd.f32 %v1499, %v1463
      %v1516 = vadd.f32 %v1500, %v1464
      %v1517 = vadd.f32 %v1501, %v1465
      %v1518 = vadd.f32 %v1502, %v1466
      %v1519 = vadd.f32 %v1503, %v1467
      %v1520 = vadd.f32 %v1504, %v1468
      %v1521 = vadd.f32 %v1505, %v1469
      %v1522 = vadd.f32 %v1506, %v1470
      %v1523 = vadd.f32 %v1507, %v1471
      %v1524 = vadd.f32 %v1508, %v1472
      %v1525 = vld [vmem:[%s6] sm:$0x1]
      %v1527 = vlaneseq
      %v1528 = vshrl.u32 %v1527, 7
      %v1529 = vsub.s32 0, %v1528
      %v1530 = vrot.slane %v1525, %v1529
      %v1532 = vadd.f32 %v1509, %v1530
      %v1533 = vadd.f32 %v1510, %v1530
      %v1534 = vadd.f32 %v1511, %v1530
      %v1535 = vadd.f32 %v1512, %v1530
      %v1536 = vadd.f32 %v1513, %v1530
      %v1537 = vadd.f32 %v1514, %v1530
      %v1538 = vadd.f32 %v1515, %v1530
      %v1539 = vadd.f32 %v1516, %v1530
      %v1540 = vadd.f32 %v1517, %v1530
      %v1541 = vadd.f32 %v1518, %v1530
      %v1542 = vadd.f32 %v1519, %v1530
      %v1543 = vadd.f32 %v1520, %v1530
      %v1544 = vadd.f32 %v1521, %v1530
      %v1545 = vadd.f32 %v1522, %v1530
      %v1546 = vadd.f32 %v1523, %v1530
      %v1547 = vadd.f32 %v1524, %v1530
      %v1548 = vmax.f32 %v1532, 0.0
      %v1549 = vmax.f32 %v1533, 0.0
      %v1550 = vmax.f32 %v1534, 0.0
      %v1551 = vmax.f32 %v1535, 0.0
      %v1552 = vmax.f32 %v1536, 0.0
      %v1553 = vmax.f32 %v1537, 0.0
      %v1554 = vmax.f32 %v1538, 0.0
      %v1555 = vmax.f32 %v1539, 0.0
      %v1556 = vmax.f32 %v1540, 0.0
      %v1557 = vmax.f32 %v1541, 0.0
      %v1558 = vmax.f32 %v1542, 0.0
      %v1559 = vmax.f32 %v1543, 0.0
      %v1560 = vmax.f32 %v1544, 0.0
      %v1561 = vmax.f32 %v1545, 0.0
      %v1562 = vmax.f32 %v1546, 0.0
      %v1563 = vmax.f32 %v1547, 0.0
      %v1564 = vld [vmem:[%s7] sm:$0xff]
      %v1565 = vld [vmem:[%s7 + $0x8] sm:$0xff]
      %v1566 = vld [vmem:[%s7 + $0x10] sm:$0xff]
      %v1567 = vld [vmem:[%s8] sm:$0x1]
      %v1569 = vlaneseq
      %v1570 = vshrl.u32 %v1569, 7
      %v1571 = vsub.s32 0, %v1570
      %v1572 = vrot.slane %v1567, %v1571
      %v1574 = vadd.f32 %v1572, 0.0
      %1576 = vset.pattern.permute.xlu0 0
      %1577 = vperm.xlu0 %1576, %v1548
      %v1578 = vpop.permute.xlu0 %1577
      %1581 = vset.pattern.permute.xlu0 0
      %1582 = vperm.xlu0 %1581, %v1549
      %v1583 = vpop.permute.xlu0 %1582
      %1586 = vset.pattern.permute.xlu0 0
      %1587 = vperm.xlu0 %1586, %v1550
      %v1588 = vpop.permute.xlu0 %1587
      %1591 = vset.pattern.permute.xlu0 0
      %1592 = vperm.xlu0 %1591, %v1551
      %v1593 = vpop.permute.xlu0 %1592
      %1596 = vset.pattern.permute.xlu0 0
      %1597 = vperm.xlu0 %1596, %v1552
      %v1598 = vpop.permute.xlu0 %1597
      %1601 = vset.pattern.permute.xlu0 0
      %1602 = vperm.xlu0 %1601, %v1553
      %v1603 = vpop.permute.xlu0 %1602
      %1606 = vset.pattern.permute.xlu0 0
      %1607 = vperm.xlu0 %1606, %v1554
      %v1608 = vpop.permute.xlu0 %1607
      %1611 = vset.pattern.permute.xlu0 0
      %1612 = vperm.xlu0 %1611, %v1555
      %v1613 = vpop.permute.xlu0 %1612
      %1616 = vset.pattern.permute.xlu0 0
      %1617 = vperm.xlu0 %1616, %v1556
      %v1618 = vpop.permute.xlu0 %1617
      %1621 = vset.pattern.permute.xlu0 0
      %1622 = vperm.xlu0 %1621, %v1557
      %v1623 = vpop.permute.xlu0 %1622
      %1626 = vset.pattern.permute.xlu0 0
      %1627 = vperm.xlu0 %1626, %v1558
      %v1628 = vpop.permute.xlu0 %1627
      %1631 = vset.pattern.permute.xlu0 0
      %1632 = vperm.xlu0 %1631, %v1559
      %v1633 = vpop.permute.xlu0 %1632
      %1636 = vset.pattern.permute.xlu0 0
      %1637 = vperm.xlu0 %1636, %v1560
      %v1638 = vpop.permute.xlu0 %1637
      %1641 = vset.pattern.permute.xlu0 0
      %1642 = vperm.xlu0 %1641, %v1561
      %v1643 = vpop.permute.xlu0 %1642
      %1646 = vset.pattern.permute.xlu0 0
      %1647 = vperm.xlu0 %1646, %v1562
      %v1648 = vpop.permute.xlu0 %1647
      %1651 = vset.pattern.permute.xlu0 0
      %1652 = vperm.xlu0 %1651, %v1563
      %v1653 = vpop.permute.xlu0 %1652
      %v1655 = vlaneseq
      %v1656 = vshrl.u32 %v1655, 7
      %v1657 = vsub.s32 0, %v1656
      %v1658 = vrot.slane %v1564, %v1657
      %v1659 = vmul.f32 %v1578, %v1658
      %v1660 = vmul.f32 %v1583, %v1658
      %v1661 = vmul.f32 %v1588, %v1658
      %v1662 = vmul.f32 %v1593, %v1658
      %v1663 = vmul.f32 %v1598, %v1658
      %v1664 = vmul.f32 %v1603, %v1658
      %v1665 = vmul.f32 %v1608, %v1658
      %v1666 = vmul.f32 %v1613, %v1658
      %v1667 = vmul.f32 %v1618, %v1658
      %v1668 = vmul.f32 %v1623, %v1658
      %v1669 = vmul.f32 %v1628, %v1658
      %v1670 = vmul.f32 %v1633, %v1658
      %v1671 = vmul.f32 %v1638, %v1658
      %v1672 = vmul.f32 %v1643, %v1658
      %v1673 = vmul.f32 %v1648, %v1658
      %v1674 = vmul.f32 %v1653, %v1658
      %v1675 = vadd.f32 %v1574, %v1659
      %v1676 = vadd.f32 %v1574, %v1660
      %v1677 = vadd.f32 %v1574, %v1661
      %v1678 = vadd.f32 %v1574, %v1662
      %v1679 = vadd.f32 %v1574, %v1663
      %v1680 = vadd.f32 %v1574, %v1664
      %v1681 = vadd.f32 %v1574, %v1665
      %v1682 = vadd.f32 %v1574, %v1666
      %v1683 = vadd.f32 %v1574, %v1667
      %v1684 = vadd.f32 %v1574, %v1668
      %v1685 = vadd.f32 %v1574, %v1669
      %v1686 = vadd.f32 %v1574, %v1670
      %v1687 = vadd.f32 %v1574, %v1671
      %v1688 = vadd.f32 %v1574, %v1672
      %v1689 = vadd.f32 %v1574, %v1673
      %v1690 = vadd.f32 %v1574, %v1674
      %1691 = vset.pattern.permute.xlu0 1
      %1692 = vperm.xlu0 %1691, %v1548
      %v1693 = vpop.permute.xlu0 %1692
      %1695 = vset.pattern.permute.xlu0 1
      %1696 = vperm.xlu0 %1695, %v1549
      %v1697 = vpop.permute.xlu0 %1696
      %1699 = vset.pattern.permute.xlu0 1
      %1700 = vperm.xlu0 %1699, %v1550
      %v1701 = vpop.permute.xlu0 %1700
      %1703 = vset.pattern.permute.xlu0 1
      %1704 = vperm.xlu0 %1703, %v1551
      %v1705 = vpop.permute.xlu0 %1704
      %1707 = vset.pattern.permute.xlu0 1
      %1708 = vperm.xlu0 %1707, %v1552
      %v1709 = vpop.permute.xlu0 %1708
      %1711 = vset.pattern.permute.xlu0 1
      %1712 = vperm.xlu0 %1711, %v1553
      %v1713 = vpop.permute.xlu0 %1712
      %1715 = vset.pattern.permute.xlu0 1
      %1716 = vperm.xlu0 %1715, %v1554
      %v1717 = vpop.permute.xlu0 %1716
      %1719 = vset.pattern.permute.xlu0 1
      %1720 = vperm.xlu0 %1719, %v1555
      %v1721 = vpop.permute.xlu0 %1720
      %1723 = vset.pattern.permute.xlu0 1
      %1724 = vperm.xlu0 %1723, %v1556
      %v1725 = vpop.permute.xlu0 %1724
      %1727 = vset.pattern.permute.xlu0 1
      %1728 = vperm.xlu0 %1727, %v1557
      %v1729 = vpop.permute.xlu0 %1728
      %1731 = vset.pattern.permute.xlu0 1
      %1732 = vperm.xlu0 %1731, %v1558
      %v1733 = vpop.permute.xlu0 %1732
      %1735 = vset.pattern.permute.xlu0 1
      %1736 = vperm.xlu0 %1735, %v1559
      %v1737 = vpop.permute.xlu0 %1736
      %1739 = vset.pattern.permute.xlu0 1
      %1740 = vperm.xlu0 %1739, %v1560
      %v1741 = vpop.permute.xlu0 %1740
      %1743 = vset.pattern.permute.xlu0 1
      %1744 = vperm.xlu0 %1743, %v1561
      %v1745 = vpop.permute.xlu0 %1744
      %1747 = vset.pattern.permute.xlu0 1
      %1748 = vperm.xlu0 %1747, %v1562
      %v1749 = vpop.permute.xlu0 %1748
      %1751 = vset.pattern.permute.xlu0 1
      %1752 = vperm.xlu0 %1751, %v1563
      %v1753 = vpop.permute.xlu0 %1752
      %v1755 = vlaneseq
      %v1756 = vshrl.u32 %v1755, 7
      %v1757 = vsub.s32 1, %v1756
      %v1758 = vrot.slane %v1564, %v1757
      %v1759 = vmul.f32 %v1693, %v1758
      %v1760 = vmul.f32 %v1697, %v1758
      %v1761 = vmul.f32 %v1701, %v1758
      %v1762 = vmul.f32 %v1705, %v1758
      %v1763 = vmul.f32 %v1709, %v1758
      %v1764 = vmul.f32 %v1713, %v1758
      %v1765 = vmul.f32 %v1717, %v1758
      %v1766 = vmul.f32 %v1721, %v1758
      %v1767 = vmul.f32 %v1725, %v1758
      %v1768 = vmul.f32 %v1729, %v1758
      %v1769 = vmul.f32 %v1733, %v1758
      %v1770 = vmul.f32 %v1737, %v1758
      %v1771 = vmul.f32 %v1741, %v1758
      %v1772 = vmul.f32 %v1745, %v1758
      %v1773 = vmul.f32 %v1749, %v1758
      %v1774 = vmul.f32 %v1753, %v1758
      %v1775 = vadd.f32 %v1675, %v1759
      %v1776 = vadd.f32 %v1676, %v1760
      %v1777 = vadd.f32 %v1677, %v1761
      %v1778 = vadd.f32 %v1678, %v1762
      %v1779 = vadd.f32 %v1679, %v1763
      %v1780 = vadd.f32 %v1680, %v1764
      %v1781 = vadd.f32 %v1681, %v1765
      %v1782 = vadd.f32 %v1682, %v1766
      %v1783 = vadd.f32 %v1683, %v1767
      %v1784 = vadd.f32 %v1684, %v1768
      %v1785 = vadd.f32 %v1685, %v1769
      %v1786 = vadd.f32 %v1686, %v1770
      %v1787 = vadd.f32 %v1687, %v1771
      %v1788 = vadd.f32 %v1688, %v1772
      %v1789 = vadd.f32 %v1689, %v1773
      %v1790 = vadd.f32 %v1690, %v1774
      %1791 = vset.pattern.permute.xlu0 2
      %1792 = vperm.xlu0 %1791, %v1548
      %v1793 = vpop.permute.xlu0 %1792
      %1795 = vset.pattern.permute.xlu0 2
      %1796 = vperm.xlu0 %1795, %v1549
      %v1797 = vpop.permute.xlu0 %1796
      %1799 = vset.pattern.permute.xlu0 2
      %1800 = vperm.xlu0 %1799, %v1550
      %v1801 = vpop.permute.xlu0 %1800
      %1803 = vset.pattern.permute.xlu0 2
      %1804 = vperm.xlu0 %1803, %v1551
      %v1805 = vpop.permute.xlu0 %1804
      %1807 = vset.pattern.permute.xlu0 2
      %1808 = vperm.xlu0 %1807, %v1552
      %v1809 = vpop.permute.xlu0 %1808
      %1811 = vset.pattern.permute.xlu0 2
      %1812 = vperm.xlu0 %1811, %v1553
      %v1813 = vpop.permute.xlu0 %1812
      %1815 = vset.pattern.permute.xlu0 2
      %1816 = vperm.xlu0 %1815, %v1554
      %v1817 = vpop.permute.xlu0 %1816
      %1819 = vset.pattern.permute.xlu0 2
      %1820 = vperm.xlu0 %1819, %v1555
      %v1821 = vpop.permute.xlu0 %1820
      %1823 = vset.pattern.permute.xlu0 2
      %1824 = vperm.xlu0 %1823, %v1556
      %v1825 = vpop.permute.xlu0 %1824
      %1827 = vset.pattern.permute.xlu0 2
      %1828 = vperm.xlu0 %1827, %v1557
      %v1829 = vpop.permute.xlu0 %1828
      %1831 = vset.pattern.permute.xlu0 2
      %1832 = vperm.xlu0 %1831, %v1558
      %v1833 = vpop.permute.xlu0 %1832
      %1835 = vset.pattern.permute.xlu0 2
      %1836 = vperm.xlu0 %1835, %v1559
      %v1837 = vpop.permute.xlu0 %1836
      %1839 = vset.pattern.permute.xlu0 2
      %1840 = vperm.xlu0 %1839, %v1560
      %v1841 = vpop.permute.xlu0 %1840
      %1843 = vset.pattern.permute.xlu0 2
      %1844 = vperm.xlu0 %1843, %v1561
      %v1845 = vpop.permute.xlu0 %1844
      %1847 = vset.pattern.permute.xlu0 2
      %1848 = vperm.xlu0 %1847, %v1562
      %v1849 = vpop.permute.xlu0 %1848
      %1851 = vset.pattern.permute.xlu0 2
      %1852 = vperm.xlu0 %1851, %v1563
      %v1853 = vpop.permute.xlu0 %1852
      %v1855 = vlaneseq
      %v1856 = vshrl.u32 %v1855, 7
      %v1857 = vsub.s32 2, %v1856
      %v1858 = vrot.slane %v1564, %v1857
      %v1859 = vmul.f32 %v1793, %v1858
      %v1860 = vmul.f32 %v1797, %v1858
      %v1861 = vmul.f32 %v1801, %v1858
      %v1862 = vmul.f32 %v1805, %v1858
      %v1863 = vmul.f32 %v1809, %v1858
      %v1864 = vmul.f32 %v1813, %v1858
      %v1865 = vmul.f32 %v1817, %v1858
      %v1866 = vmul.f32 %v1821, %v1858
      %v1867 = vmul.f32 %v1825, %v1858
      %v1868 = vmul.f32 %v1829, %v1858
      %v1869 = vmul.f32 %v1833, %v1858
      %v1870 = vmul.f32 %v1837, %v1858
      %v1871 = vmul.f32 %v1841, %v1858
      %v1872 = vmul.f32 %v1845, %v1858
      %v1873 = vmul.f32 %v1849, %v1858
      %v1874 = vmul.f32 %v1853, %v1858
      %v1875 = vadd.f32 %v1775, %v1859
      %v1876 = vadd.f32 %v1776, %v1860
      %v1877 = vadd.f32 %v1777, %v1861
      %v1878 = vadd.f32 %v1778, %v1862
      %v1879 = vadd.f32 %v1779, %v1863
      %v1880 = vadd.f32 %v1780, %v1864
      %v1881 = vadd.f32 %v1781, %v1865
      %v1882 = vadd.f32 %v1782, %v1866
      %v1883 = vadd.f32 %v1783, %v1867
      %v1884 = vadd.f32 %v1784, %v1868
      %v1885 = vadd.f32 %v1785, %v1869
      %v1886 = vadd.f32 %v1786, %v1870
      %v1887 = vadd.f32 %v1787, %v1871
      %v1888 = vadd.f32 %v1788, %v1872
      %v1889 = vadd.f32 %v1789, %v1873
      %v1890 = vadd.f32 %v1790, %v1874
      %1891 = vset.pattern.permute.xlu0 3
      %1892 = vperm.xlu0 %1891, %v1548
      %v1893 = vpop.permute.xlu0 %1892
      %1895 = vset.pattern.permute.xlu0 3
      %1896 = vperm.xlu0 %1895, %v1549
      %v1897 = vpop.permute.xlu0 %1896
      %1899 = vset.pattern.permute.xlu0 3
      %1900 = vperm.xlu0 %1899, %v1550
      %v1901 = vpop.permute.xlu0 %1900
      %1903 = vset.pattern.permute.xlu0 3
      %1904 = vperm.xlu0 %1903, %v1551
      %v1905 = vpop.permute.xlu0 %1904
      %1907 = vset.pattern.permute.xlu0 3
      %1908 = vperm.xlu0 %1907, %v1552
      %v1909 = vpop.permute.xlu0 %1908
      %1911 = vset.pattern.permute.xlu0 3
      %1912 = vperm.xlu0 %1911, %v1553
      %v1913 = vpop.permute.xlu0 %1912
      %1915 = vset.pattern.permute.xlu0 3
      %1916 = vperm.xlu0 %1915, %v1554
      %v1917 = vpop.permute.xlu0 %1916
      %1919 = vset.pattern.permute.xlu0 3
      %1920 = vperm.xlu0 %1919, %v1555
      %v1921 = vpop.permute.xlu0 %1920
      %1923 = vset.pattern.permute.xlu0 3
      %1924 = vperm.xlu0 %1923, %v1556
      %v1925 = vpop.permute.xlu0 %1924
      %1927 = vset.pattern.permute.xlu0 3
      %1928 = vperm.xlu0 %1927, %v1557
      %v1929 = vpop.permute.xlu0 %1928
      %1931 = vset.pattern.permute.xlu0 3
      %1932 = vperm.xlu0 %1931, %v1558
      %v1933 = vpop.permute.xlu0 %1932
      %1935 = vset.pattern.permute.xlu0 3
      %1936 = vperm.xlu0 %1935, %v1559
      %v1937 = vpop.permute.xlu0 %1936
      %1939 = vset.pattern.permute.xlu0 3
      %1940 = vperm.xlu0 %1939, %v1560
      %v1941 = vpop.permute.xlu0 %1940
      %1943 = vset.pattern.permute.xlu0 3
      %1944 = vperm.xlu0 %1943, %v1561
      %v1945 = vpop.permute.xlu0 %1944
      %1947 = vset.pattern.permute.xlu0 3
      %1948 = vperm.xlu0 %1947, %v1562
      %v1949 = vpop.permute.xlu0 %1948
      %1951 = vset.pattern.permute.xlu0 3
      %1952 = vperm.xlu0 %1951, %v1563
      %v1953 = vpop.permute.xlu0 %1952
      %v1955 = vlaneseq
      %v1956 = vshrl.u32 %v1955, 7
      %v1957 = vsub.s32 3, %v1956
      %v1958 = vrot.slane %v1564, %v1957
      %v1959 = vmul.f32 %v1893, %v1958
      %v1960 = vmul.f32 %v1897, %v1958
      %v1961 = vmul.f32 %v1901, %v1958
      %v1962 = vmul.f32 %v1905, %v1958
      %v1963 = vmul.f32 %v1909, %v1958
      %v1964 = vmul.f32 %v1913, %v1958
      %v1965 = vmul.f32 %v1917, %v1958
      %v1966 = vmul.f32 %v1921, %v1958
      %v1967 = vmul.f32 %v1925, %v1958
      %v1968 = vmul.f32 %v1929, %v1958
      %v1969 = vmul.f32 %v1933, %v1958
      %v1970 = vmul.f32 %v1937, %v1958
      %v1971 = vmul.f32 %v1941, %v1958
      %v1972 = vmul.f32 %v1945, %v1958
      %v1973 = vmul.f32 %v1949, %v1958
      %v1974 = vmul.f32 %v1953, %v1958
      %v1975 = vadd.f32 %v1875, %v1959
      %v1976 = vadd.f32 %v1876, %v1960
      %v1977 = vadd.f32 %v1877, %v1961
      %v1978 = vadd.f32 %v1878, %v1962
      %v1979 = vadd.f32 %v1879, %v1963
      %v1980 = vadd.f32 %v1880, %v1964
      %v1981 = vadd.f32 %v1881, %v1965
      %v1982 = vadd.f32 %v1882, %v1966
      %v1983 = vadd.f32 %v1883, %v1967
      %v1984 = vadd.f32 %v1884, %v1968
      %v1985 = vadd.f32 %v1885, %v1969
      %v1986 = vadd.f32 %v1886, %v1970
      %v1987 = vadd.f32 %v1887, %v1971
      %v1988 = vadd.f32 %v1888, %v1972
      %v1989 = vadd.f32 %v1889, %v1973
      %v1990 = vadd.f32 %v1890, %v1974
      %1991 = vset.pattern.permute.xlu0 4
      %1992 = vperm.xlu0 %1991, %v1548
      %v1993 = vpop.permute.xlu0 %1992
      %1995 = vset.pattern.permute.xlu0 4
      %1996 = vperm.xlu0 %1995, %v1549
      %v1997 = vpop.permute.xlu0 %1996
      %1999 = vset.pattern.permute.xlu0 4
      %2000 = vperm.xlu0 %1999, %v1550
      %v2001 = vpop.permute.xlu0 %2000
      %2003 = vset.pattern.permute.xlu0 4
      %2004 = vperm.xlu0 %2003, %v1551
      %v2005 = vpop.permute.xlu0 %2004
      %2007 = vset.pattern.permute.xlu0 4
      %2008 = vperm.xlu0 %2007, %v1552
      %v2009 = vpop.permute.xlu0 %2008
      %2011 = vset.pattern.permute.xlu0 4
      %2012 = vperm.xlu0 %2011, %v1553
      %v2013 = vpop.permute.xlu0 %2012
      %2015 = vset.pattern.permute.xlu0 4
      %2016 = vperm.xlu0 %2015, %v1554
      %v2017 = vpop.permute.xlu0 %2016
      %2019 = vset.pattern.permute.xlu0 4
      %2020 = vperm.xlu0 %2019, %v1555
      %v2021 = vpop.permute.xlu0 %2020
      %2023 = vset.pattern.permute.xlu0 4
      %2024 = vperm.xlu0 %2023, %v1556
      %v2025 = vpop.permute.xlu0 %2024
      %2027 = vset.pattern.permute.xlu0 4
      %2028 = vperm.xlu0 %2027, %v1557
      %v2029 = vpop.permute.xlu0 %2028
      %2031 = vset.pattern.permute.xlu0 4
      %2032 = vperm.xlu0 %2031, %v1558
      %v2033 = vpop.permute.xlu0 %2032
      %2035 = vset.pattern.permute.xlu0 4
      %2036 = vperm.xlu0 %2035, %v1559
      %v2037 = vpop.permute.xlu0 %2036
      %2039 = vset.pattern.permute.xlu0 4
      %2040 = vperm.xlu0 %2039, %v1560
      %v2041 = vpop.permute.xlu0 %2040
      %2043 = vset.pattern.permute.xlu0 4
      %2044 = vperm.xlu0 %2043, %v1561
      %v2045 = vpop.permute.xlu0 %2044
      %2047 = vset.pattern.permute.xlu0 4
      %2048 = vperm.xlu0 %2047, %v1562
      %v2049 = vpop.permute.xlu0 %2048
      %2051 = vset.pattern.permute.xlu0 4
      %2052 = vperm.xlu0 %2051, %v1563
      %v2053 = vpop.permute.xlu0 %2052
      %v2055 = vlaneseq
      %v2056 = vshrl.u32 %v2055, 7
      %v2057 = vsub.s32 4, %v2056
      %v2058 = vrot.slane %v1564, %v2057
      %v2059 = vmul.f32 %v1993, %v2058
      %v2060 = vmul.f32 %v1997, %v2058
      %v2061 = vmul.f32 %v2001, %v2058
      %v2062 = vmul.f32 %v2005, %v2058
      %v2063 = vmul.f32 %v2009, %v2058
      %v2064 = vmul.f32 %v2013, %v2058
      %v2065 = vmul.f32 %v2017, %v2058
      %v2066 = vmul.f32 %v2021, %v2058
      %v2067 = vmul.f32 %v2025, %v2058
      %v2068 = vmul.f32 %v2029, %v2058
      %v2069 = vmul.f32 %v2033, %v2058
      %v2070 = vmul.f32 %v2037, %v2058
      %v2071 = vmul.f32 %v2041, %v2058
      %v2072 = vmul.f32 %v2045, %v2058
      %v2073 = vmul.f32 %v2049, %v2058
      %v2074 = vmul.f32 %v2053, %v2058
      %v2075 = vadd.f32 %v1975, %v2059
      %v2076 = vadd.f32 %v1976, %v2060
      %v2077 = vadd.f32 %v1977, %v2061
      %v2078 = vadd.f32 %v1978, %v2062
      %v2079 = vadd.f32 %v1979, %v2063
      %v2080 = vadd.f32 %v1980, %v2064
      %v2081 = vadd.f32 %v1981, %v2065
      %v2082 = vadd.f32 %v1982, %v2066
      %v2083 = vadd.f32 %v1983, %v2067
      %v2084 = vadd.f32 %v1984, %v2068
      %v2085 = vadd.f32 %v1985, %v2069
      %v2086 = vadd.f32 %v1986, %v2070
      %v2087 = vadd.f32 %v1987, %v2071
      %v2088 = vadd.f32 %v1988, %v2072
      %v2089 = vadd.f32 %v1989, %v2073
      %v2090 = vadd.f32 %v1990, %v2074
      %2091 = vset.pattern.permute.xlu0 5
      %2092 = vperm.xlu0 %2091, %v1548
      %v2093 = vpop.permute.xlu0 %2092
      %2095 = vset.pattern.permute.xlu0 5
      %2096 = vperm.xlu0 %2095, %v1549
      %v2097 = vpop.permute.xlu0 %2096
      %2099 = vset.pattern.permute.xlu0 5
      %2100 = vperm.xlu0 %2099, %v1550
      %v2101 = vpop.permute.xlu0 %2100
      %2103 = vset.pattern.permute.xlu0 5
      %2104 = vperm.xlu0 %2103, %v1551
      %v2105 = vpop.permute.xlu0 %2104
      %2107 = vset.pattern.permute.xlu0 5
      %2108 = vperm.xlu0 %2107, %v1552
      %v2109 = vpop.permute.xlu0 %2108
      %2111 = vset.pattern.permute.xlu0 5
      %2112 = vperm.xlu0 %2111, %v1553
      %v2113 = vpop.permute.xlu0 %2112
      %2115 = vset.pattern.permute.xlu0 5
      %2116 = vperm.xlu0 %2115, %v1554
      %v2117 = vpop.permute.xlu0 %2116
      %2119 = vset.pattern.permute.xlu0 5
      %2120 = vperm.xlu0 %2119, %v1555
      %v2121 = vpop.permute.xlu0 %2120
      %2123 = vset.pattern.permute.xlu0 5
      %2124 = vperm.xlu0 %2123, %v1556
      %v2125 = vpop.permute.xlu0 %2124
      %2127 = vset.pattern.permute.xlu0 5
      %2128 = vperm.xlu0 %2127, %v1557
      %v2129 = vpop.permute.xlu0 %2128
      %2131 = vset.pattern.permute.xlu0 5
      %2132 = vperm.xlu0 %2131, %v1558
      %v2133 = vpop.permute.xlu0 %2132
      %2135 = vset.pattern.permute.xlu0 5
      %2136 = vperm.xlu0 %2135, %v1559
      %v2137 = vpop.permute.xlu0 %2136
      %2139 = vset.pattern.permute.xlu0 5
      %2140 = vperm.xlu0 %2139, %v1560
      %v2141 = vpop.permute.xlu0 %2140
      %2143 = vset.pattern.permute.xlu0 5
      %2144 = vperm.xlu0 %2143, %v1561
      %v2145 = vpop.permute.xlu0 %2144
      %2147 = vset.pattern.permute.xlu0 5
      %2148 = vperm.xlu0 %2147, %v1562
      %v2149 = vpop.permute.xlu0 %2148
      %2151 = vset.pattern.permute.xlu0 5
      %2152 = vperm.xlu0 %2151, %v1563
      %v2153 = vpop.permute.xlu0 %2152
      %v2155 = vlaneseq
      %v2156 = vshrl.u32 %v2155, 7
      %v2157 = vsub.s32 5, %v2156
      %v2158 = vrot.slane %v1564, %v2157
      %v2159 = vmul.f32 %v2093, %v2158
      %v2160 = vmul.f32 %v2097, %v2158
      %v2161 = vmul.f32 %v2101, %v2158
      %v2162 = vmul.f32 %v2105, %v2158
      %v2163 = vmul.f32 %v2109, %v2158
      %v2164 = vmul.f32 %v2113, %v2158
      %v2165 = vmul.f32 %v2117, %v2158
      %v2166 = vmul.f32 %v2121, %v2158
      %v2167 = vmul.f32 %v2125, %v2158
      %v2168 = vmul.f32 %v2129, %v2158
      %v2169 = vmul.f32 %v2133, %v2158
      %v2170 = vmul.f32 %v2137, %v2158
      %v2171 = vmul.f32 %v2141, %v2158
      %v2172 = vmul.f32 %v2145, %v2158
      %v2173 = vmul.f32 %v2149, %v2158
      %v2174 = vmul.f32 %v2153, %v2158
      %v2175 = vadd.f32 %v2075, %v2159
      %v2176 = vadd.f32 %v2076, %v2160
      %v2177 = vadd.f32 %v2077, %v2161
      %v2178 = vadd.f32 %v2078, %v2162
      %v2179 = vadd.f32 %v2079, %v2163
      %v2180 = vadd.f32 %v2080, %v2164
      %v2181 = vadd.f32 %v2081, %v2165
      %v2182 = vadd.f32 %v2082, %v2166
      %v2183 = vadd.f32 %v2083, %v2167
      %v2184 = vadd.f32 %v2084, %v2168
      %v2185 = vadd.f32 %v2085, %v2169
      %v2186 = vadd.f32 %v2086, %v2170
      %v2187 = vadd.f32 %v2087, %v2171
      %v2188 = vadd.f32 %v2088, %v2172
      %v2189 = vadd.f32 %v2089, %v2173
      %v2190 = vadd.f32 %v2090, %v2174
      %2191 = vset.pattern.permute.xlu0 6
      %2192 = vperm.xlu0 %2191, %v1548
      %v2193 = vpop.permute.xlu0 %2192
      %2195 = vset.pattern.permute.xlu0 6
      %2196 = vperm.xlu0 %2195, %v1549
      %v2197 = vpop.permute.xlu0 %2196
      %2199 = vset.pattern.permute.xlu0 6
      %2200 = vperm.xlu0 %2199, %v1550
      %v2201 = vpop.permute.xlu0 %2200
      %2203 = vset.pattern.permute.xlu0 6
      %2204 = vperm.xlu0 %2203, %v1551
      %v2205 = vpop.permute.xlu0 %2204
      %2207 = vset.pattern.permute.xlu0 6
      %2208 = vperm.xlu0 %2207, %v1552
      %v2209 = vpop.permute.xlu0 %2208
      %2211 = vset.pattern.permute.xlu0 6
      %2212 = vperm.xlu0 %2211, %v1553
      %v2213 = vpop.permute.xlu0 %2212
      %2215 = vset.pattern.permute.xlu0 6
      %2216 = vperm.xlu0 %2215, %v1554
      %v2217 = vpop.permute.xlu0 %2216
      %2219 = vset.pattern.permute.xlu0 6
      %2220 = vperm.xlu0 %2219, %v1555
      %v2221 = vpop.permute.xlu0 %2220
      %2223 = vset.pattern.permute.xlu0 6
      %2224 = vperm.xlu0 %2223, %v1556
      %v2225 = vpop.permute.xlu0 %2224
      %2227 = vset.pattern.permute.xlu0 6
      %2228 = vperm.xlu0 %2227, %v1557
      %v2229 = vpop.permute.xlu0 %2228
      %2231 = vset.pattern.permute.xlu0 6
      %2232 = vperm.xlu0 %2231, %v1558
      %v2233 = vpop.permute.xlu0 %2232
      %2235 = vset.pattern.permute.xlu0 6
      %2236 = vperm.xlu0 %2235, %v1559
      %v2237 = vpop.permute.xlu0 %2236
      %2239 = vset.pattern.permute.xlu0 6
      %2240 = vperm.xlu0 %2239, %v1560
      %v2241 = vpop.permute.xlu0 %2240
      %2243 = vset.pattern.permute.xlu0 6
      %2244 = vperm.xlu0 %2243, %v1561
      %v2245 = vpop.permute.xlu0 %2244
      %2247 = vset.pattern.permute.xlu0 6
      %2248 = vperm.xlu0 %2247, %v1562
      %v2249 = vpop.permute.xlu0 %2248
      %2251 = vset.pattern.permute.xlu0 6
      %2252 = vperm.xlu0 %2251, %v1563
      %v2253 = vpop.permute.xlu0 %2252
      %v2255 = vlaneseq
      %v2256 = vshrl.u32 %v2255, 7
      %v2257 = vsub.s32 6, %v2256
      %v2258 = vrot.slane %v1564, %v2257
      %v2259 = vmul.f32 %v2193, %v2258
      %v2260 = vmul.f32 %v2197, %v2258
      %v2261 = vmul.f32 %v2201, %v2258
      %v2262 = vmul.f32 %v2205, %v2258
      %v2263 = vmul.f32 %v2209, %v2258
      %v2264 = vmul.f32 %v2213, %v2258
      %v2265 = vmul.f32 %v2217, %v2258
      %v2266 = vmul.f32 %v2221, %v2258
      %v2267 = vmul.f32 %v2225, %v2258
      %v2268 = vmul.f32 %v2229, %v2258
      %v2269 = vmul.f32 %v2233, %v2258
      %v2270 = vmul.f32 %v2237, %v2258
      %v2271 = vmul.f32 %v2241, %v2258
      %v2272 = vmul.f32 %v2245, %v2258
      %v2273 = vmul.f32 %v2249, %v2258
      %v2274 = vmul.f32 %v2253, %v2258
      %v2275 = vadd.f32 %v2175, %v2259
      %v2276 = vadd.f32 %v2176, %v2260
      %v2277 = vadd.f32 %v2177, %v2261
      %v2278 = vadd.f32 %v2178, %v2262
      %v2279 = vadd.f32 %v2179, %v2263
      %v2280 = vadd.f32 %v2180, %v2264
      %v2281 = vadd.f32 %v2181, %v2265
      %v2282 = vadd.f32 %v2182, %v2266
      %v2283 = vadd.f32 %v2183, %v2267
      %v2284 = vadd.f32 %v2184, %v2268
      %v2285 = vadd.f32 %v2185, %v2269
      %v2286 = vadd.f32 %v2186, %v2270
      %v2287 = vadd.f32 %v2187, %v2271
      %v2288 = vadd.f32 %v2188, %v2272
      %v2289 = vadd.f32 %v2189, %v2273
      %v2290 = vadd.f32 %v2190, %v2274
      %2291 = vset.pattern.permute.xlu0 7
      %2292 = vperm.xlu0 %2291, %v1548
      %v2293 = vpop.permute.xlu0 %2292
      %2295 = vset.pattern.permute.xlu0 7
      %2296 = vperm.xlu0 %2295, %v1549
      %v2297 = vpop.permute.xlu0 %2296
      %2299 = vset.pattern.permute.xlu0 7
      %2300 = vperm.xlu0 %2299, %v1550
      %v2301 = vpop.permute.xlu0 %2300
      %2303 = vset.pattern.permute.xlu0 7
      %2304 = vperm.xlu0 %2303, %v1551
      %v2305 = vpop.permute.xlu0 %2304
      %2307 = vset.pattern.permute.xlu0 7
      %2308 = vperm.xlu0 %2307, %v1552
      %v2309 = vpop.permute.xlu0 %2308
      %2311 = vset.pattern.permute.xlu0 7
      %2312 = vperm.xlu0 %2311, %v1553
      %v2313 = vpop.permute.xlu0 %2312
      %2315 = vset.pattern.permute.xlu0 7
      %2316 = vperm.xlu0 %2315, %v1554
      %v2317 = vpop.permute.xlu0 %2316
      %2319 = vset.pattern.permute.xlu0 7
      %2320 = vperm.xlu0 %2319, %v1555
      %v2321 = vpop.permute.xlu0 %2320
      %2323 = vset.pattern.permute.xlu0 7
      %2324 = vperm.xlu0 %2323, %v1556
      %v2325 = vpop.permute.xlu0 %2324
      %2327 = vset.pattern.permute.xlu0 7
      %2328 = vperm.xlu0 %2327, %v1557
      %v2329 = vpop.permute.xlu0 %2328
      %2331 = vset.pattern.permute.xlu0 7
      %2332 = vperm.xlu0 %2331, %v1558
      %v2333 = vpop.permute.xlu0 %2332
      %2335 = vset.pattern.permute.xlu0 7
      %2336 = vperm.xlu0 %2335, %v1559
      %v2337 = vpop.permute.xlu0 %2336
      %2339 = vset.pattern.permute.xlu0 7
      %2340 = vperm.xlu0 %2339, %v1560
      %v2341 = vpop.permute.xlu0 %2340
      %2343 = vset.pattern.permute.xlu0 7
      %2344 = vperm.xlu0 %2343, %v1561
      %v2345 = vpop.permute.xlu0 %2344
      %2347 = vset.pattern.permute.xlu0 7
      %2348 = vperm.xlu0 %2347, %v1562
      %v2349 = vpop.permute.xlu0 %2348
      %2351 = vset.pattern.permute.xlu0 7
      %2352 = vperm.xlu0 %2351, %v1563
      %v2353 = vpop.permute.xlu0 %2352
      %v2355 = vlaneseq
      %v2356 = vshrl.u32 %v2355, 7
      %v2357 = vsub.s32 7, %v2356
      %v2358 = vrot.slane %v1564, %v2357
      %v2359 = vmul.f32 %v2293, %v2358
      %v2360 = vmul.f32 %v2297, %v2358
      %v2361 = vmul.f32 %v2301, %v2358
      %v2362 = vmul.f32 %v2305, %v2358
      %v2363 = vmul.f32 %v2309, %v2358
      %v2364 = vmul.f32 %v2313, %v2358
      %v2365 = vmul.f32 %v2317, %v2358
      %v2366 = vmul.f32 %v2321, %v2358
      %v2367 = vmul.f32 %v2325, %v2358
      %v2368 = vmul.f32 %v2329, %v2358
      %v2369 = vmul.f32 %v2333, %v2358
      %v2370 = vmul.f32 %v2337, %v2358
      %v2371 = vmul.f32 %v2341, %v2358
      %v2372 = vmul.f32 %v2345, %v2358
      %v2373 = vmul.f32 %v2349, %v2358
      %v2374 = vmul.f32 %v2353, %v2358
      %v2375 = vadd.f32 %v2275, %v2359
      %v2376 = vadd.f32 %v2276, %v2360
      %v2377 = vadd.f32 %v2277, %v2361
      %v2378 = vadd.f32 %v2278, %v2362
      %v2379 = vadd.f32 %v2279, %v2363
      %v2380 = vadd.f32 %v2280, %v2364
      %v2381 = vadd.f32 %v2281, %v2365
      %v2382 = vadd.f32 %v2282, %v2366
      %v2383 = vadd.f32 %v2283, %v2367
      %v2384 = vadd.f32 %v2284, %v2368
      %v2385 = vadd.f32 %v2285, %v2369
      %v2386 = vadd.f32 %v2286, %v2370
      %v2387 = vadd.f32 %v2287, %v2371
      %v2388 = vadd.f32 %v2288, %v2372
      %v2389 = vadd.f32 %v2289, %v2373
      %v2390 = vadd.f32 %v2290, %v2374
      %2391 = vset.pattern.permute.xlu0 8
      %2392 = vperm.xlu0 %2391, %v1548
      %v2393 = vpop.permute.xlu0 %2392
      %2395 = vset.pattern.permute.xlu0 8
      %2396 = vperm.xlu0 %2395, %v1549
      %v2397 = vpop.permute.xlu0 %2396
      %2399 = vset.pattern.permute.xlu0 8
      %2400 = vperm.xlu0 %2399, %v1550
      %v2401 = vpop.permute.xlu0 %2400
      %2403 = vset.pattern.permute.xlu0 8
      %2404 = vperm.xlu0 %2403, %v1551
      %v2405 = vpop.permute.xlu0 %2404
      %2407 = vset.pattern.permute.xlu0 8
      %2408 = vperm.xlu0 %2407, %v1552
      %v2409 = vpop.permute.xlu0 %2408
      %2411 = vset.pattern.permute.xlu0 8
      %2412 = vperm.xlu0 %2411, %v1553
      %v2413 = vpop.permute.xlu0 %2412
      %2415 = vset.pattern.permute.xlu0 8
      %2416 = vperm.xlu0 %2415, %v1554
      %v2417 = vpop.permute.xlu0 %2416
      %2419 = vset.pattern.permute.xlu0 8
      %2420 = vperm.xlu0 %2419, %v1555
      %v2421 = vpop.permute.xlu0 %2420
      %2423 = vset.pattern.permute.xlu0 8
      %2424 = vperm.xlu0 %2423, %v1556
      %v2425 = vpop.permute.xlu0 %2424
      %2427 = vset.pattern.permute.xlu0 8
      %2428 = vperm.xlu0 %2427, %v1557
      %v2429 = vpop.permute.xlu0 %2428
      %2431 = vset.pattern.permute.xlu0 8
      %2432 = vperm.xlu0 %2431, %v1558
      %v2433 = vpop.permute.xlu0 %2432
      %2435 = vset.pattern.permute.xlu0 8
      %2436 = vperm.xlu0 %2435, %v1559
      %v2437 = vpop.permute.xlu0 %2436
      %2439 = vset.pattern.permute.xlu0 8
      %2440 = vperm.xlu0 %2439, %v1560
      %v2441 = vpop.permute.xlu0 %2440
      %2443 = vset.pattern.permute.xlu0 8
      %2444 = vperm.xlu0 %2443, %v1561
      %v2445 = vpop.permute.xlu0 %2444
      %2447 = vset.pattern.permute.xlu0 8
      %2448 = vperm.xlu0 %2447, %v1562
      %v2449 = vpop.permute.xlu0 %2448
      %2451 = vset.pattern.permute.xlu0 8
      %2452 = vperm.xlu0 %2451, %v1563
      %v2453 = vpop.permute.xlu0 %2452
      %v2455 = vlaneseq
      %v2456 = vshrl.u32 %v2455, 7
      %v2457 = vsub.s32 0, %v2456
      %v2458 = vrot.slane %v1565, %v2457
      %v2459 = vmul.f32 %v2393, %v2458
      %v2460 = vmul.f32 %v2397, %v2458
      %v2461 = vmul.f32 %v2401, %v2458
      %v2462 = vmul.f32 %v2405, %v2458
      %v2463 = vmul.f32 %v2409, %v2458
      %v2464 = vmul.f32 %v2413, %v2458
      %v2465 = vmul.f32 %v2417, %v2458
      %v2466 = vmul.f32 %v2421, %v2458
      %v2467 = vmul.f32 %v2425, %v2458
      %v2468 = vmul.f32 %v2429, %v2458
      %v2469 = vmul.f32 %v2433, %v2458
      %v2470 = vmul.f32 %v2437, %v2458
      %v2471 = vmul.f32 %v2441, %v2458
      %v2472 = vmul.f32 %v2445, %v2458
      %v2473 = vmul.f32 %v2449, %v2458
      %v2474 = vmul.f32 %v2453, %v2458
      %v2475 = vadd.f32 %v2375, %v2459
      %v2476 = vadd.f32 %v2376, %v2460
      %v2477 = vadd.f32 %v2377, %v2461
      %v2478 = vadd.f32 %v2378, %v2462
      %v2479 = vadd.f32 %v2379, %v2463
      %v2480 = vadd.f32 %v2380, %v2464
      %v2481 = vadd.f32 %v2381, %v2465
      %v2482 = vadd.f32 %v2382, %v2466
      %v2483 = vadd.f32 %v2383, %v2467
      %v2484 = vadd.f32 %v2384, %v2468
      %v2485 = vadd.f32 %v2385, %v2469
      %v2486 = vadd.f32 %v2386, %v2470
      %v2487 = vadd.f32 %v2387, %v2471
      %v2488 = vadd.f32 %v2388, %v2472
      %v2489 = vadd.f32 %v2389, %v2473
      %v2490 = vadd.f32 %v2390, %v2474
      %2491 = vset.pattern.permute.xlu0 9
      %2492 = vperm.xlu0 %2491, %v1548
      %v2493 = vpop.permute.xlu0 %2492
      %2495 = vset.pattern.permute.xlu0 9
      %2496 = vperm.xlu0 %2495, %v1549
      %v2497 = vpop.permute.xlu0 %2496
      %2499 = vset.pattern.permute.xlu0 9
      %2500 = vperm.xlu0 %2499, %v1550
      %v2501 = vpop.permute.xlu0 %2500
      %2503 = vset.pattern.permute.xlu0 9
      %2504 = vperm.xlu0 %2503, %v1551
      %v2505 = vpop.permute.xlu0 %2504
      %2507 = vset.pattern.permute.xlu0 9
      %2508 = vperm.xlu0 %2507, %v1552
      %v2509 = vpop.permute.xlu0 %2508
      %2511 = vset.pattern.permute.xlu0 9
      %2512 = vperm.xlu0 %2511, %v1553
      %v2513 = vpop.permute.xlu0 %2512
      %2515 = vset.pattern.permute.xlu0 9
      %2516 = vperm.xlu0 %2515, %v1554
      %v2517 = vpop.permute.xlu0 %2516
      %2519 = vset.pattern.permute.xlu0 9
      %2520 = vperm.xlu0 %2519, %v1555
      %v2521 = vpop.permute.xlu0 %2520
      %2523 = vset.pattern.permute.xlu0 9
      %2524 = vperm.xlu0 %2523, %v1556
      %v2525 = vpop.permute.xlu0 %2524
      %2527 = vset.pattern.permute.xlu0 9
      %2528 = vperm.xlu0 %2527, %v1557
      %v2529 = vpop.permute.xlu0 %2528
      %2531 = vset.pattern.permute.xlu0 9
      %2532 = vperm.xlu0 %2531, %v1558
      %v2533 = vpop.permute.xlu0 %2532
      %2535 = vset.pattern.permute.xlu0 9
      %2536 = vperm.xlu0 %2535, %v1559
      %v2537 = vpop.permute.xlu0 %2536
      %2539 = vset.pattern.permute.xlu0 9
      %2540 = vperm.xlu0 %2539, %v1560
      %v2541 = vpop.permute.xlu0 %2540
      %2543 = vset.pattern.permute.xlu0 9
      %2544 = vperm.xlu0 %2543, %v1561
      %v2545 = vpop.permute.xlu0 %2544
      %2547 = vset.pattern.permute.xlu0 9
      %2548 = vperm.xlu0 %2547, %v1562
      %v2549 = vpop.permute.xlu0 %2548
      %2551 = vset.pattern.permute.xlu0 9
      %2552 = vperm.xlu0 %2551, %v1563
      %v2553 = vpop.permute.xlu0 %2552
      %v2555 = vlaneseq
      %v2556 = vshrl.u32 %v2555, 7
      %v2557 = vsub.s32 1, %v2556
      %v2558 = vrot.slane %v1565, %v2557
      %v2559 = vmul.f32 %v2493, %v2558
      %v2560 = vmul.f32 %v2497, %v2558
      %v2561 = vmul.f32 %v2501, %v2558
      %v2562 = vmul.f32 %v2505, %v2558
      %v2563 = vmul.f32 %v2509, %v2558
      %v2564 = vmul.f32 %v2513, %v2558
      %v2565 = vmul.f32 %v2517, %v2558
      %v2566 = vmul.f32 %v2521, %v2558
      %v2567 = vmul.f32 %v2525, %v2558
      %v2568 = vmul.f32 %v2529, %v2558
      %v2569 = vmul.f32 %v2533, %v2558
      %v2570 = vmul.f32 %v2537, %v2558
      %v2571 = vmul.f32 %v2541, %v2558
      %v2572 = vmul.f32 %v2545, %v2558
      %v2573 = vmul.f32 %v2549, %v2558
      %v2574 = vmul.f32 %v2553, %v2558
      %v2575 = vadd.f32 %v2475, %v2559
      %v2576 = vadd.f32 %v2476, %v2560
      %v2577 = vadd.f32 %v2477, %v2561
      %v2578 = vadd.f32 %v2478, %v2562
      %v2579 = vadd.f32 %v2479, %v2563
      %v2580 = vadd.f32 %v2480, %v2564
      %v2581 = vadd.f32 %v2481, %v2565
      %v2582 = vadd.f32 %v2482, %v2566
      %v2583 = vadd.f32 %v2483, %v2567
      %v2584 = vadd.f32 %v2484, %v2568
      %v2585 = vadd.f32 %v2485, %v2569
      %v2586 = vadd.f32 %v2486, %v2570
      %v2587 = vadd.f32 %v2487, %v2571
      %v2588 = vadd.f32 %v2488, %v2572
      %v2589 = vadd.f32 %v2489, %v2573
      %v2590 = vadd.f32 %v2490, %v2574
      %2591 = vset.pattern.permute.xlu0 10
      %2592 = vperm.xlu0 %2591, %v1548
      %v2593 = vpop.permute.xlu0 %2592
      %2595 = vset.pattern.permute.xlu0 10
      %2596 = vperm.xlu0 %2595, %v1549
      %v2597 = vpop.permute.xlu0 %2596
      %2599 = vset.pattern.permute.xlu0 10
      %2600 = vperm.xlu0 %2599, %v1550
      %v2601 = vpop.permute.xlu0 %2600
      %2603 = vset.pattern.permute.xlu0 10
      %2604 = vperm.xlu0 %2603, %v1551
      %v2605 = vpop.permute.xlu0 %2604
      %2607 = vset.pattern.permute.xlu0 10
      %2608 = vperm.xlu0 %2607, %v1552
      %v2609 = vpop.permute.xlu0 %2608
      %2611 = vset.pattern.permute.xlu0 10
      %2612 = vperm.xlu0 %2611, %v1553
      %v2613 = vpop.permute.xlu0 %2612
      %2615 = vset.pattern.permute.xlu0 10
      %2616 = vperm.xlu0 %2615, %v1554
      %v2617 = vpop.permute.xlu0 %2616
      %2619 = vset.pattern.permute.xlu0 10
      %2620 = vperm.xlu0 %2619, %v1555
      %v2621 = vpop.permute.xlu0 %2620
      %2623 = vset.pattern.permute.xlu0 10
      %2624 = vperm.xlu0 %2623, %v1556
      %v2625 = vpop.permute.xlu0 %2624
      %2627 = vset.pattern.permute.xlu0 10
      %2628 = vperm.xlu0 %2627, %v1557
      %v2629 = vpop.permute.xlu0 %2628
      %2631 = vset.pattern.permute.xlu0 10
      %2632 = vperm.xlu0 %2631, %v1558
      %v2633 = vpop.permute.xlu0 %2632
      %2635 = vset.pattern.permute.xlu0 10
      %2636 = vperm.xlu0 %2635, %v1559
      %v2637 = vpop.permute.xlu0 %2636
      %2639 = vset.pattern.permute.xlu0 10
      %2640 = vperm.xlu0 %2639, %v1560
      %v2641 = vpop.permute.xlu0 %2640
      %2643 = vset.pattern.permute.xlu0 10
      %2644 = vperm.xlu0 %2643, %v1561
      %v2645 = vpop.permute.xlu0 %2644
      %2647 = vset.pattern.permute.xlu0 10
      %2648 = vperm.xlu0 %2647, %v1562
      %v2649 = vpop.permute.xlu0 %2648
      %2651 = vset.pattern.permute.xlu0 10
      %2652 = vperm.xlu0 %2651, %v1563
      %v2653 = vpop.permute.xlu0 %2652
      %v2655 = vlaneseq
      %v2656 = vshrl.u32 %v2655, 7
      %v2657 = vsub.s32 2, %v2656
      %v2658 = vrot.slane %v1565, %v2657
      %v2659 = vmul.f32 %v2593, %v2658
      %v2660 = vmul.f32 %v2597, %v2658
      %v2661 = vmul.f32 %v2601, %v2658
      %v2662 = vmul.f32 %v2605, %v2658
      %v2663 = vmul.f32 %v2609, %v2658
      %v2664 = vmul.f32 %v2613, %v2658
      %v2665 = vmul.f32 %v2617, %v2658
      %v2666 = vmul.f32 %v2621, %v2658
      %v2667 = vmul.f32 %v2625, %v2658
      %v2668 = vmul.f32 %v2629, %v2658
      %v2669 = vmul.f32 %v2633, %v2658
      %v2670 = vmul.f32 %v2637, %v2658
      %v2671 = vmul.f32 %v2641, %v2658
      %v2672 = vmul.f32 %v2645, %v2658
      %v2673 = vmul.f32 %v2649, %v2658
      %v2674 = vmul.f32 %v2653, %v2658
      %v2675 = vadd.f32 %v2575, %v2659
      %v2676 = vadd.f32 %v2576, %v2660
      %v2677 = vadd.f32 %v2577, %v2661
      %v2678 = vadd.f32 %v2578, %v2662
      %v2679 = vadd.f32 %v2579, %v2663
      %v2680 = vadd.f32 %v2580, %v2664
      %v2681 = vadd.f32 %v2581, %v2665
      %v2682 = vadd.f32 %v2582, %v2666
      %v2683 = vadd.f32 %v2583, %v2667
      %v2684 = vadd.f32 %v2584, %v2668
      %v2685 = vadd.f32 %v2585, %v2669
      %v2686 = vadd.f32 %v2586, %v2670
      %v2687 = vadd.f32 %v2587, %v2671
      %v2688 = vadd.f32 %v2588, %v2672
      %v2689 = vadd.f32 %v2589, %v2673
      %v2690 = vadd.f32 %v2590, %v2674
      %2691 = vset.pattern.permute.xlu0 11
      %2692 = vperm.xlu0 %2691, %v1548
      %v2693 = vpop.permute.xlu0 %2692
      %2695 = vset.pattern.permute.xlu0 11
      %2696 = vperm.xlu0 %2695, %v1549
      %v2697 = vpop.permute.xlu0 %2696
      %2699 = vset.pattern.permute.xlu0 11
      %2700 = vperm.xlu0 %2699, %v1550
      %v2701 = vpop.permute.xlu0 %2700
      %2703 = vset.pattern.permute.xlu0 11
      %2704 = vperm.xlu0 %2703, %v1551
      %v2705 = vpop.permute.xlu0 %2704
      %2707 = vset.pattern.permute.xlu0 11
      %2708 = vperm.xlu0 %2707, %v1552
      %v2709 = vpop.permute.xlu0 %2708
      %2711 = vset.pattern.permute.xlu0 11
      %2712 = vperm.xlu0 %2711, %v1553
      %v2713 = vpop.permute.xlu0 %2712
      %2715 = vset.pattern.permute.xlu0 11
      %2716 = vperm.xlu0 %2715, %v1554
      %v2717 = vpop.permute.xlu0 %2716
      %2719 = vset.pattern.permute.xlu0 11
      %2720 = vperm.xlu0 %2719, %v1555
      %v2721 = vpop.permute.xlu0 %2720
      %2723 = vset.pattern.permute.xlu0 11
      %2724 = vperm.xlu0 %2723, %v1556
      %v2725 = vpop.permute.xlu0 %2724
      %2727 = vset.pattern.permute.xlu0 11
      %2728 = vperm.xlu0 %2727, %v1557
      %v2729 = vpop.permute.xlu0 %2728
      %2731 = vset.pattern.permute.xlu0 11
      %2732 = vperm.xlu0 %2731, %v1558
      %v2733 = vpop.permute.xlu0 %2732
      %2735 = vset.pattern.permute.xlu0 11
      %2736 = vperm.xlu0 %2735, %v1559
      %v2737 = vpop.permute.xlu0 %2736
      %2739 = vset.pattern.permute.xlu0 11
      %2740 = vperm.xlu0 %2739, %v1560
      %v2741 = vpop.permute.xlu0 %2740
      %2743 = vset.pattern.permute.xlu0 11
      %2744 = vperm.xlu0 %2743, %v1561
      %v2745 = vpop.permute.xlu0 %2744
      %2747 = vset.pattern.permute.xlu0 11
      %2748 = vperm.xlu0 %2747, %v1562
      %v2749 = vpop.permute.xlu0 %2748
      %2751 = vset.pattern.permute.xlu0 11
      %2752 = vperm.xlu0 %2751, %v1563
      %v2753 = vpop.permute.xlu0 %2752
      %v2755 = vlaneseq
      %v2756 = vshrl.u32 %v2755, 7
      %v2757 = vsub.s32 3, %v2756
      %v2758 = vrot.slane %v1565, %v2757
      %v2759 = vmul.f32 %v2693, %v2758
      %v2760 = vmul.f32 %v2697, %v2758
      %v2761 = vmul.f32 %v2701, %v2758
      %v2762 = vmul.f32 %v2705, %v2758
      %v2763 = vmul.f32 %v2709, %v2758
      %v2764 = vmul.f32 %v2713, %v2758
      %v2765 = vmul.f32 %v2717, %v2758
      %v2766 = vmul.f32 %v2721, %v2758
      %v2767 = vmul.f32 %v2725, %v2758
      %v2768 = vmul.f32 %v2729, %v2758
      %v2769 = vmul.f32 %v2733, %v2758
      %v2770 = vmul.f32 %v2737, %v2758
      %v2771 = vmul.f32 %v2741, %v2758
      %v2772 = vmul.f32 %v2745, %v2758
      %v2773 = vmul.f32 %v2749, %v2758
      %v2774 = vmul.f32 %v2753, %v2758
      %v2775 = vadd.f32 %v2675, %v2759
      %v2776 = vadd.f32 %v2676, %v2760
      %v2777 = vadd.f32 %v2677, %v2761
      %v2778 = vadd.f32 %v2678, %v2762
      %v2779 = vadd.f32 %v2679, %v2763
      %v2780 = vadd.f32 %v2680, %v2764
      %v2781 = vadd.f32 %v2681, %v2765
      %v2782 = vadd.f32 %v2682, %v2766
      %v2783 = vadd.f32 %v2683, %v2767
      %v2784 = vadd.f32 %v2684, %v2768
      %v2785 = vadd.f32 %v2685, %v2769
      %v2786 = vadd.f32 %v2686, %v2770
      %v2787 = vadd.f32 %v2687, %v2771
      %v2788 = vadd.f32 %v2688, %v2772
      %v2789 = vadd.f32 %v2689, %v2773
      %v2790 = vadd.f32 %v2690, %v2774
      %2791 = vset.pattern.permute.xlu0 12
      %2792 = vperm.xlu0 %2791, %v1548
      %v2793 = vpop.permute.xlu0 %2792
      %2795 = vset.pattern.permute.xlu0 12
      %2796 = vperm.xlu0 %2795, %v1549
      %v2797 = vpop.permute.xlu0 %2796
      %2799 = vset.pattern.permute.xlu0 12
      %2800 = vperm.xlu0 %2799, %v1550
      %v2801 = vpop.permute.xlu0 %2800
      %2803 = vset.pattern.permute.xlu0 12
      %2804 = vperm.xlu0 %2803, %v1551
      %v2805 = vpop.permute.xlu0 %2804
      %2807 = vset.pattern.permute.xlu0 12
      %2808 = vperm.xlu0 %2807, %v1552
      %v2809 = vpop.permute.xlu0 %2808
      %2811 = vset.pattern.permute.xlu0 12
      %2812 = vperm.xlu0 %2811, %v1553
      %v2813 = vpop.permute.xlu0 %2812
      %2815 = vset.pattern.permute.xlu0 12
      %2816 = vperm.xlu0 %2815, %v1554
      %v2817 = vpop.permute.xlu0 %2816
      %2819 = vset.pattern.permute.xlu0 12
      %2820 = vperm.xlu0 %2819, %v1555
      %v2821 = vpop.permute.xlu0 %2820
      %2823 = vset.pattern.permute.xlu0 12
      %2824 = vperm.xlu0 %2823, %v1556
      %v2825 = vpop.permute.xlu0 %2824
      %2827 = vset.pattern.permute.xlu0 12
      %2828 = vperm.xlu0 %2827, %v1557
      %v2829 = vpop.permute.xlu0 %2828
      %2831 = vset.pattern.permute.xlu0 12
      %2832 = vperm.xlu0 %2831, %v1558
      %v2833 = vpop.permute.xlu0 %2832
      %2835 = vset.pattern.permute.xlu0 12
      %2836 = vperm.xlu0 %2835, %v1559
      %v2837 = vpop.permute.xlu0 %2836
      %2839 = vset.pattern.permute.xlu0 12
      %2840 = vperm.xlu0 %2839, %v1560
      %v2841 = vpop.permute.xlu0 %2840
      %2843 = vset.pattern.permute.xlu0 12
      %2844 = vperm.xlu0 %2843, %v1561
      %v2845 = vpop.permute.xlu0 %2844
      %2847 = vset.pattern.permute.xlu0 12
      %2848 = vperm.xlu0 %2847, %v1562
      %v2849 = vpop.permute.xlu0 %2848
      %2851 = vset.pattern.permute.xlu0 12
      %2852 = vperm.xlu0 %2851, %v1563
      %v2853 = vpop.permute.xlu0 %2852
      %v2855 = vlaneseq
      %v2856 = vshrl.u32 %v2855, 7
      %v2857 = vsub.s32 4, %v2856
      %v2858 = vrot.slane %v1565, %v2857
      %v2859 = vmul.f32 %v2793, %v2858
      %v2860 = vmul.f32 %v2797, %v2858
      %v2861 = vmul.f32 %v2801, %v2858
      %v2862 = vmul.f32 %v2805, %v2858
      %v2863 = vmul.f32 %v2809, %v2858
      %v2864 = vmul.f32 %v2813, %v2858
      %v2865 = vmul.f32 %v2817, %v2858
      %v2866 = vmul.f32 %v2821, %v2858
      %v2867 = vmul.f32 %v2825, %v2858
      %v2868 = vmul.f32 %v2829, %v2858
      %v2869 = vmul.f32 %v2833, %v2858
      %v2870 = vmul.f32 %v2837, %v2858
      %v2871 = vmul.f32 %v2841, %v2858
      %v2872 = vmul.f32 %v2845, %v2858
      %v2873 = vmul.f32 %v2849, %v2858
      %v2874 = vmul.f32 %v2853, %v2858
      %v2875 = vadd.f32 %v2775, %v2859
      %v2876 = vadd.f32 %v2776, %v2860
      %v2877 = vadd.f32 %v2777, %v2861
      %v2878 = vadd.f32 %v2778, %v2862
      %v2879 = vadd.f32 %v2779, %v2863
      %v2880 = vadd.f32 %v2780, %v2864
      %v2881 = vadd.f32 %v2781, %v2865
      %v2882 = vadd.f32 %v2782, %v2866
      %v2883 = vadd.f32 %v2783, %v2867
      %v2884 = vadd.f32 %v2784, %v2868
      %v2885 = vadd.f32 %v2785, %v2869
      %v2886 = vadd.f32 %v2786, %v2870
      %v2887 = vadd.f32 %v2787, %v2871
      %v2888 = vadd.f32 %v2788, %v2872
      %v2889 = vadd.f32 %v2789, %v2873
      %v2890 = vadd.f32 %v2790, %v2874
      %2891 = vset.pattern.permute.xlu0 13
      %2892 = vperm.xlu0 %2891, %v1548
      %v2893 = vpop.permute.xlu0 %2892
      %2895 = vset.pattern.permute.xlu0 13
      %2896 = vperm.xlu0 %2895, %v1549
      %v2897 = vpop.permute.xlu0 %2896
      %2899 = vset.pattern.permute.xlu0 13
      %2900 = vperm.xlu0 %2899, %v1550
      %v2901 = vpop.permute.xlu0 %2900
      %2903 = vset.pattern.permute.xlu0 13
      %2904 = vperm.xlu0 %2903, %v1551
      %v2905 = vpop.permute.xlu0 %2904
      %2907 = vset.pattern.permute.xlu0 13
      %2908 = vperm.xlu0 %2907, %v1552
      %v2909 = vpop.permute.xlu0 %2908
      %2911 = vset.pattern.permute.xlu0 13
      %2912 = vperm.xlu0 %2911, %v1553
      %v2913 = vpop.permute.xlu0 %2912
      %2915 = vset.pattern.permute.xlu0 13
      %2916 = vperm.xlu0 %2915, %v1554
      %v2917 = vpop.permute.xlu0 %2916
      %2919 = vset.pattern.permute.xlu0 13
      %2920 = vperm.xlu0 %2919, %v1555
      %v2921 = vpop.permute.xlu0 %2920
      %2923 = vset.pattern.permute.xlu0 13
      %2924 = vperm.xlu0 %2923, %v1556
      %v2925 = vpop.permute.xlu0 %2924
      %2927 = vset.pattern.permute.xlu0 13
      %2928 = vperm.xlu0 %2927, %v1557
      %v2929 = vpop.permute.xlu0 %2928
      %2931 = vset.pattern.permute.xlu0 13
      %2932 = vperm.xlu0 %2931, %v1558
      %v2933 = vpop.permute.xlu0 %2932
      %2935 = vset.pattern.permute.xlu0 13
      %2936 = vperm.xlu0 %2935, %v1559
      %v2937 = vpop.permute.xlu0 %2936
      %2939 = vset.pattern.permute.xlu0 13
      %2940 = vperm.xlu0 %2939, %v1560
      %v2941 = vpop.permute.xlu0 %2940
      %2943 = vset.pattern.permute.xlu0 13
      %2944 = vperm.xlu0 %2943, %v1561
      %v2945 = vpop.permute.xlu0 %2944
      %2947 = vset.pattern.permute.xlu0 13
      %2948 = vperm.xlu0 %2947, %v1562
      %v2949 = vpop.permute.xlu0 %2948
      %2951 = vset.pattern.permute.xlu0 13
      %2952 = vperm.xlu0 %2951, %v1563
      %v2953 = vpop.permute.xlu0 %2952
      %v2955 = vlaneseq
      %v2956 = vshrl.u32 %v2955, 7
      %v2957 = vsub.s32 5, %v2956
      %v2958 = vrot.slane %v1565, %v2957
      %v2959 = vmul.f32 %v2893, %v2958
      %v2960 = vmul.f32 %v2897, %v2958
      %v2961 = vmul.f32 %v2901, %v2958
      %v2962 = vmul.f32 %v2905, %v2958
      %v2963 = vmul.f32 %v2909, %v2958
      %v2964 = vmul.f32 %v2913, %v2958
      %v2965 = vmul.f32 %v2917, %v2958
      %v2966 = vmul.f32 %v2921, %v2958
      %v2967 = vmul.f32 %v2925, %v2958
      %v2968 = vmul.f32 %v2929, %v2958
      %v2969 = vmul.f32 %v2933, %v2958
      %v2970 = vmul.f32 %v2937, %v2958
      %v2971 = vmul.f32 %v2941, %v2958
      %v2972 = vmul.f32 %v2945, %v2958
      %v2973 = vmul.f32 %v2949, %v2958
      %v2974 = vmul.f32 %v2953, %v2958
      %v2975 = vadd.f32 %v2875, %v2959
      %v2976 = vadd.f32 %v2876, %v2960
      %v2977 = vadd.f32 %v2877, %v2961
      %v2978 = vadd.f32 %v2878, %v2962
      %v2979 = vadd.f32 %v2879, %v2963
      %v2980 = vadd.f32 %v2880, %v2964
      %v2981 = vadd.f32 %v2881, %v2965
      %v2982 = vadd.f32 %v2882, %v2966
      %v2983 = vadd.f32 %v2883, %v2967
      %v2984 = vadd.f32 %v2884, %v2968
      %v2985 = vadd.f32 %v2885, %v2969
      %v2986 = vadd.f32 %v2886, %v2970
      %v2987 = vadd.f32 %v2887, %v2971
      %v2988 = vadd.f32 %v2888, %v2972
      %v2989 = vadd.f32 %v2889, %v2973
      %v2990 = vadd.f32 %v2890, %v2974
      %2991 = vset.pattern.permute.xlu0 14
      %2992 = vperm.xlu0 %2991, %v1548
      %v2993 = vpop.permute.xlu0 %2992
      %2995 = vset.pattern.permute.xlu0 14
      %2996 = vperm.xlu0 %2995, %v1549
      %v2997 = vpop.permute.xlu0 %2996
      %2999 = vset.pattern.permute.xlu0 14
      %3000 = vperm.xlu0 %2999, %v1550
      %v3001 = vpop.permute.xlu0 %3000
      %3003 = vset.pattern.permute.xlu0 14
      %3004 = vperm.xlu0 %3003, %v1551
      %v3005 = vpop.permute.xlu0 %3004
      %3007 = vset.pattern.permute.xlu0 14
      %3008 = vperm.xlu0 %3007, %v1552
      %v3009 = vpop.permute.xlu0 %3008
      %3011 = vset.pattern.permute.xlu0 14
      %3012 = vperm.xlu0 %3011, %v1553
      %v3013 = vpop.permute.xlu0 %3012
      %3015 = vset.pattern.permute.xlu0 14
      %3016 = vperm.xlu0 %3015, %v1554
      %v3017 = vpop.permute.xlu0 %3016
      %3019 = vset.pattern.permute.xlu0 14
      %3020 = vperm.xlu0 %3019, %v1555
      %v3021 = vpop.permute.xlu0 %3020
      %3023 = vset.pattern.permute.xlu0 14
      %3024 = vperm.xlu0 %3023, %v1556
      %v3025 = vpop.permute.xlu0 %3024
      %3027 = vset.pattern.permute.xlu0 14
      %3028 = vperm.xlu0 %3027, %v1557
      %v3029 = vpop.permute.xlu0 %3028
      %3031 = vset.pattern.permute.xlu0 14
      %3032 = vperm.xlu0 %3031, %v1558
      %v3033 = vpop.permute.xlu0 %3032
      %3035 = vset.pattern.permute.xlu0 14
      %3036 = vperm.xlu0 %3035, %v1559
      %v3037 = vpop.permute.xlu0 %3036
      %3039 = vset.pattern.permute.xlu0 14
      %3040 = vperm.xlu0 %3039, %v1560
      %v3041 = vpop.permute.xlu0 %3040
      %3043 = vset.pattern.permute.xlu0 14
      %3044 = vperm.xlu0 %3043, %v1561
      %v3045 = vpop.permute.xlu0 %3044
      %3047 = vset.pattern.permute.xlu0 14
      %3048 = vperm.xlu0 %3047, %v1562
      %v3049 = vpop.permute.xlu0 %3048
      %3051 = vset.pattern.permute.xlu0 14
      %3052 = vperm.xlu0 %3051, %v1563
      %v3053 = vpop.permute.xlu0 %3052
      %v3055 = vlaneseq
      %v3056 = vshrl.u32 %v3055, 7
      %v3057 = vsub.s32 6, %v3056
      %v3058 = vrot.slane %v1565, %v3057
      %v3059 = vmul.f32 %v2993, %v3058
      %v3060 = vmul.f32 %v2997, %v3058
      %v3061 = vmul.f32 %v3001, %v3058
      %v3062 = vmul.f32 %v3005, %v3058
      %v3063 = vmul.f32 %v3009, %v3058
      %v3064 = vmul.f32 %v3013, %v3058
      %v3065 = vmul.f32 %v3017, %v3058
      %v3066 = vmul.f32 %v3021, %v3058
      %v3067 = vmul.f32 %v3025, %v3058
      %v3068 = vmul.f32 %v3029, %v3058
      %v3069 = vmul.f32 %v3033, %v3058
      %v3070 = vmul.f32 %v3037, %v3058
      %v3071 = vmul.f32 %v3041, %v3058
      %v3072 = vmul.f32 %v3045, %v3058
      %v3073 = vmul.f32 %v3049, %v3058
      %v3074 = vmul.f32 %v3053, %v3058
      %v3075 = vadd.f32 %v2975, %v3059
      %v3076 = vadd.f32 %v2976, %v3060
      %v3077 = vadd.f32 %v2977, %v3061
      %v3078 = vadd.f32 %v2978, %v3062
      %v3079 = vadd.f32 %v2979, %v3063
      %v3080 = vadd.f32 %v2980, %v3064
      %v3081 = vadd.f32 %v2981, %v3065
      %v3082 = vadd.f32 %v2982, %v3066
      %v3083 = vadd.f32 %v2983, %v3067
      %v3084 = vadd.f32 %v2984, %v3068
      %v3085 = vadd.f32 %v2985, %v3069
      %v3086 = vadd.f32 %v2986, %v3070
      %v3087 = vadd.f32 %v2987, %v3071
      %v3088 = vadd.f32 %v2988, %v3072
      %v3089 = vadd.f32 %v2989, %v3073
      %v3090 = vadd.f32 %v2990, %v3074
      %3091 = vset.pattern.permute.xlu0 15
      %3092 = vperm.xlu0 %3091, %v1548
      %v3093 = vpop.permute.xlu0 %3092
      %3095 = vset.pattern.permute.xlu0 15
      %3096 = vperm.xlu0 %3095, %v1549
      %v3097 = vpop.permute.xlu0 %3096
      %3099 = vset.pattern.permute.xlu0 15
      %3100 = vperm.xlu0 %3099, %v1550
      %v3101 = vpop.permute.xlu0 %3100
      %3103 = vset.pattern.permute.xlu0 15
      %3104 = vperm.xlu0 %3103, %v1551
      %v3105 = vpop.permute.xlu0 %3104
      %3107 = vset.pattern.permute.xlu0 15
      %3108 = vperm.xlu0 %3107, %v1552
      %v3109 = vpop.permute.xlu0 %3108
      %3111 = vset.pattern.permute.xlu0 15
      %3112 = vperm.xlu0 %3111, %v1553
      %v3113 = vpop.permute.xlu0 %3112
      %3115 = vset.pattern.permute.xlu0 15
      %3116 = vperm.xlu0 %3115, %v1554
      %v3117 = vpop.permute.xlu0 %3116
      %3119 = vset.pattern.permute.xlu0 15
      %3120 = vperm.xlu0 %3119, %v1555
      %v3121 = vpop.permute.xlu0 %3120
      %3123 = vset.pattern.permute.xlu0 15
      %3124 = vperm.xlu0 %3123, %v1556
      %v3125 = vpop.permute.xlu0 %3124
      %3127 = vset.pattern.permute.xlu0 15
      %3128 = vperm.xlu0 %3127, %v1557
      %v3129 = vpop.permute.xlu0 %3128
      %3131 = vset.pattern.permute.xlu0 15
      %3132 = vperm.xlu0 %3131, %v1558
      %v3133 = vpop.permute.xlu0 %3132
      %3135 = vset.pattern.permute.xlu0 15
      %3136 = vperm.xlu0 %3135, %v1559
      %v3137 = vpop.permute.xlu0 %3136
      %3139 = vset.pattern.permute.xlu0 15
      %3140 = vperm.xlu0 %3139, %v1560
      %v3141 = vpop.permute.xlu0 %3140
      %3143 = vset.pattern.permute.xlu0 15
      %3144 = vperm.xlu0 %3143, %v1561
      %v3145 = vpop.permute.xlu0 %3144
      %3147 = vset.pattern.permute.xlu0 15
      %3148 = vperm.xlu0 %3147, %v1562
      %v3149 = vpop.permute.xlu0 %3148
      %3151 = vset.pattern.permute.xlu0 15
      %3152 = vperm.xlu0 %3151, %v1563
      %v3153 = vpop.permute.xlu0 %3152
      %v3155 = vlaneseq
      %v3156 = vshrl.u32 %v3155, 7
      %v3157 = vsub.s32 7, %v3156
      %v3158 = vrot.slane %v1565, %v3157
      %v3159 = vmul.f32 %v3093, %v3158
      %v3160 = vmul.f32 %v3097, %v3158
      %v3161 = vmul.f32 %v3101, %v3158
      %v3162 = vmul.f32 %v3105, %v3158
      %v3163 = vmul.f32 %v3109, %v3158
      %v3164 = vmul.f32 %v3113, %v3158
      %v3165 = vmul.f32 %v3117, %v3158
      %v3166 = vmul.f32 %v3121, %v3158
      %v3167 = vmul.f32 %v3125, %v3158
      %v3168 = vmul.f32 %v3129, %v3158
      %v3169 = vmul.f32 %v3133, %v3158
      %v3170 = vmul.f32 %v3137, %v3158
      %v3171 = vmul.f32 %v3141, %v3158
      %v3172 = vmul.f32 %v3145, %v3158
      %v3173 = vmul.f32 %v3149, %v3158
      %v3174 = vmul.f32 %v3153, %v3158
      %v3175 = vadd.f32 %v3075, %v3159
      %v3176 = vadd.f32 %v3076, %v3160
      %v3177 = vadd.f32 %v3077, %v3161
      %v3178 = vadd.f32 %v3078, %v3162
      %v3179 = vadd.f32 %v3079, %v3163
      %v3180 = vadd.f32 %v3080, %v3164
      %v3181 = vadd.f32 %v3081, %v3165
      %v3182 = vadd.f32 %v3082, %v3166
      %v3183 = vadd.f32 %v3083, %v3167
      %v3184 = vadd.f32 %v3084, %v3168
      %v3185 = vadd.f32 %v3085, %v3169
      %v3186 = vadd.f32 %v3086, %v3170
      %v3187 = vadd.f32 %v3087, %v3171
      %v3188 = vadd.f32 %v3088, %v3172
      %v3189 = vadd.f32 %v3089, %v3173
      %v3190 = vadd.f32 %v3090, %v3174
      %3191 = vset.pattern.permute.xlu0 16
      %3192 = vperm.xlu0 %3191, %v1548
      %v3193 = vpop.permute.xlu0 %3192
      %3195 = vset.pattern.permute.xlu0 16
      %3196 = vperm.xlu0 %3195, %v1549
      %v3197 = vpop.permute.xlu0 %3196
      %3199 = vset.pattern.permute.xlu0 16
      %3200 = vperm.xlu0 %3199, %v1550
      %v3201 = vpop.permute.xlu0 %3200
      %3203 = vset.pattern.permute.xlu0 16
      %3204 = vperm.xlu0 %3203, %v1551
      %v3205 = vpop.permute.xlu0 %3204
      %3207 = vset.pattern.permute.xlu0 16
      %3208 = vperm.xlu0 %3207, %v1552
      %v3209 = vpop.permute.xlu0 %3208
      %3211 = vset.pattern.permute.xlu0 16
      %3212 = vperm.xlu0 %3211, %v1553
      %v3213 = vpop.permute.xlu0 %3212
      %3215 = vset.pattern.permute.xlu0 16
      %3216 = vperm.xlu0 %3215, %v1554
      %v3217 = vpop.permute.xlu0 %3216
      %3219 = vset.pattern.permute.xlu0 16
      %3220 = vperm.xlu0 %3219, %v1555
      %v3221 = vpop.permute.xlu0 %3220
      %3223 = vset.pattern.permute.xlu0 16
      %3224 = vperm.xlu0 %3223, %v1556
      %v3225 = vpop.permute.xlu0 %3224
      %3227 = vset.pattern.permute.xlu0 16
      %3228 = vperm.xlu0 %3227, %v1557
      %v3229 = vpop.permute.xlu0 %3228
      %3231 = vset.pattern.permute.xlu0 16
      %3232 = vperm.xlu0 %3231, %v1558
      %v3233 = vpop.permute.xlu0 %3232
      %3235 = vset.pattern.permute.xlu0 16
      %3236 = vperm.xlu0 %3235, %v1559
      %v3237 = vpop.permute.xlu0 %3236
      %3239 = vset.pattern.permute.xlu0 16
      %3240 = vperm.xlu0 %3239, %v1560
      %v3241 = vpop.permute.xlu0 %3240
      %3243 = vset.pattern.permute.xlu0 16
      %3244 = vperm.xlu0 %3243, %v1561
      %v3245 = vpop.permute.xlu0 %3244
      %3247 = vset.pattern.permute.xlu0 16
      %3248 = vperm.xlu0 %3247, %v1562
      %v3249 = vpop.permute.xlu0 %3248
      %3251 = vset.pattern.permute.xlu0 16
      %3252 = vperm.xlu0 %3251, %v1563
      %v3253 = vpop.permute.xlu0 %3252
      %v3255 = vlaneseq
      %v3256 = vshrl.u32 %v3255, 7
      %v3257 = vsub.s32 0, %v3256
      %v3258 = vrot.slane %v1566, %v3257
      %v3259 = vmul.f32 %v3193, %v3258
      %v3260 = vmul.f32 %v3197, %v3258
      %v3261 = vmul.f32 %v3201, %v3258
      %v3262 = vmul.f32 %v3205, %v3258
      %v3263 = vmul.f32 %v3209, %v3258
      %v3264 = vmul.f32 %v3213, %v3258
      %v3265 = vmul.f32 %v3217, %v3258
      %v3266 = vmul.f32 %v3221, %v3258
      %v3267 = vmul.f32 %v3225, %v3258
      %v3268 = vmul.f32 %v3229, %v3258
      %v3269 = vmul.f32 %v3233, %v3258
      %v3270 = vmul.f32 %v3237, %v3258
      %v3271 = vmul.f32 %v3241, %v3258
      %v3272 = vmul.f32 %v3245, %v3258
      %v3273 = vmul.f32 %v3249, %v3258
      %v3274 = vmul.f32 %v3253, %v3258
      %v3275 = vadd.f32 %v3175, %v3259
      %v3276 = vadd.f32 %v3176, %v3260
      %v3277 = vadd.f32 %v3177, %v3261
      %v3278 = vadd.f32 %v3178, %v3262
      %v3279 = vadd.f32 %v3179, %v3263
      %v3280 = vadd.f32 %v3180, %v3264
      %v3281 = vadd.f32 %v3181, %v3265
      %v3282 = vadd.f32 %v3182, %v3266
      %v3283 = vadd.f32 %v3183, %v3267
      %v3284 = vadd.f32 %v3184, %v3268
      %v3285 = vadd.f32 %v3185, %v3269
      %v3286 = vadd.f32 %v3186, %v3270
      %v3287 = vadd.f32 %v3187, %v3271
      %v3288 = vadd.f32 %v3188, %v3272
      %v3289 = vadd.f32 %v3189, %v3273
      %v3290 = vadd.f32 %v3190, %v3274
      %3291 = vset.pattern.permute.xlu0 17
      %3292 = vperm.xlu0 %3291, %v1548
      %v3293 = vpop.permute.xlu0 %3292
      %3295 = vset.pattern.permute.xlu0 17
      %3296 = vperm.xlu0 %3295, %v1549
      %v3297 = vpop.permute.xlu0 %3296
      %3299 = vset.pattern.permute.xlu0 17
      %3300 = vperm.xlu0 %3299, %v1550
      %v3301 = vpop.permute.xlu0 %3300
      %3303 = vset.pattern.permute.xlu0 17
      %3304 = vperm.xlu0 %3303, %v1551
      %v3305 = vpop.permute.xlu0 %3304
      %3307 = vset.pattern.permute.xlu0 17
      %3308 = vperm.xlu0 %3307, %v1552
      %v3309 = vpop.permute.xlu0 %3308
      %3311 = vset.pattern.permute.xlu0 17
      %3312 = vperm.xlu0 %3311, %v1553
      %v3313 = vpop.permute.xlu0 %3312
      %3315 = vset.pattern.permute.xlu0 17
      %3316 = vperm.xlu0 %3315, %v1554
      %v3317 = vpop.permute.xlu0 %3316
      %3319 = vset.pattern.permute.xlu0 17
      %3320 = vperm.xlu0 %3319, %v1555
      %v3321 = vpop.permute.xlu0 %3320
      %3323 = vset.pattern.permute.xlu0 17
      %3324 = vperm.xlu0 %3323, %v1556
      %v3325 = vpop.permute.xlu0 %3324
      %3327 = vset.pattern.permute.xlu0 17
      %3328 = vperm.xlu0 %3327, %v1557
      %v3329 = vpop.permute.xlu0 %3328
      %3331 = vset.pattern.permute.xlu0 17
      %3332 = vperm.xlu0 %3331, %v1558
      %v3333 = vpop.permute.xlu0 %3332
      %3335 = vset.pattern.permute.xlu0 17
      %3336 = vperm.xlu0 %3335, %v1559
      %v3337 = vpop.permute.xlu0 %3336
      %3339 = vset.pattern.permute.xlu0 17
      %3340 = vperm.xlu0 %3339, %v1560
      %v3341 = vpop.permute.xlu0 %3340
      %3343 = vset.pattern.permute.xlu0 17
      %3344 = vperm.xlu0 %3343, %v1561
      %v3345 = vpop.permute.xlu0 %3344
      %3347 = vset.pattern.permute.xlu0 17
      %3348 = vperm.xlu0 %3347, %v1562
      %v3349 = vpop.permute.xlu0 %3348
      %3351 = vset.pattern.permute.xlu0 17
      %3352 = vperm.xlu0 %3351, %v1563
      %v3353 = vpop.permute.xlu0 %3352
      %v3355 = vlaneseq
      %v3356 = vshrl.u32 %v3355, 7
      %v3357 = vsub.s32 1, %v3356
      %v3358 = vrot.slane %v1566, %v3357
      %v3359 = vmul.f32 %v3293, %v3358
      %v3360 = vmul.f32 %v3297, %v3358
      %v3361 = vmul.f32 %v3301, %v3358
      %v3362 = vmul.f32 %v3305, %v3358
      %v3363 = vmul.f32 %v3309, %v3358
      %v3364 = vmul.f32 %v3313, %v3358
      %v3365 = vmul.f32 %v3317, %v3358
      %v3366 = vmul.f32 %v3321, %v3358
      %v3367 = vmul.f32 %v3325, %v3358
      %v3368 = vmul.f32 %v3329, %v3358
      %v3369 = vmul.f32 %v3333, %v3358
      %v3370 = vmul.f32 %v3337, %v3358
      %v3371 = vmul.f32 %v3341, %v3358
      %v3372 = vmul.f32 %v3345, %v3358
      %v3373 = vmul.f32 %v3349, %v3358
      %v3374 = vmul.f32 %v3353, %v3358
      %v3375 = vadd.f32 %v3275, %v3359
      %v3376 = vadd.f32 %v3276, %v3360
      %v3377 = vadd.f32 %v3277, %v3361
      %v3378 = vadd.f32 %v3278, %v3362
      %v3379 = vadd.f32 %v3279, %v3363
      %v3380 = vadd.f32 %v3280, %v3364
      %v3381 = vadd.f32 %v3281, %v3365
      %v3382 = vadd.f32 %v3282, %v3366
      %v3383 = vadd.f32 %v3283, %v3367
      %v3384 = vadd.f32 %v3284, %v3368
      %v3385 = vadd.f32 %v3285, %v3369
      %v3386 = vadd.f32 %v3286, %v3370
      %v3387 = vadd.f32 %v3287, %v3371
      %v3388 = vadd.f32 %v3288, %v3372
      %v3389 = vadd.f32 %v3289, %v3373
      %v3390 = vadd.f32 %v3290, %v3374
      %3391 = vset.pattern.permute.xlu0 18
      %3392 = vperm.xlu0 %3391, %v1548
      %v3393 = vpop.permute.xlu0 %3392
      %3395 = vset.pattern.permute.xlu0 18
      %3396 = vperm.xlu0 %3395, %v1549
      %v3397 = vpop.permute.xlu0 %3396
      %3399 = vset.pattern.permute.xlu0 18
      %3400 = vperm.xlu0 %3399, %v1550
      %v3401 = vpop.permute.xlu0 %3400
      %3403 = vset.pattern.permute.xlu0 18
      %3404 = vperm.xlu0 %3403, %v1551
      %v3405 = vpop.permute.xlu0 %3404
      %3407 = vset.pattern.permute.xlu0 18
      %3408 = vperm.xlu0 %3407, %v1552
      %v3409 = vpop.permute.xlu0 %3408
      %3411 = vset.pattern.permute.xlu0 18
      %3412 = vperm.xlu0 %3411, %v1553
      %v3413 = vpop.permute.xlu0 %3412
      %3415 = vset.pattern.permute.xlu0 18
      %3416 = vperm.xlu0 %3415, %v1554
      %v3417 = vpop.permute.xlu0 %3416
      %3419 = vset.pattern.permute.xlu0 18
      %3420 = vperm.xlu0 %3419, %v1555
      %v3421 = vpop.permute.xlu0 %3420
      %3423 = vset.pattern.permute.xlu0 18
      %3424 = vperm.xlu0 %3423, %v1556
      %v3425 = vpop.permute.xlu0 %3424
      %3427 = vset.pattern.permute.xlu0 18
      %3428 = vperm.xlu0 %3427, %v1557
      %v3429 = vpop.permute.xlu0 %3428
      %3431 = vset.pattern.permute.xlu0 18
      %3432 = vperm.xlu0 %3431, %v1558
      %v3433 = vpop.permute.xlu0 %3432
      %3435 = vset.pattern.permute.xlu0 18
      %3436 = vperm.xlu0 %3435, %v1559
      %v3437 = vpop.permute.xlu0 %3436
      %3439 = vset.pattern.permute.xlu0 18
      %3440 = vperm.xlu0 %3439, %v1560
      %v3441 = vpop.permute.xlu0 %3440
      %3443 = vset.pattern.permute.xlu0 18
      %3444 = vperm.xlu0 %3443, %v1561
      %v3445 = vpop.permute.xlu0 %3444
      %3447 = vset.pattern.permute.xlu0 18
      %3448 = vperm.xlu0 %3447, %v1562
      %v3449 = vpop.permute.xlu0 %3448
      %3451 = vset.pattern.permute.xlu0 18
      %3452 = vperm.xlu0 %3451, %v1563
      %v3453 = vpop.permute.xlu0 %3452
      %v3455 = vlaneseq
      %v3456 = vshrl.u32 %v3455, 7
      %v3457 = vsub.s32 2, %v3456
      %v3458 = vrot.slane %v1566, %v3457
      %v3459 = vmul.f32 %v3393, %v3458
      %v3460 = vmul.f32 %v3397, %v3458
      %v3461 = vmul.f32 %v3401, %v3458
      %v3462 = vmul.f32 %v3405, %v3458
      %v3463 = vmul.f32 %v3409, %v3458
      %v3464 = vmul.f32 %v3413, %v3458
      %v3465 = vmul.f32 %v3417, %v3458
      %v3466 = vmul.f32 %v3421, %v3458
      %v3467 = vmul.f32 %v3425, %v3458
      %v3468 = vmul.f32 %v3429, %v3458
      %v3469 = vmul.f32 %v3433, %v3458
      %v3470 = vmul.f32 %v3437, %v3458
      %v3471 = vmul.f32 %v3441, %v3458
      %v3472 = vmul.f32 %v3445, %v3458
      %v3473 = vmul.f32 %v3449, %v3458
      %v3474 = vmul.f32 %v3453, %v3458
      %v3475 = vadd.f32 %v3375, %v3459
      %v3476 = vadd.f32 %v3376, %v3460
      %v3477 = vadd.f32 %v3377, %v3461
      %v3478 = vadd.f32 %v3378, %v3462
      %v3479 = vadd.f32 %v3379, %v3463
      %v3480 = vadd.f32 %v3380, %v3464
      %v3481 = vadd.f32 %v3381, %v3465
      %v3482 = vadd.f32 %v3382, %v3466
      %v3483 = vadd.f32 %v3383, %v3467
      %v3484 = vadd.f32 %v3384, %v3468
      %v3485 = vadd.f32 %v3385, %v3469
      %v3486 = vadd.f32 %v3386, %v3470
      %v3487 = vadd.f32 %v3387, %v3471
      %v3488 = vadd.f32 %v3388, %v3472
      %v3489 = vadd.f32 %v3389, %v3473
      %v3490 = vadd.f32 %v3390, %v3474
      %3491 = vset.pattern.permute.xlu0 19
      %3492 = vperm.xlu0 %3491, %v1548
      %v3493 = vpop.permute.xlu0 %3492
      %3495 = vset.pattern.permute.xlu0 19
      %3496 = vperm.xlu0 %3495, %v1549
      %v3497 = vpop.permute.xlu0 %3496
      %3499 = vset.pattern.permute.xlu0 19
      %3500 = vperm.xlu0 %3499, %v1550
      %v3501 = vpop.permute.xlu0 %3500
      %3503 = vset.pattern.permute.xlu0 19
      %3504 = vperm.xlu0 %3503, %v1551
      %v3505 = vpop.permute.xlu0 %3504
      %3507 = vset.pattern.permute.xlu0 19
      %3508 = vperm.xlu0 %3507, %v1552
      %v3509 = vpop.permute.xlu0 %3508
      %3511 = vset.pattern.permute.xlu0 19
      %3512 = vperm.xlu0 %3511, %v1553
      %v3513 = vpop.permute.xlu0 %3512
      %3515 = vset.pattern.permute.xlu0 19
      %3516 = vperm.xlu0 %3515, %v1554
      %v3517 = vpop.permute.xlu0 %3516
      %3519 = vset.pattern.permute.xlu0 19
      %3520 = vperm.xlu0 %3519, %v1555
      %v3521 = vpop.permute.xlu0 %3520
      %3523 = vset.pattern.permute.xlu0 19
      %3524 = vperm.xlu0 %3523, %v1556
      %v3525 = vpop.permute.xlu0 %3524
      %3527 = vset.pattern.permute.xlu0 19
      %3528 = vperm.xlu0 %3527, %v1557
      %v3529 = vpop.permute.xlu0 %3528
      %3531 = vset.pattern.permute.xlu0 19
      %3532 = vperm.xlu0 %3531, %v1558
      %v3533 = vpop.permute.xlu0 %3532
      %3535 = vset.pattern.permute.xlu0 19
      %3536 = vperm.xlu0 %3535, %v1559
      %v3537 = vpop.permute.xlu0 %3536
      %3539 = vset.pattern.permute.xlu0 19
      %3540 = vperm.xlu0 %3539, %v1560
      %v3541 = vpop.permute.xlu0 %3540
      %3543 = vset.pattern.permute.xlu0 19
      %3544 = vperm.xlu0 %3543, %v1561
      %v3545 = vpop.permute.xlu0 %3544
      %3547 = vset.pattern.permute.xlu0 19
      %3548 = vperm.xlu0 %3547, %v1562
      %v3549 = vpop.permute.xlu0 %3548
      %3551 = vset.pattern.permute.xlu0 19
      %3552 = vperm.xlu0 %3551, %v1563
      %v3553 = vpop.permute.xlu0 %3552
      %v3555 = vlaneseq
      %v3556 = vshrl.u32 %v3555, 7
      %v3557 = vsub.s32 3, %v3556
      %v3558 = vrot.slane %v1566, %v3557
      %v3559 = vmul.f32 %v3493, %v3558
      %v3560 = vmul.f32 %v3497, %v3558
      %v3561 = vmul.f32 %v3501, %v3558
      %v3562 = vmul.f32 %v3505, %v3558
      %v3563 = vmul.f32 %v3509, %v3558
      %v3564 = vmul.f32 %v3513, %v3558
      %v3565 = vmul.f32 %v3517, %v3558
      %v3566 = vmul.f32 %v3521, %v3558
      %v3567 = vmul.f32 %v3525, %v3558
      %v3568 = vmul.f32 %v3529, %v3558
      %v3569 = vmul.f32 %v3533, %v3558
      %v3570 = vmul.f32 %v3537, %v3558
      %v3571 = vmul.f32 %v3541, %v3558
      %v3572 = vmul.f32 %v3545, %v3558
      %v3573 = vmul.f32 %v3549, %v3558
      %v3574 = vmul.f32 %v3553, %v3558
      %v3575 = vadd.f32 %v3475, %v3559
      %v3576 = vadd.f32 %v3476, %v3560
      %v3577 = vadd.f32 %v3477, %v3561
      %v3578 = vadd.f32 %v3478, %v3562
      %v3579 = vadd.f32 %v3479, %v3563
      %v3580 = vadd.f32 %v3480, %v3564
      %v3581 = vadd.f32 %v3481, %v3565
      %v3582 = vadd.f32 %v3482, %v3566
      %v3583 = vadd.f32 %v3483, %v3567
      %v3584 = vadd.f32 %v3484, %v3568
      %v3585 = vadd.f32 %v3485, %v3569
      %v3586 = vadd.f32 %v3486, %v3570
      %v3587 = vadd.f32 %v3487, %v3571
      %v3588 = vadd.f32 %v3488, %v3572
      %v3589 = vadd.f32 %v3489, %v3573
      %v3590 = vadd.f32 %v3490, %v3574
      %3591 = vset.pattern.permute.xlu0 20
      %3592 = vperm.xlu0 %3591, %v1548
      %v3593 = vpop.permute.xlu0 %3592
      %3595 = vset.pattern.permute.xlu0 20
      %3596 = vperm.xlu0 %3595, %v1549
      %v3597 = vpop.permute.xlu0 %3596
      %3599 = vset.pattern.permute.xlu0 20
      %3600 = vperm.xlu0 %3599, %v1550
      %v3601 = vpop.permute.xlu0 %3600
      %3603 = vset.pattern.permute.xlu0 20
      %3604 = vperm.xlu0 %3603, %v1551
      %v3605 = vpop.permute.xlu0 %3604
      %3607 = vset.pattern.permute.xlu0 20
      %3608 = vperm.xlu0 %3607, %v1552
      %v3609 = vpop.permute.xlu0 %3608
      %3611 = vset.pattern.permute.xlu0 20
      %3612 = vperm.xlu0 %3611, %v1553
      %v3613 = vpop.permute.xlu0 %3612
      %3615 = vset.pattern.permute.xlu0 20
      %3616 = vperm.xlu0 %3615, %v1554
      %v3617 = vpop.permute.xlu0 %3616
      %3619 = vset.pattern.permute.xlu0 20
      %3620 = vperm.xlu0 %3619, %v1555
      %v3621 = vpop.permute.xlu0 %3620
      %3623 = vset.pattern.permute.xlu0 20
      %3624 = vperm.xlu0 %3623, %v1556
      %v3625 = vpop.permute.xlu0 %3624
      %3627 = vset.pattern.permute.xlu0 20
      %3628 = vperm.xlu0 %3627, %v1557
      %v3629 = vpop.permute.xlu0 %3628
      %3631 = vset.pattern.permute.xlu0 20
      %3632 = vperm.xlu0 %3631, %v1558
      %v3633 = vpop.permute.xlu0 %3632
      %3635 = vset.pattern.permute.xlu0 20
      %3636 = vperm.xlu0 %3635, %v1559
      %v3637 = vpop.permute.xlu0 %3636
      %3639 = vset.pattern.permute.xlu0 20
      %3640 = vperm.xlu0 %3639, %v1560
      %v3641 = vpop.permute.xlu0 %3640
      %3643 = vset.pattern.permute.xlu0 20
      %3644 = vperm.xlu0 %3643, %v1561
      %v3645 = vpop.permute.xlu0 %3644
      %3647 = vset.pattern.permute.xlu0 20
      %3648 = vperm.xlu0 %3647, %v1562
      %v3649 = vpop.permute.xlu0 %3648
      %3651 = vset.pattern.permute.xlu0 20
      %3652 = vperm.xlu0 %3651, %v1563
      %v3653 = vpop.permute.xlu0 %3652
      %v3655 = vlaneseq
      %v3656 = vshrl.u32 %v3655, 7
      %v3657 = vsub.s32 4, %v3656
      %v3658 = vrot.slane %v1566, %v3657
      %v3659 = vmul.f32 %v3593, %v3658
      %v3660 = vmul.f32 %v3597, %v3658
      %v3661 = vmul.f32 %v3601, %v3658
      %v3662 = vmul.f32 %v3605, %v3658
      %v3663 = vmul.f32 %v3609, %v3658
      %v3664 = vmul.f32 %v3613, %v3658
      %v3665 = vmul.f32 %v3617, %v3658
      %v3666 = vmul.f32 %v3621, %v3658
      %v3667 = vmul.f32 %v3625, %v3658
      %v3668 = vmul.f32 %v3629, %v3658
      %v3669 = vmul.f32 %v3633, %v3658
      %v3670 = vmul.f32 %v3637, %v3658
      %v3671 = vmul.f32 %v3641, %v3658
      %v3672 = vmul.f32 %v3645, %v3658
      %v3673 = vmul.f32 %v3649, %v3658
      %v3674 = vmul.f32 %v3653, %v3658
      %v3675 = vadd.f32 %v3575, %v3659
      %v3676 = vadd.f32 %v3576, %v3660
      %v3677 = vadd.f32 %v3577, %v3661
      %v3678 = vadd.f32 %v3578, %v3662
      %v3679 = vadd.f32 %v3579, %v3663
      %v3680 = vadd.f32 %v3580, %v3664
      %v3681 = vadd.f32 %v3581, %v3665
      %v3682 = vadd.f32 %v3582, %v3666
      %v3683 = vadd.f32 %v3583, %v3667
      %v3684 = vadd.f32 %v3584, %v3668
      %v3685 = vadd.f32 %v3585, %v3669
      %v3686 = vadd.f32 %v3586, %v3670
      %v3687 = vadd.f32 %v3587, %v3671
      %v3688 = vadd.f32 %v3588, %v3672
      %v3689 = vadd.f32 %v3589, %v3673
      %v3690 = vadd.f32 %v3590, %v3674
      %3691 = vset.pattern.permute.xlu0 21
      %3692 = vperm.xlu0 %3691, %v1548
      %v3693 = vpop.permute.xlu0 %3692
      %3695 = vset.pattern.permute.xlu0 21
      %3696 = vperm.xlu0 %3695, %v1549
      %v3697 = vpop.permute.xlu0 %3696
      %3699 = vset.pattern.permute.xlu0 21
      %3700 = vperm.xlu0 %3699, %v1550
      %v3701 = vpop.permute.xlu0 %3700
      %3703 = vset.pattern.permute.xlu0 21
      %3704 = vperm.xlu0 %3703, %v1551
      %v3705 = vpop.permute.xlu0 %3704
      %3707 = vset.pattern.permute.xlu0 21
      %3708 = vperm.xlu0 %3707, %v1552
      %v3709 = vpop.permute.xlu0 %3708
      %3711 = vset.pattern.permute.xlu0 21
      %3712 = vperm.xlu0 %3711, %v1553
      %v3713 = vpop.permute.xlu0 %3712
      %3715 = vset.pattern.permute.xlu0 21
      %3716 = vperm.xlu0 %3715, %v1554
      %v3717 = vpop.permute.xlu0 %3716
      %3719 = vset.pattern.permute.xlu0 21
      %3720 = vperm.xlu0 %3719, %v1555
      %v3721 = vpop.permute.xlu0 %3720
      %3723 = vset.pattern.permute.xlu0 21
      %3724 = vperm.xlu0 %3723, %v1556
      %v3725 = vpop.permute.xlu0 %3724
      %3727 = vset.pattern.permute.xlu0 21
      %3728 = vperm.xlu0 %3727, %v1557
      %v3729 = vpop.permute.xlu0 %3728
      %3731 = vset.pattern.permute.xlu0 21
      %3732 = vperm.xlu0 %3731, %v1558
      %v3733 = vpop.permute.xlu0 %3732
      %3735 = vset.pattern.permute.xlu0 21
      %3736 = vperm.xlu0 %3735, %v1559
      %v3737 = vpop.permute.xlu0 %3736
      %3739 = vset.pattern.permute.xlu0 21
      %3740 = vperm.xlu0 %3739, %v1560
      %v3741 = vpop.permute.xlu0 %3740
      %3743 = vset.pattern.permute.xlu0 21
      %3744 = vperm.xlu0 %3743, %v1561
      %v3745 = vpop.permute.xlu0 %3744
      %3747 = vset.pattern.permute.xlu0 21
      %3748 = vperm.xlu0 %3747, %v1562
      %v3749 = vpop.permute.xlu0 %3748
      %3751 = vset.pattern.permute.xlu0 21
      %3752 = vperm.xlu0 %3751, %v1563
      %v3753 = vpop.permute.xlu0 %3752
      %v3755 = vlaneseq
      %v3756 = vshrl.u32 %v3755, 7
      %v3757 = vsub.s32 5, %v3756
      %v3758 = vrot.slane %v1566, %v3757
      %v3759 = vmul.f32 %v3693, %v3758
      %v3760 = vmul.f32 %v3697, %v3758
      %v3761 = vmul.f32 %v3701, %v3758
      %v3762 = vmul.f32 %v3705, %v3758
      %v3763 = vmul.f32 %v3709, %v3758
      %v3764 = vmul.f32 %v3713, %v3758
      %v3765 = vmul.f32 %v3717, %v3758
      %v3766 = vmul.f32 %v3721, %v3758
      %v3767 = vmul.f32 %v3725, %v3758
      %v3768 = vmul.f32 %v3729, %v3758
      %v3769 = vmul.f32 %v3733, %v3758
      %v3770 = vmul.f32 %v3737, %v3758
      %v3771 = vmul.f32 %v3741, %v3758
      %v3772 = vmul.f32 %v3745, %v3758
      %v3773 = vmul.f32 %v3749, %v3758
      %v3774 = vmul.f32 %v3753, %v3758
      %v3775 = vadd.f32 %v3675, %v3759
      %v3776 = vadd.f32 %v3676, %v3760
      %v3777 = vadd.f32 %v3677, %v3761
      %v3778 = vadd.f32 %v3678, %v3762
      %v3779 = vadd.f32 %v3679, %v3763
      %v3780 = vadd.f32 %v3680, %v3764
      %v3781 = vadd.f32 %v3681, %v3765
      %v3782 = vadd.f32 %v3682, %v3766
      %v3783 = vadd.f32 %v3683, %v3767
      %v3784 = vadd.f32 %v3684, %v3768
      %v3785 = vadd.f32 %v3685, %v3769
      %v3786 = vadd.f32 %v3686, %v3770
      %v3787 = vadd.f32 %v3687, %v3771
      %v3788 = vadd.f32 %v3688, %v3772
      %v3789 = vadd.f32 %v3689, %v3773
      %v3790 = vadd.f32 %v3690, %v3774
      %3791 = vset.pattern.permute.xlu0 22
      %3792 = vperm.xlu0 %3791, %v1548
      %v3793 = vpop.permute.xlu0 %3792
      %3795 = vset.pattern.permute.xlu0 22
      %3796 = vperm.xlu0 %3795, %v1549
      %v3797 = vpop.permute.xlu0 %3796
      %3799 = vset.pattern.permute.xlu0 22
      %3800 = vperm.xlu0 %3799, %v1550
      %v3801 = vpop.permute.xlu0 %3800
      %3803 = vset.pattern.permute.xlu0 22
      %3804 = vperm.xlu0 %3803, %v1551
      %v3805 = vpop.permute.xlu0 %3804
      %3807 = vset.pattern.permute.xlu0 22
      %3808 = vperm.xlu0 %3807, %v1552
      %v3809 = vpop.permute.xlu0 %3808
      %3811 = vset.pattern.permute.xlu0 22
      %3812 = vperm.xlu0 %3811, %v1553
      %v3813 = vpop.permute.xlu0 %3812
      %3815 = vset.pattern.permute.xlu0 22
      %3816 = vperm.xlu0 %3815, %v1554
      %v3817 = vpop.permute.xlu0 %3816
      %3819 = vset.pattern.permute.xlu0 22
      %3820 = vperm.xlu0 %3819, %v1555
      %v3821 = vpop.permute.xlu0 %3820
      %3823 = vset.pattern.permute.xlu0 22
      %3824 = vperm.xlu0 %3823, %v1556
      %v3825 = vpop.permute.xlu0 %3824
      %3827 = vset.pattern.permute.xlu0 22
      %3828 = vperm.xlu0 %3827, %v1557
      %v3829 = vpop.permute.xlu0 %3828
      %3831 = vset.pattern.permute.xlu0 22
      %3832 = vperm.xlu0 %3831, %v1558
      %v3833 = vpop.permute.xlu0 %3832
      %3835 = vset.pattern.permute.xlu0 22
      %3836 = vperm.xlu0 %3835, %v1559
      %v3837 = vpop.permute.xlu0 %3836
      %3839 = vset.pattern.permute.xlu0 22
      %3840 = vperm.xlu0 %3839, %v1560
      %v3841 = vpop.permute.xlu0 %3840
      %3843 = vset.pattern.permute.xlu0 22
      %3844 = vperm.xlu0 %3843, %v1561
      %v3845 = vpop.permute.xlu0 %3844
      %3847 = vset.pattern.permute.xlu0 22
      %3848 = vperm.xlu0 %3847, %v1562
      %v3849 = vpop.permute.xlu0 %3848
      %3851 = vset.pattern.permute.xlu0 22
      %3852 = vperm.xlu0 %3851, %v1563
      %v3853 = vpop.permute.xlu0 %3852
      %v3855 = vlaneseq
      %v3856 = vshrl.u32 %v3855, 7
      %v3857 = vsub.s32 6, %v3856
      %v3858 = vrot.slane %v1566, %v3857
      %v3859 = vmul.f32 %v3793, %v3858
      %v3860 = vmul.f32 %v3797, %v3858
      %v3861 = vmul.f32 %v3801, %v3858
      %v3862 = vmul.f32 %v3805, %v3858
      %v3863 = vmul.f32 %v3809, %v3858
      %v3864 = vmul.f32 %v3813, %v3858
      %v3865 = vmul.f32 %v3817, %v3858
      %v3866 = vmul.f32 %v3821, %v3858
      %v3867 = vmul.f32 %v3825, %v3858
      %v3868 = vmul.f32 %v3829, %v3858
      %v3869 = vmul.f32 %v3833, %v3858
      %v3870 = vmul.f32 %v3837, %v3858
      %v3871 = vmul.f32 %v3841, %v3858
      %v3872 = vmul.f32 %v3845, %v3858
      %v3873 = vmul.f32 %v3849, %v3858
      %v3874 = vmul.f32 %v3853, %v3858
      %v3875 = vadd.f32 %v3775, %v3859
      %v3876 = vadd.f32 %v3776, %v3860
      %v3877 = vadd.f32 %v3777, %v3861
      %v3878 = vadd.f32 %v3778, %v3862
      %v3879 = vadd.f32 %v3779, %v3863
      %v3880 = vadd.f32 %v3780, %v3864
      %v3881 = vadd.f32 %v3781, %v3865
      %v3882 = vadd.f32 %v3782, %v3866
      %v3883 = vadd.f32 %v3783, %v3867
      %v3884 = vadd.f32 %v3784, %v3868
      %v3885 = vadd.f32 %v3785, %v3869
      %v3886 = vadd.f32 %v3786, %v3870
      %v3887 = vadd.f32 %v3787, %v3871
      %v3888 = vadd.f32 %v3788, %v3872
      %v3889 = vadd.f32 %v3789, %v3873
      %v3890 = vadd.f32 %v3790, %v3874
      %3891 = vset.pattern.permute.xlu0 23
      %3892 = vperm.xlu0 %3891, %v1548
      %v3893 = vpop.permute.xlu0 %3892
      %3895 = vset.pattern.permute.xlu0 23
      %3896 = vperm.xlu0 %3895, %v1549
      %v3897 = vpop.permute.xlu0 %3896
      %3899 = vset.pattern.permute.xlu0 23
      %3900 = vperm.xlu0 %3899, %v1550
      %v3901 = vpop.permute.xlu0 %3900
      %3903 = vset.pattern.permute.xlu0 23
      %3904 = vperm.xlu0 %3903, %v1551
      %v3905 = vpop.permute.xlu0 %3904
      %3907 = vset.pattern.permute.xlu0 23
      %3908 = vperm.xlu0 %3907, %v1552
      %v3909 = vpop.permute.xlu0 %3908
      %3911 = vset.pattern.permute.xlu0 23
      %3912 = vperm.xlu0 %3911, %v1553
      %v3913 = vpop.permute.xlu0 %3912
      %3915 = vset.pattern.permute.xlu0 23
      %3916 = vperm.xlu0 %3915, %v1554
      %v3917 = vpop.permute.xlu0 %3916
      %3919 = vset.pattern.permute.xlu0 23
      %3920 = vperm.xlu0 %3919, %v1555
      %v3921 = vpop.permute.xlu0 %3920
      %3923 = vset.pattern.permute.xlu0 23
      %3924 = vperm.xlu0 %3923, %v1556
      %v3925 = vpop.permute.xlu0 %3924
      %3927 = vset.pattern.permute.xlu0 23
      %3928 = vperm.xlu0 %3927, %v1557
      %v3929 = vpop.permute.xlu0 %3928
      %3931 = vset.pattern.permute.xlu0 23
      %3932 = vperm.xlu0 %3931, %v1558
      %v3933 = vpop.permute.xlu0 %3932
      %3935 = vset.pattern.permute.xlu0 23
      %3936 = vperm.xlu0 %3935, %v1559
      %v3937 = vpop.permute.xlu0 %3936
      %3939 = vset.pattern.permute.xlu0 23
      %3940 = vperm.xlu0 %3939, %v1560
      %v3941 = vpop.permute.xlu0 %3940
      %3943 = vset.pattern.permute.xlu0 23
      %3944 = vperm.xlu0 %3943, %v1561
      %v3945 = vpop.permute.xlu0 %3944
      %3947 = vset.pattern.permute.xlu0 23
      %3948 = vperm.xlu0 %3947, %v1562
      %v3949 = vpop.permute.xlu0 %3948
      %3951 = vset.pattern.permute.xlu0 23
      %3952 = vperm.xlu0 %3951, %v1563
      %v3953 = vpop.permute.xlu0 %3952
      %v3955 = vlaneseq
      %v3956 = vshrl.u32 %v3955, 7
      %v3957 = vsub.s32 7, %v3956
      %v3958 = vrot.slane %v1566, %v3957
      %v3959 = vmul.f32 %v3893, %v3958
      %v3960 = vmul.f32 %v3897, %v3958
      %v3961 = vmul.f32 %v3901, %v3958
      %v3962 = vmul.f32 %v3905, %v3958
      %v3963 = vmul.f32 %v3909, %v3958
      %v3964 = vmul.f32 %v3913, %v3958
      %v3965 = vmul.f32 %v3917, %v3958
      %v3966 = vmul.f32 %v3921, %v3958
      %v3967 = vmul.f32 %v3925, %v3958
      %v3968 = vmul.f32 %v3929, %v3958
      %v3969 = vmul.f32 %v3933, %v3958
      %v3970 = vmul.f32 %v3937, %v3958
      %v3971 = vmul.f32 %v3941, %v3958
      %v3972 = vmul.f32 %v3945, %v3958
      %v3973 = vmul.f32 %v3949, %v3958
      %v3974 = vmul.f32 %v3953, %v3958
      %v3975 = vadd.f32 %v3875, %v3959
      %v3976 = vadd.f32 %v3876, %v3960
      %v3977 = vadd.f32 %v3877, %v3961
      %v3978 = vadd.f32 %v3878, %v3962
      %v3979 = vadd.f32 %v3879, %v3963
      %v3980 = vadd.f32 %v3880, %v3964
      %v3981 = vadd.f32 %v3881, %v3965
      %v3982 = vadd.f32 %v3882, %v3966
      %v3983 = vadd.f32 %v3883, %v3967
      %v3984 = vadd.f32 %v3884, %v3968
      %v3985 = vadd.f32 %v3885, %v3969
      %v3986 = vadd.f32 %v3886, %v3970
      %v3987 = vadd.f32 %v3887, %v3971
      %v3988 = vadd.f32 %v3888, %v3972
      %v3989 = vadd.f32 %v3889, %v3973
      %v3990 = vadd.f32 %v3890, %v3974
      %v3991 = vadd.f32 %v3975, %v501
      %v3992 = vadd.f32 %v3976, %v502
      %v3993 = vadd.f32 %v3977, %v503
      %v3994 = vadd.f32 %v3978, %v504
      %v3995 = vadd.f32 %v3979, %v505
      %v3996 = vadd.f32 %v3980, %v506
      %v3997 = vadd.f32 %v3981, %v507
      %v3998 = vadd.f32 %v3982, %v508
      %v3999 = vadd.f32 %v3983, %v509
      %v4000 = vadd.f32 %v3984, %v510
      %v4001 = vadd.f32 %v3985, %v511
      %v4002 = vadd.f32 %v3986, %v512
      %v4003 = vadd.f32 %v3987, %v513
      %v4004 = vadd.f32 %v3988, %v514
      %v4005 = vadd.f32 %v3989, %v515
      %v4006 = vadd.f32 %v3990, %v516
      %v4007 = vmax.f32 %v3991, 0.0
      %v4008 = vmax.f32 %v3992, 0.0
      %v4009 = vmax.f32 %v3993, 0.0
      %v4010 = vmax.f32 %v3994, 0.0
      %v4011 = vmax.f32 %v3995, 0.0
      %v4012 = vmax.f32 %v3996, 0.0
      %v4013 = vmax.f32 %v3997, 0.0
      %v4014 = vmax.f32 %v3998, 0.0
      %v4015 = vmax.f32 %v3999, 0.0
      %v4016 = vmax.f32 %v4000, 0.0
      %v4017 = vmax.f32 %v4001, 0.0
      %v4018 = vmax.f32 %v4002, 0.0
      %v4019 = vmax.f32 %v4003, 0.0
      %v4020 = vmax.f32 %v4004, 0.0
      %v4021 = vmax.f32 %v4005, 0.0
      %v4022 = vmax.f32 %v4006, 0.0
      %vm4023 = vcmask 31744
      %4024 = vst.msk [vmem:[%s499] sm:$0xff] %vm4023, %v4007
      %4025 = vst.msk [vmem:[%s499 + $0x8] sm:$0xff] %vm4023, %v4008
      %4026 = vst.msk [vmem:[%s499 + $0x10] sm:$0xff] %vm4023, %v4009
      %4027 = vst.msk [vmem:[%s499 + $0x18] sm:$0xff] %vm4023, %v4010
      %4028 = vst.msk [vmem:[%s499 + $0x20] sm:$0xff] %vm4023, %v4011
      %4029 = vst.msk [vmem:[%s499 + $0x28] sm:$0xff] %vm4023, %v4012
      %4030 = vst.msk [vmem:[%s499 + $0x30] sm:$0xff] %vm4023, %v4013
      %4031 = vst.msk [vmem:[%s499 + $0x38] sm:$0xff] %vm4023, %v4014
      %4032 = vst.msk [vmem:[%s499 + $0x40] sm:$0xff] %vm4023, %v4015
      %4033 = vst.msk [vmem:[%s499 + $0x48] sm:$0xff] %vm4023, %v4016
      %4034 = vst.msk [vmem:[%s499 + $0x50] sm:$0xff] %vm4023, %v4017
      %4035 = vst.msk [vmem:[%s499 + $0x58] sm:$0xff] %vm4023, %v4018
      %4036 = vst.msk [vmem:[%s499 + $0x60] sm:$0xff] %vm4023, %v4019
      %4037 = vst.msk [vmem:[%s499 + $0x68] sm:$0xff] %vm4023, %v4020
      %4038 = vst.msk [vmem:[%s499 + $0x70] sm:$0xff] %vm4023, %v4021
      %4039 = vst.msk [vmem:[%s499 + $0x78] sm:$0xff] %vm4023, %v4022
      %s4040 = smul.u32 8, %s25
      %p4041 = scmp.lt.s32.totalorder %s24, 1
      %s4042 = scalar_select %p4041, %s24, 1
      %p4043 = scmp.lt.s32.totalorder %s4040, 15
      %s4044 = scalar_select %p4043, %s4040, 15
      %s4045 = smul.addr %s4044, 2
      %s4046 = smul.addr %s4042, 32
      %s4047 = sadd.s32 %s4045, %s4046
      %s4048 = smul.addr %s4047, 8
      %s4049 = scalar_lea.vmem %s9, %s4048
      // Predicated region
      $region57: #{tpu_custom_call.1} parent=55 // pred_check
        %p4050 = pneg %p278
      $region58: #{tpu_custom_call.1} parent=55 // pred_check_branch
        %4052 = sbr.rel (%p4050) target = $region60
      $region59: #{tpu_custom_call.1} parent=55 // pred_region
        %s4053 = smul.u32 8, %s25
      $region60: #{tpu_custom_call.1} parent=55 // pred_fallthru
        _
    $region56: #{tpu_custom_call.1} parent=5 // pred_fallthru
      _
    %p4054 = scmp.le.s32.totalorder 2, %s15
    // Predicated region
    $region61: #{tpu_custom_call.1} parent=5 // pred_check
      %p4055 = pneg %p4054
    $region62: #{tpu_custom_call.1} parent=5 // pred_check_branch
      %4057 = sbr.rel (%p4055) target = $region64
    $region63: #{tpu_custom_call.1} parent=5 // pred_region
      %s4058 = ssub.s32 %s15, 2
      // Predicated region
      $region65: #{tpu_custom_call.1} parent=63 // pred_check
        %p4059 = pneg %p284
      $region66: #{tpu_custom_call.1} parent=63 // pred_check_branch
        %4061 = sbr.rel (%p4059) target = $region68
      $region67: #{tpu_custom_call.1} parent=63 // pred_region
        %s4062 = smul.u32 8, %s27
        %p4063 = scmp.lt.s32.totalorder %s26, 1
        %s4064 = scalar_select %p4063, %s26, 1
        %p4065 = scmp.lt.s32.totalorder %s4062, 15
        %s4066 = scalar_select %p4065, %s4062, 15
        %s4067 = smul.addr %s4066, 2
        %s4068 = smul.addr %s4064, 32
        %s4069 = sadd.s32 %s4067, %s4068
        %s4070 = smul.addr %s4069, 8
        %s4071 = scalar_lea.vmem %s9, %s4070
      $region68: #{tpu_custom_call.1} parent=63 // pred_fallthru
        _
    $region64: #{tpu_custom_call.1} parent=5 // pred_fallthru
      _
  $region6: #{tpu_custom_call.1} parent=0 // loop_footer
    %s19 = sadd.s32 1, %s15
  $region7: #{tpu_custom_call.1} parent=0 // loop_footer_branch
    %14 = sbr.rel target = $region3
  $region8: #{tpu_custom_call.1} parent=0 // loop_exit
    _

</llo_original>
